<compile_context>
chip_gen: v5e
topology: v5e:2x2
jax: 0.10.0
libtpu: 0.0.40
codegen_flags: <defaults>
</compile_context>

<pallas_src>
import jax
import jax.numpy as jnp
from jax.experimental import pallas as pl
from jax.experimental.pallas import tpu as pltpu

HIDDEN = 768          # Longformer hidden size implied by dense(1536 -> 256)
DENSE_OUT = 256
NUM_CLASSES = 2
OUT_PAD = 128         # lane-dense output width; sliced back to NUM_CLASSES
S_TILE = 512          # sequence tile (multiple of 128 so the mask lane dim tiles cleanly)


def _mqdd_kernel(emb_ref, mask_ref, invlen_ref,
                 wp_ref, bp_ref, wd1_ref, wd2_ref, bd_ref, wout_ref,
                 out_ref, acc_ref):
    """Gridded forward kernel.

    Grid: (num_sequence_tiles,)  -- reduction axis, "arbitrary".

    emb_ref    : [2B, St, H] bf16   (streamed per sequence tile)
    mask_ref   : [2B, St]    bf16   (streamed per sequence tile)
    invlen_ref : [2B, 1]     f32    1 / max(sum(mask), 1)         (grid-invariant)
    wp, bp     : [H, H], [1, H]     pooler                         (grid-invariant)
    wd1, wd2   : [H, 256] each      dense split along concat axis  (grid-invariant)
    bd         : [1, 256]                                          (grid-invariant)
    wout       : [256, OUT_PAD]     output proj, zero-padded       (grid-invariant)
    out_ref    : [B, OUT_PAD] f32   lane-dense logits slab
    acc_ref    : [2B, H] f32 scratch accumulator (masked sequence sum)
    """
    k = pl.program_id(0)

    @pl.when(k == 0)
    def _init():
        acc_ref[...] = jnp.zeros_like(acc_ref)

    # Masked partial sums for this sequence tile, on the MXU:
    #   acc[r, :] += mask[r, :St] @ emb[r, :St, :]          (r = stacked side/batch row)
    R = acc_ref.shape[0]                         # 2B (static)
    partials = []
    for r in range(R):                           # small static unroll (R = 2B)
        m_row = mask_ref[r:r + 1, :]             # [1, St] bf16
        e_r = emb_ref[r]                         # [St, H] bf16
        partials.append(jnp.dot(m_row, e_r,
                                preferred_element_type=jnp.float32))   # [1, H] f32
    acc_ref[...] += jnp.concatenate(partials, axis=0)                  # [2B, H]

    @pl.when(k == pl.num_programs(0) - 1)
    def _finalize():
        B = R // 2
        # masked mean over the sequence, then pooler: tanh(mean @ Wp + bp)
        mean = acc_ref[...] * invlen_ref[...]                          # [2B, H] f32
        pooled = jnp.tanh(
            jnp.dot(mean, wp_ref[...], preferred_element_type=jnp.float32)
            + bp_ref[...])                                             # [2B, H]
        p1 = pooled[:B, :]                                             # [B, H]
        p2 = pooled[B:, :]                                             # [B, H]
        # concat([p1, p2], 1) @ W_dense == p1 @ Wd1 + p2 @ Wd2
        h = (jnp.dot(p1, wd1_ref[...], preferred_element_type=jnp.float32)
             + jnp.dot(p2, wd2_ref[...], preferred_element_type=jnp.float32)
             + bd_ref[...])                                            # [B, 256]
        h = jnp.maximum(h, 0.0)                                        # ReLU
        # dropout1 / dropout2 are identity at inference
        out_ref[...] = jnp.dot(h, wout_ref[...],
                               preferred_element_type=jnp.float32)     # [B, OUT_PAD]


def mqdd_forward(x, params):
    """x: [B, 6, S] int32. Returns logits [B, NUM_CLASSES] float32."""
    B, six, S = x.shape
    assert six == 6
    R = 2 * B

    # torch.split(x, 1, dim=1) + squeeze
    ids1, m1i, tok1 = x[:, 0, :], x[:, 1, :], x[:, 2, :]
    ids2, m2i, tok2 = x[:, 3, :], x[:, 4, :], x[:, 5, :]

    # Embedding lookups (gather) stay in plain JAX glue; cast to bf16 so the
    # kernel streams half the bytes from HBM.
    word_emb = params["word_emb"]       # [V, H] f32
    type_emb = params["type_emb"]       # [2, H] f32
    emb1 = (jnp.take(word_emb, ids1, axis=0)
            + jnp.take(type_emb, tok1, axis=0)).astype(jnp.bfloat16)
    emb2 = (jnp.take(word_emb, ids2, axis=0)
            + jnp.take(type_emb, tok2, axis=0)).astype(jnp.bfloat16)
    emb = jnp.concatenate([emb1, emb2], axis=0)                        # [2B, S, H]

    mask_i = jnp.concatenate([m1i, m2i], axis=0)                       # [2B, S] int
    mask = mask_i.astype(jnp.bfloat16)                                 # 0/1 exact in bf16
    lengths = jnp.sum(mask_i, axis=1, keepdims=True).astype(jnp.float32)
    inv_len = 1.0 / jnp.maximum(lengths, 1.0)                          # [2B, 1] f32

    # Sequence tiling: full S when small, else 512-wide tiles (multiple of 128/8).
    if S <= S_TILE:
        St = S
        Sp = S
    else:
        St = S_TILE
        pad = (-S) % St
        if pad:
            emb = jnp.pad(emb, ((0, 0), (0, pad), (0, 0)))
            mask = jnp.pad(mask, ((0, 0), (0, pad)))
        Sp = S + pad
    n_s = Sp // St

    # Zero-pad the output projection to a lane-dense width.
    w_out_pad = jnp.pad(params["w_out"], ((0, 0), (0, OUT_PAD - NUM_CLASSES)))

    inv = lambda k: (0, 0)   # grid-invariant blocks: DMA'd once, stay VMEM-resident

    flops = int(2 * R * Sp * HIDDEN              # masked-sum contraction
                + 2 * R * HIDDEN * HIDDEN        # pooler
                + 2 * R * HIDDEN * DENSE_OUT     # dense (both concat halves)
                + 2 * B * DENSE_OUT * OUT_PAD)   # output projection
    bytes_accessed = int(R * Sp * HIDDEN * 2 + R * Sp * 2 + R * 4
                         + (HIDDEN * HIDDEN + HIDDEN + 2 * HIDDEN * DENSE_OUT
                            + DENSE_OUT + DENSE_OUT * OUT_PAD) * 4
                         + B * OUT_PAD * 4)

    logits_pad = pl.pallas_call(
        _mqdd_kernel,
        out_shape=jax.ShapeDtypeStruct((B, OUT_PAD), jnp.float32),
        grid_spec=pltpu.PrefetchScalarGridSpec(
            num_scalar_prefetch=0,
            grid=(n_s,),
            in_specs=[
                pl.BlockSpec((R, St, HIDDEN), lambda k: (0, k, 0)),    # emb tile
                pl.BlockSpec((R, St), lambda k: (0, k)),               # mask tile
                pl.BlockSpec((R, 1), inv),                             # inv_len
                pl.BlockSpec((HIDDEN, HIDDEN), inv),                   # wp
                pl.BlockSpec((1, HIDDEN), inv),                        # bp
                pl.BlockSpec((HIDDEN, DENSE_OUT), inv),                # wd1
                pl.BlockSpec((HIDDEN, DENSE_OUT), inv),                # wd2
                pl.BlockSpec((1, DENSE_OUT), inv),                     # bd
                pl.BlockSpec((DENSE_OUT, OUT_PAD), inv),               # wout (padded)
            ],
            out_specs=pl.BlockSpec((B, OUT_PAD), inv),
            scratch_shapes=[pltpu.VMEM((R, HIDDEN), jnp.float32)],
        ),
        compiler_params=pltpu.CompilerParams(
            dimension_semantics=("arbitrary",),      # sequence axis is a reduction
            vmem_limit_bytes=48 << 20,               # headroom for v7x's 64 MiB VMEM
        ),
        cost_estimate=pl.CostEstimate(
            flops=flops,
            transcendentals=int(R * HIDDEN),
            bytes_accessed=bytes_accessed,
        ),
    )(emb, mask, inv_len,
      params["w_pool"], params["b_pool"],
      params["w_dense1"], params["w_dense2"], params["b_dense"],
      w_out_pad)

    return logits_pad[:, :NUM_CLASSES]


def init_params(key, vocab=64):
    ks = jax.random.split(key, 7)
    scale = 0.02
    return {
        "word_emb": scale * jax.random.normal(ks[0], (vocab, HIDDEN), jnp.float32),
        "type_emb": scale * jax.random.normal(ks[1], (2, HIDDEN), jnp.float32),
        "w_pool":   scale * jax.random.normal(ks[2], (HIDDEN, HIDDEN), jnp.float32),
        "b_pool":   jnp.zeros((1, HIDDEN), jnp.float32),
        # dense: 1536 -> 256, split into the two 768-wide halves of the concat
        "w_dense1": scale * jax.random.normal(ks[3], (HIDDEN, DENSE_OUT), jnp.float32),
        "w_dense2": scale * jax.random.normal(ks[4], (HIDDEN, DENSE_OUT), jnp.float32),
        "b_dense":  0.01 * jnp.ones((1, DENSE_OUT), jnp.float32),
        # out: 256 -> 2, bias=False
        "w_out":    scale * jax.random.normal(ks[5], (DENSE_OUT, NUM_CLASSES), jnp.float32),
    }


if __name__ == "__main__":
    key = jax.random.PRNGKey(0)
    k_param, k_ids1, k_ids2 = jax.random.split(key, 3)

    B, S, V = 2, 8, 64
    params = init_params(k_param, vocab=V)

    ids1 = jax.random.randint(k_ids1, (B, S), 0, V, dtype=jnp.int32)
    ids2 = jax.random.randint(k_ids2, (B, S), 0, V, dtype=jnp.int32)
    mask1 = jnp.ones((B, S), jnp.int32)
    mask2 = jnp.ones((B, S), jnp.int32)
    tok1 = jnp.zeros((B, S), jnp.int32)
    tok2 = jnp.ones((B, S), jnp.int32)

    # x: [B, 6, S] matching torch.split(x, 1, dim=1) convention
    x = jnp.stack([ids1, mask1, tok1, ids2, mask2, tok2], axis=1)

    logits = mqdd_forward(x, params)
    jax.block_until_ready(logits)
    assert logits.shape == (B, NUM_CLASSES)
    assert logits.dtype == jnp.float32
    print("KERNEL_OK")
</pallas_src>

<mosaic_0001>
module attributes {stable_mosaic.version = 11 : i64} {
  func.func @_mqdd_kernel(%arg0: i32, %arg1: memref<4x8x768xbf16, #tpu.memory_space<vmem>>, %arg2: memref<4x8xbf16, #tpu.memory_space<vmem>>, %arg3: memref<4x1xf32, #tpu.memory_space<vmem>>, %arg4: memref<768x768xf32, #tpu.memory_space<vmem>>, %arg5: memref<1x768xf32, #tpu.memory_space<vmem>>, %arg6: memref<768x256xf32, #tpu.memory_space<vmem>>, %arg7: memref<768x256xf32, #tpu.memory_space<vmem>>, %arg8: memref<1x256xf32, #tpu.memory_space<vmem>>, %arg9: memref<256x128xf32, #tpu.memory_space<vmem>>, %arg10: memref<2x128xf32, #tpu.memory_space<vmem>>, %arg11: memref<4x768xf32, #tpu.memory_space<vmem>>) attributes {dimension_semantics = [#tpu.dimension_semantics<arbitrary>], iteration_bounds = array<i64: 1>, scalar_prefetch = 0 : i64, scratch_operands = 1 : i64, tpu.core_type = #tpu.core_type<tc>, window_params = [{transform_indices = @transform_0, window_bounds = array<i64: 4, 8, 768>}, {transform_indices = @transform_1, window_bounds = array<i64: 4, 8>}, {pipeline_mode = #tpu.pipeline_mode<synchronous>, transform_indices = @transform_2, window_bounds = array<i64: 4, 1>}, {pipeline_mode = #tpu.pipeline_mode<synchronous>, transform_indices = @transform_3, window_bounds = array<i64: 768, 768>}, {pipeline_mode = #tpu.pipeline_mode<synchronous>, transform_indices = @transform_4, window_bounds = array<i64: 1, 768>}, {pipeline_mode = #tpu.pipeline_mode<synchronous>, transform_indices = @transform_5, window_bounds = array<i64: 768, 256>}, {pipeline_mode = #tpu.pipeline_mode<synchronous>, transform_indices = @transform_6, window_bounds = array<i64: 768, 256>}, {pipeline_mode = #tpu.pipeline_mode<synchronous>, transform_indices = @transform_7, window_bounds = array<i64: 1, 256>}, {pipeline_mode = #tpu.pipeline_mode<synchronous>, transform_indices = @transform_8, window_bounds = array<i64: 256, 128>}, {pipeline_mode = #tpu.pipeline_mode<synchronous>, transform_indices = @transform_9, window_bounds = array<i64: 2, 128>}]} {
    %c0_i32 = arith.constant 0 : i32
    %0 = arith.cmpi eq, %arg0, %c0_i32 : i32
    %1 = arith.extui %0 : i1 to i32
    %c0_i32_0 = arith.constant 0 : i32
    %2 = arith.cmpi ne, %1, %c0_i32_0 : i32
    scf.if %2 {
      %cst_26 = arith.constant 0.000000e+00 : f32
      %26 = vector.broadcast %cst_26 : f32 to vector<4x768xf32>
      %c0_27 = arith.constant 0 : index
      %c0_28 = arith.constant 0 : index
      %27 = vector.load %arg11[%c0_27, %c0_28] : memref<4x768xf32, #tpu.memory_space<vmem>>, vector<4x768xf32>
      tpu.vector_store %arg11[%c0_27, %c0_28], %26 {strides = array<i32>} : memref<4x768xf32, #tpu.memory_space<vmem>>, vector<4x768xf32>,
    } else {
    }
    %c0 = arith.constant 0 : index
    %c0_1 = arith.constant 0 : index
    %3 = vector.load %arg2[%c0, %c0_1] : memref<4x8xbf16, #tpu.memory_space<vmem>>, vector<1x8xbf16>
    %c0_2 = arith.constant 0 : index
    %c0_3 = arith.constant 0 : index
    %c0_4 = arith.constant 0 : index
    %4 = vector.load %arg1[%c0_2, %c0_3, %c0_4] : memref<4x8x768xbf16, #tpu.memory_space<vmem>>, vector<1x8x768xbf16>
    %5 = vector.shape_cast %4 : vector<1x8x768xbf16> to vector<8x768xbf16>
    %cst = arith.constant dense<0.000000e+00> : vector<1x768xf32>
    %6 = tpu.matmul %3, %5, %cst {dimension_numbers = #tpu.dot_dimension_numbers<[1], [0], [0], [1], [0, 0, 1, 1], [], []>} : vector<1x8xbf16>, vector<8x768xbf16>, vector<1x768xf32> -> vector<1x768xf32>
    %c1 = arith.constant 1 : index
    %c0_5 = arith.constant 0 : index
    %7 = vector.load %arg2[%c1, %c0_5] : memref<4x8xbf16, #tpu.memory_space<vmem>>, vector<1x8xbf16>
    %c1_6 = arith.constant 1 : index
    %c0_7 = arith.constant 0 : index
    %c0_8 = arith.constant 0 : index
    %8 = vector.load %arg1[%c1_6, %c0_7, %c0_8] : memref<4x8x768xbf16, #tpu.memory_space<vmem>>, vector<1x8x768xbf16>
    %9 = vector.shape_cast %8 : vector<1x8x768xbf16> to vector<8x768xbf16>
    %cst_9 = arith.constant dense<0.000000e+00> : vector<1x768xf32>
    %10 = tpu.matmul %7, %9, %cst_9 {dimension_numbers = #tpu.dot_dimension_numbers<[1], [0], [0], [1], [0, 0, 1, 1], [], []>} : vector<1x8xbf16>, vector<8x768xbf16>, vector<1x768xf32> -> vector<1x768xf32>
    %c2 = arith.constant 2 : index
    %c0_10 = arith.constant 0 : index
    %11 = vector.load %arg2[%c2, %c0_10] : memref<4x8xbf16, #tpu.memory_space<vmem>>, vector<1x8xbf16>
    %c2_11 = arith.constant 2 : index
    %c0_12 = arith.constant 0 : index
    %c0_13 = arith.constant 0 : index
    %12 = vector.load %arg1[%c2_11, %c0_12, %c0_13] : memref<4x8x768xbf16, #tpu.memory_space<vmem>>, vector<1x8x768xbf16>
    %13 = vector.shape_cast %12 : vector<1x8x768xbf16> to vector<8x768xbf16>
    %cst_14 = arith.constant dense<0.000000e+00> : vector<1x768xf32>
    %14 = tpu.matmul %11, %13, %cst_14 {dimension_numbers = #tpu.dot_dimension_numbers<[1], [0], [0], [1], [0, 0, 1, 1], [], []>} : vector<1x8xbf16>, vector<8x768xbf16>, vector<1x768xf32> -> vector<1x768xf32>
    %c3 = arith.constant 3 : index
    %c0_15 = arith.constant 0 : index
    %15 = vector.load %arg2[%c3, %c0_15] : memref<4x8xbf16, #tpu.memory_space<vmem>>, vector<1x8xbf16>
    %c3_16 = arith.constant 3 : index
    %c0_17 = arith.constant 0 : index
    %c0_18 = arith.constant 0 : index
    %16 = vector.load %arg1[%c3_16, %c0_17, %c0_18] : memref<4x8x768xbf16, #tpu.memory_space<vmem>>, vector<1x8x768xbf16>
    %17 = vector.shape_cast %16 : vector<1x8x768xbf16> to vector<8x768xbf16>
    %cst_19 = arith.constant dense<0.000000e+00> : vector<1x768xf32>
    %18 = tpu.matmul %15, %17, %cst_19 {dimension_numbers = #tpu.dot_dimension_numbers<[1], [0], [0], [1], [0, 0, 1, 1], [], []>} : vector<1x8xbf16>, vector<8x768xbf16>, vector<1x768xf32> -> vector<1x768xf32>
    %c0_20 = arith.constant 0 : index
    %c0_21 = arith.constant 0 : index
    %19 = vector.load %arg11[%c0_20, %c0_21] : memref<4x768xf32, #tpu.memory_space<vmem>>, vector<4x768xf32>
    %20 = tpu.concatenate %6, %10, %14, %18 in 0 : vector<1x768xf32>, vector<1x768xf32>, vector<1x768xf32>, vector<1x768xf32> -> vector<4x768xf32>
    %21 = arith.addf %19, %20 : vector<4x768xf32>
    %c0_22 = arith.constant 0 : index
    %c0_23 = arith.constant 0 : index
    %22 = vector.load %arg11[%c0_22, %c0_23] : memref<4x768xf32, #tpu.memory_space<vmem>>, vector<4x768xf32>
    tpu.vector_store %arg11[%c0_22, %c0_23], %21 {strides = array<i32>} : memref<4x768xf32, #tpu.memory_space<vmem>>, vector<4x768xf32>,
    %c0_i32_24 = arith.constant 0 : i32
    %23 = arith.cmpi eq, %arg0, %c0_i32_24 : i32
    %24 = arith.extui %23 : i1 to i32
    %c0_i32_25 = arith.constant 0 : i32
    %25 = arith.cmpi ne, %24, %c0_i32_25 : i32
    scf.if %25 {
      %c0_26 = arith.constant 0 : index
      %c0_27 = arith.constant 0 : index
      %26 = vector.load %arg11[%c0_26, %c0_27] : memref<4x768xf32, #tpu.memory_space<vmem>>, vector<4x768xf32>
      %c0_28 = arith.constant 0 : index
      %c0_29 = arith.constant 0 : index
      %27 = vector.load %arg3[%c0_28, %c0_29] : memref<4x1xf32, #tpu.memory_space<vmem>>, vector<4x1xf32>
      %28 = vector.broadcast %27 : vector<4x1xf32> to vector<4x768xf32>
      %29 = arith.mulf %26, %28 : vector<4x768xf32>
      %c0_30 = arith.constant 0 : index
      %c0_31 = arith.constant 0 : index
      %30 = vector.load %arg4[%c0_30, %c0_31] : memref<768x768xf32, #tpu.memory_space<vmem>>, vector<768x768xf32>
      %cst_32 = arith.constant dense<0.000000e+00> : vector<4x768xf32>
      %31 = tpu.matmul %29, %30, %cst_32 {dimension_numbers = #tpu.dot_dimension_numbers<[1], [0], [0], [1], [0, 0, 1, 1], [], []>} : vector<4x768xf32>, vector<768x768xf32>, vector<4x768xf32> -> vector<4x768xf32>
      %c0_33 = arith.constant 0 : index
      %c0_34 = arith.constant 0 : index
      %32 = vector.load %arg5[%c0_33, %c0_34] : memref<1x768xf32, #tpu.memory_space<vmem>>, vector<1x768xf32>
      %33 = vector.broadcast %32 : vector<1x768xf32> to vector<4x768xf32>
      %34 = arith.addf %31, %33 : vector<4x768xf32>
      %35 = math.tanh %34 : vector<4x768xf32>
      %36 = vector.extract_strided_slice %35 {offsets = [0, 0], sizes = [2, 768], strides = [1, 1]} : vector<4x768xf32> to vector<2x768xf32>
      %37 = vector.extract_strided_slice %35 {offsets = [2, 0], sizes = [2, 768], strides = [1, 1]} : vector<4x768xf32> to vector<2x768xf32>
      %c0_35 = arith.constant 0 : index
      %c0_36 = arith.constant 0 : index
      %38 = vector.load %arg6[%c0_35, %c0_36] : memref<768x256xf32, #tpu.memory_space<vmem>>, vector<768x256xf32>
      %cst_37 = arith.constant dense<0.000000e+00> : vector<2x256xf32>
      %39 = tpu.matmul %36, %38, %cst_37 {dimension_numbers = #tpu.dot_dimension_numbers<[1], [0], [0], [1], [0, 0, 1, 1], [], []>} : vector<2x768xf32>, vector<768x256xf32>, vector<2x256xf32> -> vector<2x256xf32>
      %c0_38 = arith.constant 0 : index
      %c0_39 = arith.constant 0 : index
      %40 = vector.load %arg7[%c0_38, %c0_39] : memref<768x256xf32, #tpu.memory_space<vmem>>, vector<768x256xf32>
      %cst_40 = arith.constant dense<0.000000e+00> : vector<2x256xf32>
      %41 = tpu.matmul %37, %40, %cst_40 {dimension_numbers = #tpu.dot_dimension_numbers<[1], [0], [0], [1], [0, 0, 1, 1], [], []>} : vector<2x768xf32>, vector<768x256xf32>, vector<2x256xf32> -> vector<2x256xf32>
      %42 = arith.addf %39, %41 : vector<2x256xf32>
      %c0_41 = arith.constant 0 : index
      %c0_42 = arith.constant 0 : index
      %43 = vector.load %arg8[%c0_41, %c0_42] : memref<1x256xf32, #tpu.memory_space<vmem>>, vector<1x256xf32>
      %44 = vector.broadcast %43 : vector<1x256xf32> to vector<2x256xf32>
      %45 = arith.addf %42, %44 : vector<2x256xf32>
      %cst_43 = arith.constant 0.000000e+00 : f32
      %46 = vector.broadcast %cst_43 : f32 to vector<2x256xf32>
      %47 = arith.maximumf %45, %46 : vector<2x256xf32>
      %c0_44 = arith.constant 0 : index
      %c0_45 = arith.constant 0 : index
      %48 = vector.load %arg9[%c0_44, %c0_45] : memref<256x128xf32, #tpu.memory_space<vmem>>, vector<256x128xf32>
      %cst_46 = arith.constant dense<0.000000e+00> : vector<2x128xf32>
      %49 = tpu.matmul %47, %48, %cst_46 {dimension_numbers = #tpu.dot_dimension_numbers<[1], [0], [0], [1], [0, 0, 1, 1], [], []>} : vector<2x256xf32>, vector<256x128xf32>, vector<2x128xf32> -> vector<2x128xf32>
      %c0_47 = arith.constant 0 : index
      %c0_48 = arith.constant 0 : index
      %50 = vector.load %arg10[%c0_47, %c0_48] : memref<2x128xf32, #tpu.memory_space<vmem>>, vector<2x128xf32>
      tpu.vector_store %arg10[%c0_47, %c0_48], %49 {strides = array<i32>} : memref<2x128xf32, #tpu.memory_space<vmem>>, vector<2x128xf32>,
    } else {
    }
    return
  }
  func.func @transform_0(%arg0: i32) -> (i32, i32, i32) {
    %c0_i32 = arith.constant 0 : i32
    %c0_i32_0 = arith.constant 0 : i32
    %c0_i32_1 = arith.constant 0 : i32
    return %c0_i32, %arg0, %c0_i32_0 : i32, i32, i32
  }
  func.func @transform_1(%arg0: i32) -> (i32, i32) {
    %c0_i32 = arith.constant 0 : i32
    %c0_i32_0 = arith.constant 0 : i32
    return %c0_i32, %arg0 : i32, i32
  }
  func.func @transform_2(%arg0: i32) -> (i32, i32) {
    %c0_i32 = arith.constant 0 : i32
    %c0_i32_0 = arith.constant 0 : i32
    %c0_i32_1 = arith.constant 0 : i32
    return %c0_i32, %c0_i32_0 : i32, i32
  }
  func.func @transform_3(%arg0: i32) -> (i32, i32) {
    %c0_i32 = arith.constant 0 : i32
    %c0_i32_0 = arith.constant 0 : i32
    %c0_i32_1 = arith.constant 0 : i32
    return %c0_i32, %c0_i32_0 : i32, i32
  }
  func.func @transform_4(%arg0: i32) -> (i32, i32) {
    %c0_i32 = arith.constant 0 : i32
    %c0_i32_0 = arith.constant 0 : i32
    %c0_i32_1 = arith.constant 0 : i32
    return %c0_i32, %c0_i32_0 : i32, i32
  }
  func.func @transform_5(%arg0: i32) -> (i32, i32) {
    %c0_i32 = arith.constant 0 : i32
    %c0_i32_0 = arith.constant 0 : i32
    %c0_i32_1 = arith.constant 0 : i32
    return %c0_i32, %c0_i32_0 : i32, i32
  }
  func.func @transform_6(%arg0: i32) -> (i32, i32) {
    %c0_i32 = arith.constant 0 : i32
    %c0_i32_0 = arith.constant 0 : i32
    %c0_i32_1 = arith.constant 0 : i32
    return %c0_i32, %c0_i32_0 : i32, i32
  }
  func.func @transform_7(%arg0: i32) -> (i32, i32) {
    %c0_i32 = arith.constant 0 : i32
    %c0_i32_0 = arith.constant 0 : i32
    %c0_i32_1 = arith.constant 0 : i32
    return %c0_i32, %c0_i32_0 : i32, i32
  }
  func.func @transform_8(%arg0: i32) -> (i32, i32) {
    %c0_i32 = arith.constant 0 : i32
    %c0_i32_0 = arith.constant 0 : i32
    %c0_i32_1 = arith.constant 0 : i32
    return %c0_i32, %c0_i32_0 : i32, i32
  }
  func.func @transform_9(%arg0: i32) -> (i32, i32) {
    %c0_i32 = arith.constant 0 : i32
    %c0_i32_0 = arith.constant 0 : i32
    %c0_i32_1 = arith.constant 0 : i32
    return %c0_i32, %c0_i32_0 : i32, i32
  }
}

</mosaic_0001>

<llo_original>
// kernel: tpu_custom_call.1
$region0: #{tpu_custom_call.1}
  #allocation0 [shape = 'u32[]', space=smem, size = 0x4, offset = 0x4, fixed_abs, tag = 'smem constant byte address 0x4 - core index']
  #allocation1 [shape = 'u32[72,128]{1,0:T(1,128)}', space=vmem, size = 0x9000, scoped, tag = 'internal scratch']
  #allocation2 [shape = 'f32[4,768]{1,0:T(4,128)}', space=vmem, size = 0x3000, scoped, tag = 'scratch operand']
  %s0 = inlined_call_operand.hbm [shape: bf16[4,8,768], index: 0, kind: input, shape index: {}]
  %s1 = inlined_call_operand.hbm [shape: bf16[4,8], index: 1, kind: input, shape index: {}]
  %s2 = inlined_call_operand.vmem [shape: f32[4,1], index: 2, kind: input, shape index: {}]
  %s3 = inlined_call_operand.hbm [shape: f32[768,768], index: 3, kind: input, shape index: {}]
  %s4 = inlined_call_operand.hbm [shape: f32[1,768], index: 4, kind: input, shape index: {}]
  %s5 = inlined_call_operand.hbm [shape: f32[768,256], index: 5, kind: input, shape index: {}]
  %s6 = inlined_call_operand.hbm [shape: f32[768,256], index: 6, kind: input, shape index: {}]
  %s7 = inlined_call_operand.hbm [shape: f32[1,256], index: 7, kind: input, shape index: {}]
  %s8 = inlined_call_operand.hbm [shape: f32[256,128], index: 8, kind: input, shape index: {}]
  %s9 = inlined_call_operand.hbm [shape: f32[2,128], index: 9, kind: output, shape index: {}]
  %s10 = sld [smem:[#allocation0]]
  $region86: #{tpu_custom_call.1} parent=0
    _
  %s12 = ssub.s32 1, %s10
  %s13 = scalar_select 0, %s12, %s10
  $region1: #{tpu_custom_call.1} parent=0
    #allocation3 [shape = 'u8[49152]{0}', space=vmem, size = 0xc000, scoped, tag = 'input window, operand 0, single buffered']
    #allocation4 [shape = 's32[1]{0}', space=sflag, size = 0x4, scoped, tag = 'scoped memory for tpu_custom_call.1']
    #allocation5 [shape = 's32[1]{0}', space=sflag, size = 0x4, scoped, tag = 'scoped memory for tpu_custom_call.1']
    #allocation6 [shape = 'u8[1024]{0}', space=vmem, size = 0x400, scoped, tag = 'input window, operand 1, single buffered']
    #allocation7 [shape = 's32[1]{0}', space=sflag, size = 0x4, scoped, tag = 'scoped memory for tpu_custom_call.1']
    #allocation8 [shape = 'u8[2359296]{0}', space=vmem, size = 0x240000, scoped, tag = 'input window, operand 3, single buffered']
    #allocation9 [shape = 'u8[3072]{0}', space=vmem, size = 0xc00, scoped, tag = 'input window, operand 4, single buffered']
    #allocation10 [shape = 's32[1]{0}', space=sflag, size = 0x4, scoped, tag = 'scoped memory for tpu_custom_call.1']
    #allocation11 [shape = 'u8[786432]{0}', space=vmem, size = 0xc0000, scoped, tag = 'input window, operand 5, single buffered']
    #allocation12 [shape = 'u8[786432]{0}', space=vmem, size = 0xc0000, scoped, tag = 'input window, operand 6, single buffered']
    #allocation13 [shape = 's32[1]{0}', space=sflag, size = 0x4, scoped, tag = 'scoped memory for tpu_custom_call.1']
    #allocation14 [shape = 'u8[1024]{0}', space=vmem, size = 0x400, scoped, tag = 'input window, operand 7, single buffered']
    #allocation15 [shape = 'u8[131072]{0}', space=vmem, size = 0x20000, scoped, tag = 'input window, operand 8, single buffered']
    #allocation16 [shape = 's32[1]{0}', space=sflag, size = 0x4, scoped, tag = 'scoped memory for tpu_custom_call.1']
    #allocation17 [shape = 'u8[1024]{0}', space=vmem, size = 0x400, scoped, tag = 'output window, operand 0, single buffered']
    %14 = vsyncpa [#allocation4], 0
    %15 = vsyncpa [#allocation7], 0
    %16 = vsyncpa [#allocation10], 0
    %17 = vsyncpa [#allocation13], 0
    %18 = vsyncpa [#allocation16], 0
    %19 = vsyncpa [#allocation5], 0
    // Predicated region
    $region2: #{tpu_custom_call.1} parent=1 // pred_check
      _
    $region3: #{tpu_custom_call.1} parent=1 // pred_check_branch
      %21 = sbr.rel (0) target = $region5
    $region4: #{tpu_custom_call.1} parent=1 // pred_region
      %23 = vsyncadd [#allocation4], 0
      %s24 = sshll.u32 %s0, 4
      %s25 = int_to_ptr.hbm [resolvable:$true] %s24
      %s26 = sshll.u32 [#allocation3], 4
      %s27 = int_to_ptr.vmem [resolvable:$true] %s26
      %32 = dma.hbm_to_vmem [thread:$0]  %s25, 1536, %s27, [#allocation4], 384, 384, 24
    $region5: #{tpu_custom_call.1} parent=1 // pred_fallthru
      _
    // Predicated region
    $region6: #{tpu_custom_call.1} parent=1 // pred_check
      _
    $region7: #{tpu_custom_call.1} parent=1 // pred_check_branch
      %34 = sbr.rel (0) target = $region9
    $region8: #{tpu_custom_call.1} parent=1 // pred_region
      %36 = vsyncadd [#allocation7], 0
      %s38 = sshll.u32 %s1, 4
      %s39 = int_to_ptr.hbm [resolvable:$true] %s38
      %s40 = sshll.u32 [#allocation6], 4
      %s41 = int_to_ptr.vmem [resolvable:$true] %s40
      %43 = dma.hbm_to_vmem [thread:$0]  %s39, 32, %s41, [#allocation7]
    $region9: #{tpu_custom_call.1} parent=1 // pred_fallthru
      _
    // Predicated region
    $region10: #{tpu_custom_call.1} parent=1 // pred_check
      _
    $region11: #{tpu_custom_call.1} parent=1 // pred_check_branch
      %45 = sbr.rel (0) target = $region13
    $region12: #{tpu_custom_call.1} parent=1 // pred_region
      _
    $region13: #{tpu_custom_call.1} parent=1 // pred_fallthru
      _
    // Predicated region
    $region14: #{tpu_custom_call.1} parent=1 // pred_check
      _
    $region15: #{tpu_custom_call.1} parent=1 // pred_check_branch
      %47 = sbr.rel (0) target = $region17
    $region16: #{tpu_custom_call.1} parent=1 // pred_region
      %49 = vsyncadd [#allocation7], 0
      %s50 = sshll.u32 %s3, 4
      %s51 = int_to_ptr.hbm [resolvable:$true] %s50
      %s52 = sshll.u32 [#allocation8], 4
      %s53 = int_to_ptr.vmem [resolvable:$true] %s52
      %58 = dma.hbm_to_vmem [thread:$0]  %s51, 73728, %s53, [#allocation7], 768, 768, 48
    $region17: #{tpu_custom_call.1} parent=1 // pred_fallthru
      _
    // Predicated region
    $region18: #{tpu_custom_call.1} parent=1 // pred_check
      _
    $region19: #{tpu_custom_call.1} parent=1 // pred_check_branch
      %60 = sbr.rel (0) target = $region21
    $region20: #{tpu_custom_call.1} parent=1 // pred_region
      %62 = vsyncadd [#allocation10], 0
      %s64 = sshll.u32 %s4, 4
      %s65 = int_to_ptr.hbm [resolvable:$true] %s64
      %s66 = sshll.u32 [#allocation9], 4
      %s67 = int_to_ptr.vmem [resolvable:$true] %s66
      %69 = dma.hbm_to_vmem [thread:$0]  %s65, 96, %s67, [#allocation10]
    $region21: #{tpu_custom_call.1} parent=1 // pred_fallthru
      _
    // Predicated region
    $region22: #{tpu_custom_call.1} parent=1 // pred_check
      _
    $region23: #{tpu_custom_call.1} parent=1 // pred_check_branch
      %71 = sbr.rel (0) target = $region25
    $region24: #{tpu_custom_call.1} parent=1 // pred_region
      %73 = vsyncadd [#allocation10], 0
      %s74 = sshll.u32 %s5, 4
      %s75 = int_to_ptr.hbm [resolvable:$true] %s74
      %s76 = sshll.u32 [#allocation11], 4
      %s77 = int_to_ptr.vmem [resolvable:$true] %s76
      %82 = dma.hbm_to_vmem [thread:$0]  %s75, 24576, %s77, [#allocation10], 256, 256, 16
    $region25: #{tpu_custom_call.1} parent=1 // pred_fallthru
      _
    // Predicated region
    $region26: #{tpu_custom_call.1} parent=1 // pred_check
      _
    $region27: #{tpu_custom_call.1} parent=1 // pred_check_branch
      %84 = sbr.rel (0) target = $region29
    $region28: #{tpu_custom_call.1} parent=1 // pred_region
      %86 = vsyncadd [#allocation13], 0
      %s87 = sshll.u32 %s6, 4
      %s88 = int_to_ptr.hbm [resolvable:$true] %s87
      %s89 = sshll.u32 [#allocation12], 4
      %s90 = int_to_ptr.vmem [resolvable:$true] %s89
      %95 = dma.hbm_to_vmem [thread:$0]  %s88, 24576, %s90, [#allocation13], 256, 256, 16
    $region29: #{tpu_custom_call.1} parent=1 // pred_fallthru
      _
    // Predicated region
    $region30: #{tpu_custom_call.1} parent=1 // pred_check
      _
    $region31: #{tpu_custom_call.1} parent=1 // pred_check_branch
      %97 = sbr.rel (0) target = $region33
    $region32: #{tpu_custom_call.1} parent=1 // pred_region
      %99 = vsyncadd [#allocation13], 0
      %s101 = sshll.u32 %s7, 4
      %s102 = int_to_ptr.hbm [resolvable:$true] %s101
      %s103 = sshll.u32 [#allocation14], 4
      %s104 = int_to_ptr.vmem [resolvable:$true] %s103
      %106 = dma.hbm_to_vmem [thread:$0]  %s102, 32, %s104, [#allocation13]
    $region33: #{tpu_custom_call.1} parent=1 // pred_fallthru
      _
    // Predicated region
    $region34: #{tpu_custom_call.1} parent=1 // pred_check
      _
    $region35: #{tpu_custom_call.1} parent=1 // pred_check_branch
      %108 = sbr.rel (0) target = $region37
    $region36: #{tpu_custom_call.1} parent=1 // pred_region
      %110 = vsyncadd [#allocation16], 0
      %s111 = sshll.u32 %s8, 4
      %s112 = int_to_ptr.hbm [resolvable:$true] %s111
      %s113 = sshll.u32 [#allocation15], 4
      %s114 = int_to_ptr.vmem [resolvable:$true] %s113
      %119 = dma.hbm_to_vmem [thread:$0]  %s112, 4096, %s114, [#allocation16], 128, 128, 8
    $region37: #{tpu_custom_call.1} parent=1 // pred_fallthru
      _
    // Predicated region
    $region38: #{tpu_custom_call.1} parent=1 // pred_check
      _
    $region39: #{tpu_custom_call.1} parent=1 // pred_check_branch
      %121 = sbr.rel (0) target = $region41
    $region40: #{tpu_custom_call.1} parent=1 // pred_region
      %123 = dma.done [#allocation4], 1536
    $region41: #{tpu_custom_call.1} parent=1 // pred_fallthru
      _
    // Predicated region
    $region42: #{tpu_custom_call.1} parent=1 // pred_check
      _
    $region43: #{tpu_custom_call.1} parent=1 // pred_check_branch
      %125 = sbr.rel (0) target = $region45
    $region44: #{tpu_custom_call.1} parent=1 // pred_region
      %127 = dma.done [#allocation7], 32
    $region45: #{tpu_custom_call.1} parent=1 // pred_fallthru
      _
    // Predicated region
    $region46: #{tpu_custom_call.1} parent=1 // pred_check
      _
    $region47: #{tpu_custom_call.1} parent=1 // pred_check_branch
      %129 = sbr.rel (0) target = $region49
    $region48: #{tpu_custom_call.1} parent=1 // pred_region
      %131 = dma.done [#allocation7], 73728
    $region49: #{tpu_custom_call.1} parent=1 // pred_fallthru
      _
    // Predicated region
    $region50: #{tpu_custom_call.1} parent=1 // pred_check
      _
    $region51: #{tpu_custom_call.1} parent=1 // pred_check_branch
      %133 = sbr.rel (0) target = $region53
    $region52: #{tpu_custom_call.1} parent=1 // pred_region
      %135 = dma.done [#allocation10], 96
    $region53: #{tpu_custom_call.1} parent=1 // pred_fallthru
      _
    // Predicated region
    $region54: #{tpu_custom_call.1} parent=1 // pred_check
      _
    $region55: #{tpu_custom_call.1} parent=1 // pred_check_branch
      %137 = sbr.rel (0) target = $region57
    $region56: #{tpu_custom_call.1} parent=1 // pred_region
      %139 = dma.done [#allocation10], 24576
    $region57: #{tpu_custom_call.1} parent=1 // pred_fallthru
      _
    // Predicated region
    $region58: #{tpu_custom_call.1} parent=1 // pred_check
      _
    $region59: #{tpu_custom_call.1} parent=1 // pred_check_branch
      %141 = sbr.rel (0) target = $region61
    $region60: #{tpu_custom_call.1} parent=1 // pred_region
      %143 = dma.done [#allocation13], 24576
    $region61: #{tpu_custom_call.1} parent=1 // pred_fallthru
      _
    // Predicated region
    $region62: #{tpu_custom_call.1} parent=1 // pred_check
      _
    $region63: #{tpu_custom_call.1} parent=1 // pred_check_branch
      %145 = sbr.rel (0) target = $region65
    $region64: #{tpu_custom_call.1} parent=1 // pred_region
      %147 = dma.done [#allocation13], 32
    $region65: #{tpu_custom_call.1} parent=1 // pred_fallthru
      _
    // Predicated region
    $region66: #{tpu_custom_call.1} parent=1 // pred_check
      _
    $region67: #{tpu_custom_call.1} parent=1 // pred_check_branch
      %149 = sbr.rel (0) target = $region69
    $region68: #{tpu_custom_call.1} parent=1 // pred_region
      %151 = dma.done [#allocation16], 4096
    $region69: #{tpu_custom_call.1} parent=1 // pred_fallthru
      _
    %p153 = scmp.eq.s32.totalorder 0, 0
    // Predicated region
    $region70: #{tpu_custom_call.1} parent=1 // pred_check
      %p154 = pneg %p153
    $region71: #{tpu_custom_call.1} parent=1 // pred_check_branch
      %156 = sbr.rel (%p154) target = $region73
    $region72: #{tpu_custom_call.1} parent=1 // pred_region
      %157 = vst [vmem:[#allocation2] sm:$0xff] 0.0
      %158 = vst [vmem:[#allocation2 + $0x8] sm:$0xff] 0.0
      %159 = vst [vmem:[#allocation2 + $0x10] sm:$0xff] 0.0
    $region73: #{tpu_custom_call.1} parent=1 // pred_fallthru
      _
    %v160 = vld [vmem:[#allocation6] sm:$0x1]
    %v161 = vld [vmem:[#allocation3] sm:$0xff]
    %v162 = vld [vmem:[#allocation3 + $0x8] sm:$0xff]
    %v163 = vld [vmem:[#allocation3 + $0x10] sm:$0xff]
    %v167 = vunpack.c.l.b16 %v161
    %v168 = vunpack.c.h.b16 %v161
    %v169 = vunpack.c.l.b16 %v162
    %v170 = vunpack.c.h.b16 %v162
    %v171 = vunpack.c.l.b16 %v163
    %v172 = vunpack.c.h.b16 %v163
    %v173 = vpack.c.b16 %v167, %v167
    %v174 = vpack.c.b16 %v168, %v168
    %v175 = vpack.c.b16 %v169, %v169
    %v176 = vpack.c.b16 %v170, %v170
    %v177 = vpack.c.b16 %v171, %v171
    %v178 = vpack.c.b16 %v172, %v172
    %vm179 = vcmask 64512
    %v181 = vsel %vm179, %v160, 0
    %vm183 = vcmask 1043456
    %v185 = vsel %vm183, %v173, 0
    %v188 = vsel %vm183, %v174, 0
    %v191 = vsel %vm183, %v175, 0
    %v194 = vsel %vm183, %v176, 0
    %v197 = vsel %vm183, %v177, 0
    %v200 = vsel %vm183, %v178, 0
    %202 = vmatpush.bf16.msra.mxu0 0
    %203 = vmatpush.bf16.msra.mxu0 0
    %204 = vmatpush.bf16.msra.mxu0 0
    %205 = vmatpush.bf16.msra.mxu0 0
    %206 = vmatpush.bf16.msra.mxu0 0
    %207 = vmatpush.bf16.msra.mxu0 0
    %208 = vmatpush.bf16.msra.mxu0 0
    %209 = vmatpush.bf16.msra.mxu0 %v185
    %210 = vmatmul.bf16.gmra.mxu0 %v181
    %v211 = vpop.f32.mrf.mxu0
    %v212 = vadd.f32 0.0, %v211
    %v213 = vpop.f32.mrf.mxu0
    %214 = vdwg.mxu0
    %215 = vmatpush.bf16.msra.mxu0 0
    %216 = vmatpush.bf16.msra.mxu0 0
    %217 = vmatpush.bf16.msra.mxu0 0
    %218 = vmatpush.bf16.msra.mxu0 0
    %219 = vmatpush.bf16.msra.mxu0 0
    %220 = vmatpush.bf16.msra.mxu0 0
    %221 = vmatpush.bf16.msra.mxu0 0
    %222 = vmatpush.bf16.msra.mxu0 %v188
    %223 = vmatmul.bf16.gmra.mxu0 %v181
    %v224 = vpop.f32.mrf.mxu0
    %v225 = vadd.f32 0.0, %v224
    %v226 = vpop.f32.mrf.mxu0
    %227 = vdwg.mxu0
    %228 = vmatpush.bf16.msra.mxu0 0
    %229 = vmatpush.bf16.msra.mxu0 0
    %230 = vmatpush.bf16.msra.mxu0 0
    %231 = vmatpush.bf16.msra.mxu0 0
    %232 = vmatpush.bf16.msra.mxu0 0
    %233 = vmatpush.bf16.msra.mxu0 0
    %234 = vmatpush.bf16.msra.mxu0 0
    %235 = vmatpush.bf16.msra.mxu0 %v191
    %236 = vmatmul.bf16.gmra.mxu0 %v181
    %v237 = vpop.f32.mrf.mxu0
    %v238 = vadd.f32 0.0, %v237
    %v239 = vpop.f32.mrf.mxu0
    %240 = vdwg.mxu0
    %241 = vmatpush.bf16.msra.mxu0 0
    %242 = vmatpush.bf16.msra.mxu0 0
    %243 = vmatpush.bf16.msra.mxu0 0
    %244 = vmatpush.bf16.msra.mxu0 0
    %245 = vmatpush.bf16.msra.mxu0 0
    %246 = vmatpush.bf16.msra.mxu0 0
    %247 = vmatpush.bf16.msra.mxu0 0
    %248 = vmatpush.bf16.msra.mxu0 %v194
    %249 = vmatmul.bf16.gmra.mxu0 %v181
    %v250 = vpop.f32.mrf.mxu0
    %v251 = vadd.f32 0.0, %v250
    %v252 = vpop.f32.mrf.mxu0
    %253 = vdwg.mxu0
    %254 = vmatpush.bf16.msra.mxu0 0
    %255 = vmatpush.bf16.msra.mxu0 0
    %256 = vmatpush.bf16.msra.mxu0 0
    %257 = vmatpush.bf16.msra.mxu0 0
    %258 = vmatpush.bf16.msra.mxu0 0
    %259 = vmatpush.bf16.msra.mxu0 0
    %260 = vmatpush.bf16.msra.mxu0 0
    %261 = vmatpush.bf16.msra.mxu0 %v197
    %262 = vmatmul.bf16.gmra.mxu0 %v181
    %v263 = vpop.f32.mrf.mxu0
    %v264 = vadd.f32 0.0, %v263
    %v265 = vpop.f32.mrf.mxu0
    %266 = vdwg.mxu0
    %267 = vmatpush.bf16.msra.mxu0 0
    %268 = vmatpush.bf16.msra.mxu0 0
    %269 = vmatpush.bf16.msra.mxu0 0
    %270 = vmatpush.bf16.msra.mxu0 0
    %271 = vmatpush.bf16.msra.mxu0 0
    %272 = vmatpush.bf16.msra.mxu0 0
    %273 = vmatpush.bf16.msra.mxu0 0
    %274 = vmatpush.bf16.msra.mxu0 %v200
    %275 = vmatmul.bf16.gmra.mxu0 %v181
    %v276 = vpop.f32.mrf.mxu0
    %v277 = vadd.f32 0.0, %v276
    %v278 = vpop.f32.mrf.mxu0
    %279 = vdwg.mxu0
    %s280 = scalar_lea.vmem [#allocation3], 24
    %v281 = vld [vmem:[%s280] sm:$0xff]
    %v282 = vld [vmem:[%s280 + $0x8] sm:$0xff]
    %v283 = vld [vmem:[%s280 + $0x10] sm:$0xff]
    %284 = vst [vmem:[#allocation1] ss:$4 sm:$0xff] %v160
    %v285 = vld.sshfl [vmem:[#allocation1] sm:$0xff pattern:$0x73625140]
    %v286 = vshrl.u32 %v285, 16
    %v291 = vunpack.c.l.b16 %v281
    %v292 = vunpack.c.h.b16 %v281
    %v293 = vunpack.c.l.b16 %v282
    %v294 = vunpack.c.h.b16 %v282
    %v295 = vunpack.c.l.b16 %v283
    %v296 = vunpack.c.h.b16 %v283
    %v297 = vpack.c.b16 %v291, %v291
    %v298 = vpack.c.b16 %v292, %v292
    %v299 = vpack.c.b16 %v293, %v293
    %v300 = vpack.c.b16 %v294, %v294
    %v301 = vpack.c.b16 %v295, %v295
    %v302 = vpack.c.b16 %v296, %v296
    %v304 = vsel %vm179, %v286, 0
    %v307 = vsel %vm183, %v297, 0
    %v310 = vsel %vm183, %v298, 0
    %v313 = vsel %vm183, %v299, 0
    %v316 = vsel %vm183, %v300, 0
    %v319 = vsel %vm183, %v301, 0
    %v322 = vsel %vm183, %v302, 0
    %324 = vmatpush.bf16.msra.mxu0 0
    %325 = vmatpush.bf16.msra.mxu0 0
    %326 = vmatpush.bf16.msra.mxu0 0
    %327 = vmatpush.bf16.msra.mxu0 0
    %328 = vmatpush.bf16.msra.mxu0 0
    %329 = vmatpush.bf16.msra.mxu0 0
    %330 = vmatpush.bf16.msra.mxu0 0
    %331 = vmatpush.bf16.msra.mxu0 %v307
    %332 = vmatmul.bf16.gmra.mxu0 %v304
    %v333 = vpop.f32.mrf.mxu0
    %v334 = vadd.f32 0.0, %v333
    %v335 = vpop.f32.mrf.mxu0
    %336 = vdwg.mxu0
    %337 = vmatpush.bf16.msra.mxu0 0
    %338 = vmatpush.bf16.msra.mxu0 0
    %339 = vmatpush.bf16.msra.mxu0 0
    %340 = vmatpush.bf16.msra.mxu0 0
    %341 = vmatpush.bf16.msra.mxu0 0
    %342 = vmatpush.bf16.msra.mxu0 0
    %343 = vmatpush.bf16.msra.mxu0 0
    %344 = vmatpush.bf16.msra.mxu0 %v310
    %345 = vmatmul.bf16.gmra.mxu0 %v304
    %v346 = vpop.f32.mrf.mxu0
    %v347 = vadd.f32 0.0, %v346
    %v348 = vpop.f32.mrf.mxu0
    %349 = vdwg.mxu0
    %350 = vmatpush.bf16.msra.mxu0 0
    %351 = vmatpush.bf16.msra.mxu0 0
    %352 = vmatpush.bf16.msra.mxu0 0
    %353 = vmatpush.bf16.msra.mxu0 0
    %354 = vmatpush.bf16.msra.mxu0 0
    %355 = vmatpush.bf16.msra.mxu0 0
    %356 = vmatpush.bf16.msra.mxu0 0
    %357 = vmatpush.bf16.msra.mxu0 %v313
    %358 = vmatmul.bf16.gmra.mxu0 %v304
    %v359 = vpop.f32.mrf.mxu0
    %v360 = vadd.f32 0.0, %v359
    %v361 = vpop.f32.mrf.mxu0
    %362 = vdwg.mxu0
    %363 = vmatpush.bf16.msra.mxu0 0
    %364 = vmatpush.bf16.msra.mxu0 0
    %365 = vmatpush.bf16.msra.mxu0 0
    %366 = vmatpush.bf16.msra.mxu0 0
    %367 = vmatpush.bf16.msra.mxu0 0
    %368 = vmatpush.bf16.msra.mxu0 0
    %369 = vmatpush.bf16.msra.mxu0 0
    %370 = vmatpush.bf16.msra.mxu0 %v316
    %371 = vmatmul.bf16.gmra.mxu0 %v304
    %v372 = vpop.f32.mrf.mxu0
    %v373 = vadd.f32 0.0, %v372
    %v374 = vpop.f32.mrf.mxu0
    %375 = vdwg.mxu0
    %376 = vmatpush.bf16.msra.mxu0 0
    %377 = vmatpush.bf16.msra.mxu0 0
    %378 = vmatpush.bf16.msra.mxu0 0
    %379 = vmatpush.bf16.msra.mxu0 0
    %380 = vmatpush.bf16.msra.mxu0 0
    %381 = vmatpush.bf16.msra.mxu0 0
    %382 = vmatpush.bf16.msra.mxu0 0
    %383 = vmatpush.bf16.msra.mxu0 %v319
    %384 = vmatmul.bf16.gmra.mxu0 %v304
    %v385 = vpop.f32.mrf.mxu0
    %v386 = vadd.f32 0.0, %v385
    %v387 = vpop.f32.mrf.mxu0
    %388 = vdwg.mxu0
    %389 = vmatpush.bf16.msra.mxu0 0
    %390 = vmatpush.bf16.msra.mxu0 0
    %391 = vmatpush.bf16.msra.mxu0 0
    %392 = vmatpush.bf16.msra.mxu0 0
    %393 = vmatpush.bf16.msra.mxu0 0
    %394 = vmatpush.bf16.msra.mxu0 0
    %395 = vmatpush.bf16.msra.mxu0 0
    %396 = vmatpush.bf16.msra.mxu0 %v322
    %397 = vmatmul.bf16.gmra.mxu0 %v304
    %v398 = vpop.f32.mrf.mxu0
    %v399 = vadd.f32 0.0, %v398
    %v400 = vpop.f32.mrf.mxu0
    %401 = vdwg.mxu0
    %v402 = vld [vmem:[#allocation6] sm:$0x2]
    %s403 = scalar_lea.vmem [#allocation3], 48
    %v404 = vld [vmem:[%s403] sm:$0xff]
    %v405 = vld [vmem:[%s403 + $0x8] sm:$0xff]
    %v406 = vld [vmem:[%s403 + $0x10] sm:$0xff]
    %408 = vst [vmem:[#allocation1] ss:$4 sm:$0xff] %v402
    %v409 = vld.sshfl [vmem:[#allocation1] sm:$0xff pattern:$0x73625140]
    %v411 = vrot.slane %v409, 1
    %v415 = vunpack.c.l.b16 %v404
    %v416 = vunpack.c.h.b16 %v404
    %v417 = vunpack.c.l.b16 %v405
    %v418 = vunpack.c.h.b16 %v405
    %v419 = vunpack.c.l.b16 %v406
    %v420 = vunpack.c.h.b16 %v406
    %v421 = vpack.c.b16 %v415, %v415
    %v422 = vpack.c.b16 %v416, %v416
    %v423 = vpack.c.b16 %v417, %v417
    %v424 = vpack.c.b16 %v418, %v418
    %v425 = vpack.c.b16 %v419, %v419
    %v426 = vpack.c.b16 %v420, %v420
    %v428 = vsel %vm179, %v411, 0
    %v431 = vsel %vm183, %v421, 0
    %v434 = vsel %vm183, %v422, 0
    %v437 = vsel %vm183, %v423, 0
    %v440 = vsel %vm183, %v424, 0
    %v443 = vsel %vm183, %v425, 0
    %v446 = vsel %vm183, %v426, 0
    %448 = vmatpush.bf16.msra.mxu0 0
    %449 = vmatpush.bf16.msra.mxu0 0
    %450 = vmatpush.bf16.msra.mxu0 0
    %451 = vmatpush.bf16.msra.mxu0 0
    %452 = vmatpush.bf16.msra.mxu0 0
    %453 = vmatpush.bf16.msra.mxu0 0
    %454 = vmatpush.bf16.msra.mxu0 0
    %455 = vmatpush.bf16.msra.mxu0 %v431
    %456 = vmatmul.bf16.gmra.mxu0 %v428
    %v457 = vpop.f32.mrf.mxu0
    %v458 = vadd.f32 0.0, %v457
    %v459 = vpop.f32.mrf.mxu0
    %460 = vdwg.mxu0
    %461 = vmatpush.bf16.msra.mxu0 0
    %462 = vmatpush.bf16.msra.mxu0 0
    %463 = vmatpush.bf16.msra.mxu0 0
    %464 = vmatpush.bf16.msra.mxu0 0
    %465 = vmatpush.bf16.msra.mxu0 0
    %466 = vmatpush.bf16.msra.mxu0 0
    %467 = vmatpush.bf16.msra.mxu0 0
    %468 = vmatpush.bf16.msra.mxu0 %v434
    %469 = vmatmul.bf16.gmra.mxu0 %v428
    %v470 = vpop.f32.mrf.mxu0
    %v471 = vadd.f32 0.0, %v470
    %v472 = vpop.f32.mrf.mxu0
    %473 = vdwg.mxu0
    %474 = vmatpush.bf16.msra.mxu0 0
    %475 = vmatpush.bf16.msra.mxu0 0
    %476 = vmatpush.bf16.msra.mxu0 0
    %477 = vmatpush.bf16.msra.mxu0 0
    %478 = vmatpush.bf16.msra.mxu0 0
    %479 = vmatpush.bf16.msra.mxu0 0
    %480 = vmatpush.bf16.msra.mxu0 0
    %481 = vmatpush.bf16.msra.mxu0 %v437
    %482 = vmatmul.bf16.gmra.mxu0 %v428
    %v483 = vpop.f32.mrf.mxu0
    %v484 = vadd.f32 0.0, %v483
    %v485 = vpop.f32.mrf.mxu0
    %486 = vdwg.mxu0
    %487 = vmatpush.bf16.msra.mxu0 0
    %488 = vmatpush.bf16.msra.mxu0 0
    %489 = vmatpush.bf16.msra.mxu0 0
    %490 = vmatpush.bf16.msra.mxu0 0
    %491 = vmatpush.bf16.msra.mxu0 0
    %492 = vmatpush.bf16.msra.mxu0 0
    %493 = vmatpush.bf16.msra.mxu0 0
    %494 = vmatpush.bf16.msra.mxu0 %v440
    %495 = vmatmul.bf16.gmra.mxu0 %v428
    %v496 = vpop.f32.mrf.mxu0
    %v497 = vadd.f32 0.0, %v496
    %v498 = vpop.f32.mrf.mxu0
    %499 = vdwg.mxu0
    %500 = vmatpush.bf16.msra.mxu0 0
    %501 = vmatpush.bf16.msra.mxu0 0
    %502 = vmatpush.bf16.msra.mxu0 0
    %503 = vmatpush.bf16.msra.mxu0 0
    %504 = vmatpush.bf16.msra.mxu0 0
    %505 = vmatpush.bf16.msra.mxu0 0
    %506 = vmatpush.bf16.msra.mxu0 0
    %507 = vmatpush.bf16.msra.mxu0 %v443
    %508 = vmatmul.bf16.gmra.mxu0 %v428
    %v509 = vpop.f32.mrf.mxu0
    %v510 = vadd.f32 0.0, %v509
    %v511 = vpop.f32.mrf.mxu0
    %512 = vdwg.mxu0
    %513 = vmatpush.bf16.msra.mxu0 0
    %514 = vmatpush.bf16.msra.mxu0 0
    %515 = vmatpush.bf16.msra.mxu0 0
    %516 = vmatpush.bf16.msra.mxu0 0
    %517 = vmatpush.bf16.msra.mxu0 0
    %518 = vmatpush.bf16.msra.mxu0 0
    %519 = vmatpush.bf16.msra.mxu0 0
    %520 = vmatpush.bf16.msra.mxu0 %v446
    %521 = vmatmul.bf16.gmra.mxu0 %v428
    %v522 = vpop.f32.mrf.mxu0
    %v523 = vadd.f32 0.0, %v522
    %v524 = vpop.f32.mrf.mxu0
    %525 = vdwg.mxu0
    %v526 = vld [vmem:[#allocation6] sm:$0x2]
    %s527 = scalar_lea.vmem [#allocation3], 72
    %v528 = vld [vmem:[%s527] sm:$0xff]
    %v529 = vld [vmem:[%s527 + $0x8] sm:$0xff]
    %v530 = vld [vmem:[%s527 + $0x10] sm:$0xff]
    %532 = vst [vmem:[#allocation1] ss:$4 sm:$0xff] %v526
    %v533 = vld.sshfl [vmem:[#allocation1] sm:$0xff pattern:$0x73625140]
    %v534 = vshrl.u32 %v533, 16
    %v536 = vrot.slane %v534, 1
    %v540 = vunpack.c.l.b16 %v528
    %v541 = vunpack.c.h.b16 %v528
    %v542 = vunpack.c.l.b16 %v529
    %v543 = vunpack.c.h.b16 %v529
    %v544 = vunpack.c.l.b16 %v530
    %v545 = vunpack.c.h.b16 %v530
    %v546 = vpack.c.b16 %v540, %v540
    %v547 = vpack.c.b16 %v541, %v541
    %v548 = vpack.c.b16 %v542, %v542
    %v549 = vpack.c.b16 %v543, %v543
    %v550 = vpack.c.b16 %v544, %v544
    %v551 = vpack.c.b16 %v545, %v545
    %v553 = vsel %vm179, %v536, 0
    %v556 = vsel %vm183, %v546, 0
    %v559 = vsel %vm183, %v547, 0
    %v562 = vsel %vm183, %v548, 0
    %v565 = vsel %vm183, %v549, 0
    %v568 = vsel %vm183, %v550, 0
    %v571 = vsel %vm183, %v551, 0
    %573 = vmatpush.bf16.msra.mxu0 0
    %574 = vmatpush.bf16.msra.mxu0 0
    %575 = vmatpush.bf16.msra.mxu0 0
    %576 = vmatpush.bf16.msra.mxu0 0
    %577 = vmatpush.bf16.msra.mxu0 0
    %578 = vmatpush.bf16.msra.mxu0 0
    %579 = vmatpush.bf16.msra.mxu0 0
    %580 = vmatpush.bf16.msra.mxu0 %v556
    %581 = vmatmul.bf16.gmra.mxu0 %v553
    %v582 = vpop.f32.mrf.mxu0
    %v583 = vadd.f32 0.0, %v582
    %v584 = vpop.f32.mrf.mxu0
    %585 = vdwg.mxu0
    %586 = vmatpush.bf16.msra.mxu0 0
    %587 = vmatpush.bf16.msra.mxu0 0
    %588 = vmatpush.bf16.msra.mxu0 0
    %589 = vmatpush.bf16.msra.mxu0 0
    %590 = vmatpush.bf16.msra.mxu0 0
    %591 = vmatpush.bf16.msra.mxu0 0
    %592 = vmatpush.bf16.msra.mxu0 0
    %593 = vmatpush.bf16.msra.mxu0 %v559
    %594 = vmatmul.bf16.gmra.mxu0 %v553
    %v595 = vpop.f32.mrf.mxu0
    %v596 = vadd.f32 0.0, %v595
    %v597 = vpop.f32.mrf.mxu0
    %598 = vdwg.mxu0
    %599 = vmatpush.bf16.msra.mxu0 0
    %600 = vmatpush.bf16.msra.mxu0 0
    %601 = vmatpush.bf16.msra.mxu0 0
    %602 = vmatpush.bf16.msra.mxu0 0
    %603 = vmatpush.bf16.msra.mxu0 0
    %604 = vmatpush.bf16.msra.mxu0 0
    %605 = vmatpush.bf16.msra.mxu0 0
    %606 = vmatpush.bf16.msra.mxu0 %v562
    %607 = vmatmul.bf16.gmra.mxu0 %v553
    %v608 = vpop.f32.mrf.mxu0
    %v609 = vadd.f32 0.0, %v608
    %v610 = vpop.f32.mrf.mxu0
    %611 = vdwg.mxu0
    %612 = vmatpush.bf16.msra.mxu0 0
    %613 = vmatpush.bf16.msra.mxu0 0
    %614 = vmatpush.bf16.msra.mxu0 0
    %615 = vmatpush.bf16.msra.mxu0 0
    %616 = vmatpush.bf16.msra.mxu0 0
    %617 = vmatpush.bf16.msra.mxu0 0
    %618 = vmatpush.bf16.msra.mxu0 0
    %619 = vmatpush.bf16.msra.mxu0 %v565
    %620 = vmatmul.bf16.gmra.mxu0 %v553
    %v621 = vpop.f32.mrf.mxu0
    %v622 = vadd.f32 0.0, %v621
    %v623 = vpop.f32.mrf.mxu0
    %624 = vdwg.mxu0
    %625 = vmatpush.bf16.msra.mxu0 0
    %626 = vmatpush.bf16.msra.mxu0 0
    %627 = vmatpush.bf16.msra.mxu0 0
    %628 = vmatpush.bf16.msra.mxu0 0
    %629 = vmatpush.bf16.msra.mxu0 0
    %630 = vmatpush.bf16.msra.mxu0 0
    %631 = vmatpush.bf16.msra.mxu0 0
    %632 = vmatpush.bf16.msra.mxu0 %v568
    %633 = vmatmul.bf16.gmra.mxu0 %v553
    %v634 = vpop.f32.mrf.mxu0
    %v635 = vadd.f32 0.0, %v634
    %v636 = vpop.f32.mrf.mxu0
    %637 = vdwg.mxu0
    %638 = vmatpush.bf16.msra.mxu0 0
    %639 = vmatpush.bf16.msra.mxu0 0
    %640 = vmatpush.bf16.msra.mxu0 0
    %641 = vmatpush.bf16.msra.mxu0 0
    %642 = vmatpush.bf16.msra.mxu0 0
    %643 = vmatpush.bf16.msra.mxu0 0
    %644 = vmatpush.bf16.msra.mxu0 0
    %645 = vmatpush.bf16.msra.mxu0 %v571
    %646 = vmatmul.bf16.gmra.mxu0 %v553
    %v647 = vpop.f32.mrf.mxu0
    %v648 = vadd.f32 0.0, %v647
    %v649 = vpop.f32.mrf.mxu0
    %650 = vdwg.mxu0
    %v651 = vld [vmem:[#allocation2] sm:$0xff]
    %v652 = vld [vmem:[#allocation2 + $0x8] sm:$0xff]
    %v653 = vld [vmem:[#allocation2 + $0x10] sm:$0xff]
    %v660 = vrot.slane %v334, 7
    %v661 = vrot.slane %v347, 7
    %v662 = vrot.slane %v360, 7
    %v663 = vrot.slane %v373, 7
    %v664 = vrot.slane %v386, 7
    %v665 = vrot.slane %v399, 7
    %v678 = vrot.slane %v458, 6
    %v679 = vrot.slane %v471, 6
    %v680 = vrot.slane %v484, 6
    %v681 = vrot.slane %v497, 6
    %v682 = vrot.slane %v510, 6
    %v683 = vrot.slane %v523, 6
    %v696 = vrot.slane %v583, 5
    %v697 = vrot.slane %v596, 5
    %v698 = vrot.slane %v609, 5
    %v699 = vrot.slane %v622, 5
    %v700 = vrot.slane %v635, 5
    %v701 = vrot.slane %v648, 5
    %vm708 = vcmask 1040384
    %v709 = vsel %vm708, %v212, %v660
    %v710 = vsel %vm708, %v225, %v661
    %v711 = vsel %vm708, %v238, %v662
    %v712 = vsel %vm708, %v251, %v663
    %v713 = vsel %vm708, %v264, %v664
    %v714 = vsel %vm708, %v277, %v665
    %vm715 = vcmask 1041408
    %v716 = vsel %vm715, %v709, %v678
    %v717 = vsel %vm715, %v710, %v679
    %v718 = vsel %vm715, %v711, %v680
    %v719 = vsel %vm715, %v712, %v681
    %v720 = vsel %vm715, %v713, %v682
    %v721 = vsel %vm715, %v714, %v683
    %vm722 = vcmask 1042432
    %v723 = vsel %vm722, %v716, %v696
    %v724 = vsel %vm722, %v717, %v697
    %v725 = vsel %vm722, %v718, %v698
    %v726 = vsel %vm722, %v719, %v699
    %v727 = vsel %vm722, %v720, %v700
    %v728 = vsel %vm722, %v721, %v701
    %v735 = vrot.slane %v724, 4
    %v736 = vrot.slane %v726, 4
    %v737 = vrot.slane %v728, 4
    %v738 = vsel %vm183, %v723, %v735
    %v739 = vsel %vm183, %v725, %v736
    %v740 = vsel %vm183, %v727, %v737
    %v744 = vadd.f32 %v651, %v738
    %v745 = vadd.f32 %v652, %v739
    %v746 = vadd.f32 %v653, %v740
    %747 = vst [vmem:[#allocation2] sm:$0xff] %v744
    %748 = vst [vmem:[#allocation2 + $0x8] sm:$0xff] %v745
    %749 = vst [vmem:[#allocation2 + $0x10] sm:$0xff] %v746
    // Predicated region
    $region74: #{tpu_custom_call.1} parent=1 // pred_check
      %p750 = pneg %p153
    $region75: #{tpu_custom_call.1} parent=1 // pred_check_branch
      %752 = sbr.rel (%p750) target = $region77
    $region76: #{tpu_custom_call.1} parent=1 // pred_region
      %v753 = vld [vmem:[#allocation2] sm:$0xff]
      %v754 = vld [vmem:[#allocation2 + $0x8] sm:$0xff]
      %v755 = vld [vmem:[#allocation2 + $0x10] sm:$0xff]
      %v756 = vld [vmem:[%s2] sm:$0xf]
      %758 = vset.pattern.permute.xlu0 0
      %759 = vperm.xlu0 %758, %v756
      %v760 = vpop.permute.xlu0 %759
      %v762 = vunpack.c.l.s4 839922192
      %v763 = vunpack.c.0.s8 %v762
      %v764 = vperm.slane %v760, %v763
      %v766 = vmul.f32 %v753, %v764
      %v767 = vmul.f32 %v754, %v764
      %v768 = vmul.f32 %v755, %v764
      %v769 = vld [vmem:[#allocation8] sm:$0xff]
      %v770 = vld [vmem:[#allocation8 + $0x8] sm:$0xff]
      %v771 = vld [vmem:[#allocation8 + $0x10] sm:$0xff]
      %v772 = vld [vmem:[#allocation8 + $0x18] sm:$0xff]
      %v773 = vld [vmem:[#allocation8 + $0x20] sm:$0xff]
      %v774 = vld [vmem:[#allocation8 + $0x28] sm:$0xff]
      %v775 = vld [vmem:[#allocation8 + $0x30] sm:$0xff]
      %v776 = vld [vmem:[#allocation8 + $0x38] sm:$0xff]
      %v777 = vld [vmem:[#allocation8 + $0x40] sm:$0xff]
      %v778 = vld [vmem:[#allocation8 + $0x48] sm:$0xff]
      %v779 = vld [vmem:[#allocation8 + $0x50] sm:$0xff]
      %v780 = vld [vmem:[#allocation8 + $0x58] sm:$0xff]
      %v781 = vld [vmem:[#allocation8 + $0x60] sm:$0xff]
      %v782 = vld [vmem:[#allocation8 + $0x68] sm:$0xff]
      %v783 = vld [vmem:[#allocation8 + $0x70] sm:$0xff]
      %v784 = vld [vmem:[#allocation8 + $0x78] sm:$0xff]
      %v785 = vld [vmem:[#allocation8 + $0x80] sm:$0xff]
      %v786 = vld [vmem:[#allocation8 + $0x88] sm:$0xff]
      %v787 = vld [vmem:[#allocation8 + $0x90] sm:$0xff]
      %v788 = vld [vmem:[#allocation8 + $0x98] sm:$0xff]
      %v789 = vld [vmem:[#allocation8 + $0xa0] sm:$0xff]
      %v790 = vld [vmem:[#allocation8 + $0xa8] sm:$0xff]
      %v791 = vld [vmem:[#allocation8 + $0xb0] sm:$0xff]
      %v792 = vld [vmem:[#allocation8 + $0xb8] sm:$0xff]
      %v793 = vld [vmem:[#allocation8 + $0xc0] sm:$0xff]
      %v794 = vld [vmem:[#allocation8 + $0xc8] sm:$0xff]
      %v795 = vld [vmem:[#allocation8 + $0xd0] sm:$0xff]
      %v796 = vld [vmem:[#allocation8 + $0xd8] sm:$0xff]
      %v797 = vld [vmem:[#allocation8 + $0xe0] sm:$0xff]
      %v798 = vld [vmem:[#allocation8 + $0xe8] sm:$0xff]
      %v799 = vld [vmem:[#allocation8 + $0xf0] sm:$0xff]
      %v800 = vld [vmem:[#allocation8 + $0xf8] sm:$0xff]
      %v801 = vld [vmem:[#allocation8 + $0x100] sm:$0xff]
      %v802 = vld [vmem:[#allocation8 + $0x108] sm:$0xff]
      %v803 = vld [vmem:[#allocation8 + $0x110] sm:$0xff]
      %v804 = vld [vmem:[#allocation8 + $0x118] sm:$0xff]
      %v805 = vld [vmem:[#allocation8 + $0x120] sm:$0xff]
      %v806 = vld [vmem:[#allocation8 + $0x128] sm:$0xff]
      %v807 = vld [vmem:[#allocation8 + $0x130] sm:$0xff]
      %v808 = vld [vmem:[#allocation8 + $0x138] sm:$0xff]
      %v809 = vld [vmem:[#allocation8 + $0x140] sm:$0xff]
      %v810 = vld [vmem:[#allocation8 + $0x148] sm:$0xff]
      %v811 = vld [vmem:[#allocation8 + $0x150] sm:$0xff]
      %v812 = vld [vmem:[#allocation8 + $0x158] sm:$0xff]
      %v813 = vld [vmem:[#allocation8 + $0x160] sm:$0xff]
      %v814 = vld [vmem:[#allocation8 + $0x168] sm:$0xff]
      %v815 = vld [vmem:[#allocation8 + $0x170] sm:$0xff]
      %v816 = vld [vmem:[#allocation8 + $0x178] sm:$0xff]
      %v817 = vld [vmem:[#allocation8 + $0x180] sm:$0xff]
      %v818 = vld [vmem:[#allocation8 + $0x188] sm:$0xff]
      %v819 = vld [vmem:[#allocation8 + $0x190] sm:$0xff]
      %v820 = vld [vmem:[#allocation8 + $0x198] sm:$0xff]
      %v821 = vld [vmem:[#allocation8 + $0x1a0] sm:$0xff]
      %v822 = vld [vmem:[#allocation8 + $0x1a8] sm:$0xff]
      %v823 = vld [vmem:[#allocation8 + $0x1b0] sm:$0xff]
      %v824 = vld [vmem:[#allocation8 + $0x1b8] sm:$0xff]
      %v825 = vld [vmem:[#allocation8 + $0x1c0] sm:$0xff]
      %v826 = vld [vmem:[#allocation8 + $0x1c8] sm:$0xff]
      %v827 = vld [vmem:[#allocation8 + $0x1d0] sm:$0xff]
      %v828 = vld [vmem:[#allocation8 + $0x1d8] sm:$0xff]
      %v829 = vld [vmem:[#allocation8 + $0x1e0] sm:$0xff]
      %v830 = vld [vmem:[#allocation8 + $0x1e8] sm:$0xff]
      %v831 = vld [vmem:[#allocation8 + $0x1f0] sm:$0xff]
      %v832 = vld [vmem:[#allocation8 + $0x1f8] sm:$0xff]
      %v833 = vld [vmem:[#allocation8 + $0x200] sm:$0xff]
      %v834 = vld [vmem:[#allocation8 + $0x208] sm:$0xff]
      %v835 = vld [vmem:[#allocation8 + $0x210] sm:$0xff]
      %v836 = vld [vmem:[#allocation8 + $0x218] sm:$0xff]
      %v837 = vld [vmem:[#allocation8 + $0x220] sm:$0xff]
      %v838 = vld [vmem:[#allocation8 + $0x228] sm:$0xff]
      %v839 = vld [vmem:[#allocation8 + $0x230] sm:$0xff]
      %v840 = vld [vmem:[#allocation8 + $0x238] sm:$0xff]
      %v841 = vld [vmem:[#allocation8 + $0x240] sm:$0xff]
      %v842 = vld [vmem:[#allocation8 + $0x248] sm:$0xff]
      %v843 = vld [vmem:[#allocation8 + $0x250] sm:$0xff]
      %v844 = vld [vmem:[#allocation8 + $0x258] sm:$0xff]
      %v845 = vld [vmem:[#allocation8 + $0x260] sm:$0xff]
      %v846 = vld [vmem:[#allocation8 + $0x268] sm:$0xff]
      %v847 = vld [vmem:[#allocation8 + $0x270] sm:$0xff]
      %v848 = vld [vmem:[#allocation8 + $0x278] sm:$0xff]
      %v849 = vld [vmem:[#allocation8 + $0x280] sm:$0xff]
      %v850 = vld [vmem:[#allocation8 + $0x288] sm:$0xff]
      %v851 = vld [vmem:[#allocation8 + $0x290] sm:$0xff]
      %v852 = vld [vmem:[#allocation8 + $0x298] sm:$0xff]
      %v853 = vld [vmem:[#allocation8 + $0x2a0] sm:$0xff]
      %v854 = vld [vmem:[#allocation8 + $0x2a8] sm:$0xff]
      %v855 = vld [vmem:[#allocation8 + $0x2b0] sm:$0xff]
      %v856 = vld [vmem:[#allocation8 + $0x2b8] sm:$0xff]
      %v857 = vld [vmem:[#allocation8 + $0x2c0] sm:$0xff]
      %v858 = vld [vmem:[#allocation8 + $0x2c8] sm:$0xff]
      %v859 = vld [vmem:[#allocation8 + $0x2d0] sm:$0xff]
      %v860 = vld [vmem:[#allocation8 + $0x2d8] sm:$0xff]
      %v861 = vld [vmem:[#allocation8 + $0x2e0] sm:$0xff]
      %v862 = vld [vmem:[#allocation8 + $0x2e8] sm:$0xff]
      %v863 = vld [vmem:[#allocation8 + $0x2f0] sm:$0xff]
      %v864 = vld [vmem:[#allocation8 + $0x2f8] sm:$0xff]
      %v865 = vld [vmem:[#allocation8 + $0x300] sm:$0xff]
      %v866 = vld [vmem:[#allocation8 + $0x308] sm:$0xff]
      %v867 = vld [vmem:[#allocation8 + $0x310] sm:$0xff]
      %v868 = vld [vmem:[#allocation8 + $0x318] sm:$0xff]
      %v869 = vld [vmem:[#allocation8 + $0x320] sm:$0xff]
      %v870 = vld [vmem:[#allocation8 + $0x328] sm:$0xff]
      %v871 = vld [vmem:[#allocation8 + $0x330] sm:$0xff]
      %v872 = vld [vmem:[#allocation8 + $0x338] sm:$0xff]
      %v873 = vld [vmem:[#allocation8 + $0x340] sm:$0xff]
      %v874 = vld [vmem:[#allocation8 + $0x348] sm:$0xff]
      %v875 = vld [vmem:[#allocation8 + $0x350] sm:$0xff]
      %v876 = vld [vmem:[#allocation8 + $0x358] sm:$0xff]
      %v877 = vld [vmem:[#allocation8 + $0x360] sm:$0xff]
      %v878 = vld [vmem:[#allocation8 + $0x368] sm:$0xff]
      %v879 = vld [vmem:[#allocation8 + $0x370] sm:$0xff]
      %v880 = vld [vmem:[#allocation8 + $0x378] sm:$0xff]
      %v881 = vld [vmem:[#allocation8 + $0x380] sm:$0xff]
      %v882 = vld [vmem:[#allocation8 + $0x388] sm:$0xff]
      %v883 = vld [vmem:[#allocation8 + $0x390] sm:$0xff]
      %v884 = vld [vmem:[#allocation8 + $0x398] sm:$0xff]
      %v885 = vld [vmem:[#allocation8 + $0x3a0] sm:$0xff]
      %v886 = vld [vmem:[#allocation8 + $0x3a8] sm:$0xff]
      %v887 = vld [vmem:[#allocation8 + $0x3b0] sm:$0xff]
      %v888 = vld [vmem:[#allocation8 + $0x3b8] sm:$0xff]
      %v889 = vld [vmem:[#allocation8 + $0x3c0] sm:$0xff]
      %v890 = vld [vmem:[#allocation8 + $0x3c8] sm:$0xff]
      %v891 = vld [vmem:[#allocation8 + $0x3d0] sm:$0xff]
      %v892 = vld [vmem:[#allocation8 + $0x3d8] sm:$0xff]
      %v893 = vld [vmem:[#allocation8 + $0x3e0] sm:$0xff]
      %v894 = vld [vmem:[#allocation8 + $0x3e8] sm:$0xff]
      %v895 = vld [vmem:[#allocation8 + $0x3f0] sm:$0xff]
      %v896 = vld [vmem:[#allocation8 + $0x3f8] sm:$0xff]
      %v897 = vld [vmem:[#allocation8 + $0x400] sm:$0xff]
      %v898 = vld [vmem:[#allocation8 + $0x408] sm:$0xff]
      %v899 = vld [vmem:[#allocation8 + $0x410] sm:$0xff]
      %v900 = vld [vmem:[#allocation8 + $0x418] sm:$0xff]
      %v901 = vld [vmem:[#allocation8 + $0x420] sm:$0xff]
      %v902 = vld [vmem:[#allocation8 + $0x428] sm:$0xff]
      %v903 = vld [vmem:[#allocation8 + $0x430] sm:$0xff]
      %v904 = vld [vmem:[#allocation8 + $0x438] sm:$0xff]
      %v905 = vld [vmem:[#allocation8 + $0x440] sm:$0xff]
      %v906 = vld [vmem:[#allocation8 + $0x448] sm:$0xff]
      %v907 = vld [vmem:[#allocation8 + $0x450] sm:$0xff]
      %v908 = vld [vmem:[#allocation8 + $0x458] sm:$0xff]
      %v909 = vld [vmem:[#allocation8 + $0x460] sm:$0xff]
      %v910 = vld [vmem:[#allocation8 + $0x468] sm:$0xff]
      %v911 = vld [vmem:[#allocation8 + $0x470] sm:$0xff]
      %v912 = vld [vmem:[#allocation8 + $0x478] sm:$0xff]
      %v913 = vld [vmem:[#allocation8 + $0x480] sm:$0xff]
      %v914 = vld [vmem:[#allocation8 + $0x488] sm:$0xff]
      %v915 = vld [vmem:[#allocation8 + $0x490] sm:$0xff]
      %v916 = vld [vmem:[#allocation8 + $0x498] sm:$0xff]
      %v917 = vld [vmem:[#allocation8 + $0x4a0] sm:$0xff]
      %v918 = vld [vmem:[#allocation8 + $0x4a8] sm:$0xff]
      %v919 = vld [vmem:[#allocation8 + $0x4b0] sm:$0xff]
      %v920 = vld [vmem:[#allocation8 + $0x4b8] sm:$0xff]
      %v921 = vld [vmem:[#allocation8 + $0x4c0] sm:$0xff]
      %v922 = vld [vmem:[#allocation8 + $0x4c8] sm:$0xff]
      %v923 = vld [vmem:[#allocation8 + $0x4d0] sm:$0xff]
      %v924 = vld [vmem:[#allocation8 + $0x4d8] sm:$0xff]
      %v925 = vld [vmem:[#allocation8 + $0x4e0] sm:$0xff]
      %v926 = vld [vmem:[#allocation8 + $0x4e8] sm:$0xff]
      %v927 = vld [vmem:[#allocation8 + $0x4f0] sm:$0xff]
      %v928 = vld [vmem:[#allocation8 + $0x4f8] sm:$0xff]
      %v929 = vld [vmem:[#allocation8 + $0x500] sm:$0xff]
      %v930 = vld [vmem:[#allocation8 + $0x508] sm:$0xff]
      %v931 = vld [vmem:[#allocation8 + $0x510] sm:$0xff]
      %v932 = vld [vmem:[#allocation8 + $0x518] sm:$0xff]
      %v933 = vld [vmem:[#allocation8 + $0x520] sm:$0xff]
      %v934 = vld [vmem:[#allocation8 + $0x528] sm:$0xff]
      %v935 = vld [vmem:[#allocation8 + $0x530] sm:$0xff]
      %v936 = vld [vmem:[#allocation8 + $0x538] sm:$0xff]
      %v937 = vld [vmem:[#allocation8 + $0x540] sm:$0xff]
      %v938 = vld [vmem:[#allocation8 + $0x548] sm:$0xff]
      %v939 = vld [vmem:[#allocation8 + $0x550] sm:$0xff]
      %v940 = vld [vmem:[#allocation8 + $0x558] sm:$0xff]
      %v941 = vld [vmem:[#allocation8 + $0x560] sm:$0xff]
      %v942 = vld [vmem:[#allocation8 + $0x568] sm:$0xff]
      %v943 = vld [vmem:[#allocation8 + $0x570] sm:$0xff]
      %v944 = vld [vmem:[#allocation8 + $0x578] sm:$0xff]
      %v945 = vld [vmem:[#allocation8 + $0x580] sm:$0xff]
      %v946 = vld [vmem:[#allocation8 + $0x588] sm:$0xff]
      %v947 = vld [vmem:[#allocation8 + $0x590] sm:$0xff]
      %v948 = vld [vmem:[#allocation8 + $0x598] sm:$0xff]
      %v949 = vld [vmem:[#allocation8 + $0x5a0] sm:$0xff]
      %v950 = vld [vmem:[#allocation8 + $0x5a8] sm:$0xff]
      %v951 = vld [vmem:[#allocation8 + $0x5b0] sm:$0xff]
      %v952 = vld [vmem:[#allocation8 + $0x5b8] sm:$0xff]
      %v953 = vld [vmem:[#allocation8 + $0x5c0] sm:$0xff]
      %v954 = vld [vmem:[#allocation8 + $0x5c8] sm:$0xff]
      %v955 = vld [vmem:[#allocation8 + $0x5d0] sm:$0xff]
      %v956 = vld [vmem:[#allocation8 + $0x5d8] sm:$0xff]
      %v957 = vld [vmem:[#allocation8 + $0x5e0] sm:$0xff]
      %v958 = vld [vmem:[#allocation8 + $0x5e8] sm:$0xff]
      %v959 = vld [vmem:[#allocation8 + $0x5f0] sm:$0xff]
      %v960 = vld [vmem:[#allocation8 + $0x5f8] sm:$0xff]
      %v961 = vld [vmem:[#allocation8 + $0x600] sm:$0xff]
      %v962 = vld [vmem:[#allocation8 + $0x608] sm:$0xff]
      %v963 = vld [vmem:[#allocation8 + $0x610] sm:$0xff]
      %v964 = vld [vmem:[#allocation8 + $0x618] sm:$0xff]
      %v965 = vld [vmem:[#allocation8 + $0x620] sm:$0xff]
      %v966 = vld [vmem:[#allocation8 + $0x628] sm:$0xff]
      %v967 = vld [vmem:[#allocation8 + $0x630] sm:$0xff]
      %v968 = vld [vmem:[#allocation8 + $0x638] sm:$0xff]
      %v969 = vld [vmem:[#allocation8 + $0x640] sm:$0xff]
      %v970 = vld [vmem:[#allocation8 + $0x648] sm:$0xff]
      %v971 = vld [vmem:[#allocation8 + $0x650] sm:$0xff]
      %v972 = vld [vmem:[#allocation8 + $0x658] sm:$0xff]
      %v973 = vld [vmem:[#allocation8 + $0x660] sm:$0xff]
      %v974 = vld [vmem:[#allocation8 + $0x668] sm:$0xff]
      %v975 = vld [vmem:[#allocation8 + $0x670] sm:$0xff]
      %v976 = vld [vmem:[#allocation8 + $0x678] sm:$0xff]
      %v977 = vld [vmem:[#allocation8 + $0x680] sm:$0xff]
      %v978 = vld [vmem:[#allocation8 + $0x688] sm:$0xff]
      %v979 = vld [vmem:[#allocation8 + $0x690] sm:$0xff]
      %v980 = vld [vmem:[#allocation8 + $0x698] sm:$0xff]
      %v981 = vld [vmem:[#allocation8 + $0x6a0] sm:$0xff]
      %v982 = vld [vmem:[#allocation8 + $0x6a8] sm:$0xff]
      %v983 = vld [vmem:[#allocation8 + $0x6b0] sm:$0xff]
      %v984 = vld [vmem:[#allocation8 + $0x6b8] sm:$0xff]
      %v985 = vld [vmem:[#allocation8 + $0x6c0] sm:$0xff]
      %v986 = vld [vmem:[#allocation8 + $0x6c8] sm:$0xff]
      %v987 = vld [vmem:[#allocation8 + $0x6d0] sm:$0xff]
      %v988 = vld [vmem:[#allocation8 + $0x6d8] sm:$0xff]
      %v989 = vld [vmem:[#allocation8 + $0x6e0] sm:$0xff]
      %v990 = vld [vmem:[#allocation8 + $0x6e8] sm:$0xff]
      %v991 = vld [vmem:[#allocation8 + $0x6f0] sm:$0xff]
      %v992 = vld [vmem:[#allocation8 + $0x6f8] sm:$0xff]
      %v993 = vld [vmem:[#allocation8 + $0x700] sm:$0xff]
      %v994 = vld [vmem:[#allocation8 + $0x708] sm:$0xff]
      %v995 = vld [vmem:[#allocation8 + $0x710] sm:$0xff]
      %v996 = vld [vmem:[#allocation8 + $0x718] sm:$0xff]
      %v997 = vld [vmem:[#allocation8 + $0x720] sm:$0xff]
      %v998 = vld [vmem:[#allocation8 + $0x728] sm:$0xff]
      %v999 = vld [vmem:[#allocation8 + $0x730] sm:$0xff]
      %v1000 = vld [vmem:[#allocation8 + $0x738] sm:$0xff]
      %v1001 = vld [vmem:[#allocation8 + $0x740] sm:$0xff]
      %v1002 = vld [vmem:[#allocation8 + $0x748] sm:$0xff]
      %v1003 = vld [vmem:[#allocation8 + $0x750] sm:$0xff]
      %v1004 = vld [vmem:[#allocation8 + $0x758] sm:$0xff]
      %v1005 = vld [vmem:[#allocation8 + $0x760] sm:$0xff]
      %v1006 = vld [vmem:[#allocation8 + $0x768] sm:$0xff]
      %v1007 = vld [vmem:[#allocation8 + $0x770] sm:$0xff]
      %v1008 = vld [vmem:[#allocation8 + $0x778] sm:$0xff]
      %v1009 = vld [vmem:[#allocation8 + $0x780] sm:$0xff]
      %v1010 = vld [vmem:[#allocation8 + $0x788] sm:$0xff]
      %v1011 = vld [vmem:[#allocation8 + $0x790] sm:$0xff]
      %v1012 = vld [vmem:[#allocation8 + $0x798] sm:$0xff]
      %v1013 = vld [vmem:[#allocation8 + $0x7a0] sm:$0xff]
      %v1014 = vld [vmem:[#allocation8 + $0x7a8] sm:$0xff]
      %v1015 = vld [vmem:[#allocation8 + $0x7b0] sm:$0xff]
      %v1016 = vld [vmem:[#allocation8 + $0x7b8] sm:$0xff]
      %v1017 = vld [vmem:[#allocation8 + $0x7c0] sm:$0xff]
      %v1018 = vld [vmem:[#allocation8 + $0x7c8] sm:$0xff]
      %v1019 = vld [vmem:[#allocation8 + $0x7d0] sm:$0xff]
      %v1020 = vld [vmem:[#allocation8 + $0x7d8] sm:$0xff]
      %v1021 = vld [vmem:[#allocation8 + $0x7e0] sm:$0xff]
      %v1022 = vld [vmem:[#allocation8 + $0x7e8] sm:$0xff]
      %v1023 = vld [vmem:[#allocation8 + $0x7f0] sm:$0xff]
      %v1024 = vld [vmem:[#allocation8 + $0x7f8] sm:$0xff]
      %v1025 = vld [vmem:[#allocation8 + $0x800] sm:$0xff]
      %v1026 = vld [vmem:[#allocation8 + $0x808] sm:$0xff]
      %v1027 = vld [vmem:[#allocation8 + $0x810] sm:$0xff]
      %v1028 = vld [vmem:[#allocation8 + $0x818] sm:$0xff]
      %v1029 = vld [vmem:[#allocation8 + $0x820] sm:$0xff]
      %v1030 = vld [vmem:[#allocation8 + $0x828] sm:$0xff]
      %v1031 = vld [vmem:[#allocation8 + $0x830] sm:$0xff]
      %v1032 = vld [vmem:[#allocation8 + $0x838] sm:$0xff]
      %v1033 = vld [vmem:[#allocation8 + $0x840] sm:$0xff]
      %v1034 = vld [vmem:[#allocation8 + $0x848] sm:$0xff]
      %v1035 = vld [vmem:[#allocation8 + $0x850] sm:$0xff]
      %v1036 = vld [vmem:[#allocation8 + $0x858] sm:$0xff]
      %v1037 = vld [vmem:[#allocation8 + $0x860] sm:$0xff]
      %v1038 = vld [vmem:[#allocation8 + $0x868] sm:$0xff]
      %v1039 = vld [vmem:[#allocation8 + $0x870] sm:$0xff]
      %v1040 = vld [vmem:[#allocation8 + $0x878] sm:$0xff]
      %v1041 = vld [vmem:[#allocation8 + $0x880] sm:$0xff]
      %v1042 = vld [vmem:[#allocation8 + $0x888] sm:$0xff]
      %v1043 = vld [vmem:[#allocation8 + $0x890] sm:$0xff]
      %v1044 = vld [vmem:[#allocation8 + $0x898] sm:$0xff]
      %v1045 = vld [vmem:[#allocation8 + $0x8a0] sm:$0xff]
      %v1046 = vld [vmem:[#allocation8 + $0x8a8] sm:$0xff]
      %v1047 = vld [vmem:[#allocation8 + $0x8b0] sm:$0xff]
      %v1048 = vld [vmem:[#allocation8 + $0x8b8] sm:$0xff]
      %v1049 = vld [vmem:[#allocation8 + $0x8c0] sm:$0xff]
      %v1050 = vld [vmem:[#allocation8 + $0x8c8] sm:$0xff]
      %v1051 = vld [vmem:[#allocation8 + $0x8d0] sm:$0xff]
      %v1052 = vld [vmem:[#allocation8 + $0x8d8] sm:$0xff]
      %v1053 = vld [vmem:[#allocation8 + $0x8e0] sm:$0xff]
      %v1054 = vld [vmem:[#allocation8 + $0x8e8] sm:$0xff]
      %v1055 = vld [vmem:[#allocation8 + $0x8f0] sm:$0xff]
      %v1056 = vld [vmem:[#allocation8 + $0x8f8] sm:$0xff]
      %v1057 = vld [vmem:[#allocation8 + $0x900] sm:$0xff]
      %v1058 = vld [vmem:[#allocation8 + $0x908] sm:$0xff]
      %v1059 = vld [vmem:[#allocation8 + $0x910] sm:$0xff]
      %v1060 = vld [vmem:[#allocation8 + $0x918] sm:$0xff]
      %v1061 = vld [vmem:[#allocation8 + $0x920] sm:$0xff]
      %v1062 = vld [vmem:[#allocation8 + $0x928] sm:$0xff]
      %v1063 = vld [vmem:[#allocation8 + $0x930] sm:$0xff]
      %v1064 = vld [vmem:[#allocation8 + $0x938] sm:$0xff]
      %v1065 = vld [vmem:[#allocation8 + $0x940] sm:$0xff]
      %v1066 = vld [vmem:[#allocation8 + $0x948] sm:$0xff]
      %v1067 = vld [vmem:[#allocation8 + $0x950] sm:$0xff]
      %v1068 = vld [vmem:[#allocation8 + $0x958] sm:$0xff]
      %v1069 = vld [vmem:[#allocation8 + $0x960] sm:$0xff]
      %v1070 = vld [vmem:[#allocation8 + $0x968] sm:$0xff]
      %v1071 = vld [vmem:[#allocation8 + $0x970] sm:$0xff]
      %v1072 = vld [vmem:[#allocation8 + $0x978] sm:$0xff]
      %v1073 = vld [vmem:[#allocation8 + $0x980] sm:$0xff]
      %v1074 = vld [vmem:[#allocation8 + $0x988] sm:$0xff]
      %v1075 = vld [vmem:[#allocation8 + $0x990] sm:$0xff]
      %v1076 = vld [vmem:[#allocation8 + $0x998] sm:$0xff]
      %v1077 = vld [vmem:[#allocation8 + $0x9a0] sm:$0xff]
      %v1078 = vld [vmem:[#allocation8 + $0x9a8] sm:$0xff]
      %v1079 = vld [vmem:[#allocation8 + $0x9b0] sm:$0xff]
      %v1080 = vld [vmem:[#allocation8 + $0x9b8] sm:$0xff]
      %v1081 = vld [vmem:[#allocation8 + $0x9c0] sm:$0xff]
      %v1082 = vld [vmem:[#allocation8 + $0x9c8] sm:$0xff]
      %v1083 = vld [vmem:[#allocation8 + $0x9d0] sm:$0xff]
      %v1084 = vld [vmem:[#allocation8 + $0x9d8] sm:$0xff]
      %v1085 = vld [vmem:[#allocation8 + $0x9e0] sm:$0xff]
      %v1086 = vld [vmem:[#allocation8 + $0x9e8] sm:$0xff]
      %v1087 = vld [vmem:[#allocation8 + $0x9f0] sm:$0xff]
      %v1088 = vld [vmem:[#allocation8 + $0x9f8] sm:$0xff]
      %v1089 = vld [vmem:[#allocation8 + $0xa00] sm:$0xff]
      %v1090 = vld [vmem:[#allocation8 + $0xa08] sm:$0xff]
      %v1091 = vld [vmem:[#allocation8 + $0xa10] sm:$0xff]
      %v1092 = vld [vmem:[#allocation8 + $0xa18] sm:$0xff]
      %v1093 = vld [vmem:[#allocation8 + $0xa20] sm:$0xff]
      %v1094 = vld [vmem:[#allocation8 + $0xa28] sm:$0xff]
      %v1095 = vld [vmem:[#allocation8 + $0xa30] sm:$0xff]
      %v1096 = vld [vmem:[#allocation8 + $0xa38] sm:$0xff]
      %v1097 = vld [vmem:[#allocation8 + $0xa40] sm:$0xff]
      %v1098 = vld [vmem:[#allocation8 + $0xa48] sm:$0xff]
      %v1099 = vld [vmem:[#allocation8 + $0xa50] sm:$0xff]
      %v1100 = vld [vmem:[#allocation8 + $0xa58] sm:$0xff]
      %v1101 = vld [vmem:[#allocation8 + $0xa60] sm:$0xff]
      %v1102 = vld [vmem:[#allocation8 + $0xa68] sm:$0xff]
      %v1103 = vld [vmem:[#allocation8 + $0xa70] sm:$0xff]
      %v1104 = vld [vmem:[#allocation8 + $0xa78] sm:$0xff]
      %v1105 = vld [vmem:[#allocation8 + $0xa80] sm:$0xff]
      %v1106 = vld [vmem:[#allocation8 + $0xa88] sm:$0xff]
      %v1107 = vld [vmem:[#allocation8 + $0xa90] sm:$0xff]
      %v1108 = vld [vmem:[#allocation8 + $0xa98] sm:$0xff]
      %v1109 = vld [vmem:[#allocation8 + $0xaa0] sm:$0xff]
      %v1110 = vld [vmem:[#allocation8 + $0xaa8] sm:$0xff]
      %v1111 = vld [vmem:[#allocation8 + $0xab0] sm:$0xff]
      %v1112 = vld [vmem:[#allocation8 + $0xab8] sm:$0xff]
      %v1113 = vld [vmem:[#allocation8 + $0xac0] sm:$0xff]
      %v1114 = vld [vmem:[#allocation8 + $0xac8] sm:$0xff]
      %v1115 = vld [vmem:[#allocation8 + $0xad0] sm:$0xff]
      %v1116 = vld [vmem:[#allocation8 + $0xad8] sm:$0xff]
      %v1117 = vld [vmem:[#allocation8 + $0xae0] sm:$0xff]
      %v1118 = vld [vmem:[#allocation8 + $0xae8] sm:$0xff]
      %v1119 = vld [vmem:[#allocation8 + $0xaf0] sm:$0xff]
      %v1120 = vld [vmem:[#allocation8 + $0xaf8] sm:$0xff]
      %v1121 = vld [vmem:[#allocation8 + $0xb00] sm:$0xff]
      %v1122 = vld [vmem:[#allocation8 + $0xb08] sm:$0xff]
      %v1123 = vld [vmem:[#allocation8 + $0xb10] sm:$0xff]
      %v1124 = vld [vmem:[#allocation8 + $0xb18] sm:$0xff]
      %v1125 = vld [vmem:[#allocation8 + $0xb20] sm:$0xff]
      %v1126 = vld [vmem:[#allocation8 + $0xb28] sm:$0xff]
      %v1127 = vld [vmem:[#allocation8 + $0xb30] sm:$0xff]
      %v1128 = vld [vmem:[#allocation8 + $0xb38] sm:$0xff]
      %v1129 = vld [vmem:[#allocation8 + $0xb40] sm:$0xff]
      %v1130 = vld [vmem:[#allocation8 + $0xb48] sm:$0xff]
      %v1131 = vld [vmem:[#allocation8 + $0xb50] sm:$0xff]
      %v1132 = vld [vmem:[#allocation8 + $0xb58] sm:$0xff]
      %v1133 = vld [vmem:[#allocation8 + $0xb60] sm:$0xff]
      %v1134 = vld [vmem:[#allocation8 + $0xb68] sm:$0xff]
      %v1135 = vld [vmem:[#allocation8 + $0xb70] sm:$0xff]
      %v1136 = vld [vmem:[#allocation8 + $0xb78] sm:$0xff]
      %v1137 = vld [vmem:[#allocation8 + $0xb80] sm:$0xff]
      %v1138 = vld [vmem:[#allocation8 + $0xb88] sm:$0xff]
      %v1139 = vld [vmem:[#allocation8 + $0xb90] sm:$0xff]
      %v1140 = vld [vmem:[#allocation8 + $0xb98] sm:$0xff]
      %v1141 = vld [vmem:[#allocation8 + $0xba0] sm:$0xff]
      %v1142 = vld [vmem:[#allocation8 + $0xba8] sm:$0xff]
      %v1143 = vld [vmem:[#allocation8 + $0xbb0] sm:$0xff]
      %v1144 = vld [vmem:[#allocation8 + $0xbb8] sm:$0xff]
      %v1145 = vld [vmem:[#allocation8 + $0xbc0] sm:$0xff]
      %v1146 = vld [vmem:[#allocation8 + $0xbc8] sm:$0xff]
      %v1147 = vld [vmem:[#allocation8 + $0xbd0] sm:$0xff]
      %v1148 = vld [vmem:[#allocation8 + $0xbd8] sm:$0xff]
      %v1149 = vld [vmem:[#allocation8 + $0xbe0] sm:$0xff]
      %v1150 = vld [vmem:[#allocation8 + $0xbe8] sm:$0xff]
      %v1151 = vld [vmem:[#allocation8 + $0xbf0] sm:$0xff]
      %v1152 = vld [vmem:[#allocation8 + $0xbf8] sm:$0xff]
      %v1153 = vld [vmem:[#allocation8 + $0xc00] sm:$0xff]
      %v1154 = vld [vmem:[#allocation8 + $0xc08] sm:$0xff]
      %v1155 = vld [vmem:[#allocation8 + $0xc10] sm:$0xff]
      %v1156 = vld [vmem:[#allocation8 + $0xc18] sm:$0xff]
      %v1157 = vld [vmem:[#allocation8 + $0xc20] sm:$0xff]
      %v1158 = vld [vmem:[#allocation8 + $0xc28] sm:$0xff]
      %v1159 = vld [vmem:[#allocation8 + $0xc30] sm:$0xff]
      %v1160 = vld [vmem:[#allocation8 + $0xc38] sm:$0xff]
      %v1161 = vld [vmem:[#allocation8 + $0xc40] sm:$0xff]
      %v1162 = vld [vmem:[#allocation8 + $0xc48] sm:$0xff]
      %v1163 = vld [vmem:[#allocation8 + $0xc50] sm:$0xff]
      %v1164 = vld [vmem:[#allocation8 + $0xc58] sm:$0xff]
      %v1165 = vld [vmem:[#allocation8 + $0xc60] sm:$0xff]
      %v1166 = vld [vmem:[#allocation8 + $0xc68] sm:$0xff]
      %v1167 = vld [vmem:[#allocation8 + $0xc70] sm:$0xff]
      %v1168 = vld [vmem:[#allocation8 + $0xc78] sm:$0xff]
      %v1169 = vld [vmem:[#allocation8 + $0xc80] sm:$0xff]
      %v1170 = vld [vmem:[#allocation8 + $0xc88] sm:$0xff]
      %v1171 = vld [vmem:[#allocation8 + $0xc90] sm:$0xff]
      %v1172 = vld [vmem:[#allocation8 + $0xc98] sm:$0xff]
      %v1173 = vld [vmem:[#allocation8 + $0xca0] sm:$0xff]
      %v1174 = vld [vmem:[#allocation8 + $0xca8] sm:$0xff]
      %v1175 = vld [vmem:[#allocation8 + $0xcb0] sm:$0xff]
      %v1176 = vld [vmem:[#allocation8 + $0xcb8] sm:$0xff]
      %v1177 = vld [vmem:[#allocation8 + $0xcc0] sm:$0xff]
      %v1178 = vld [vmem:[#allocation8 + $0xcc8] sm:$0xff]
      %v1179 = vld [vmem:[#allocation8 + $0xcd0] sm:$0xff]
      %v1180 = vld [vmem:[#allocation8 + $0xcd8] sm:$0xff]
      %v1181 = vld [vmem:[#allocation8 + $0xce0] sm:$0xff]
      %v1182 = vld [vmem:[#allocation8 + $0xce8] sm:$0xff]
      %v1183 = vld [vmem:[#allocation8 + $0xcf0] sm:$0xff]
      %v1184 = vld [vmem:[#allocation8 + $0xcf8] sm:$0xff]
      %v1185 = vld [vmem:[#allocation8 + $0xd00] sm:$0xff]
      %v1186 = vld [vmem:[#allocation8 + $0xd08] sm:$0xff]
      %v1187 = vld [vmem:[#allocation8 + $0xd10] sm:$0xff]
      %v1188 = vld [vmem:[#allocation8 + $0xd18] sm:$0xff]
      %v1189 = vld [vmem:[#allocation8 + $0xd20] sm:$0xff]
      %v1190 = vld [vmem:[#allocation8 + $0xd28] sm:$0xff]
      %v1191 = vld [vmem:[#allocation8 + $0xd30] sm:$0xff]
      %v1192 = vld [vmem:[#allocation8 + $0xd38] sm:$0xff]
      %v1193 = vld [vmem:[#allocation8 + $0xd40] sm:$0xff]
      %v1194 = vld [vmem:[#allocation8 + $0xd48] sm:$0xff]
      %v1195 = vld [vmem:[#allocation8 + $0xd50] sm:$0xff]
      %v1196 = vld [vmem:[#allocation8 + $0xd58] sm:$0xff]
      %v1197 = vld [vmem:[#allocation8 + $0xd60] sm:$0xff]
      %v1198 = vld [vmem:[#allocation8 + $0xd68] sm:$0xff]
      %v1199 = vld [vmem:[#allocation8 + $0xd70] sm:$0xff]
      %v1200 = vld [vmem:[#allocation8 + $0xd78] sm:$0xff]
      %v1201 = vld [vmem:[#allocation8 + $0xd80] sm:$0xff]
      %v1202 = vld [vmem:[#allocation8 + $0xd88] sm:$0xff]
      %v1203 = vld [vmem:[#allocation8 + $0xd90] sm:$0xff]
      %v1204 = vld [vmem:[#allocation8 + $0xd98] sm:$0xff]
      %v1205 = vld [vmem:[#allocation8 + $0xda0] sm:$0xff]
      %v1206 = vld [vmem:[#allocation8 + $0xda8] sm:$0xff]
      %v1207 = vld [vmem:[#allocation8 + $0xdb0] sm:$0xff]
      %v1208 = vld [vmem:[#allocation8 + $0xdb8] sm:$0xff]
      %v1209 = vld [vmem:[#allocation8 + $0xdc0] sm:$0xff]
      %v1210 = vld [vmem:[#allocation8 + $0xdc8] sm:$0xff]
      %v1211 = vld [vmem:[#allocation8 + $0xdd0] sm:$0xff]
      %v1212 = vld [vmem:[#allocation8 + $0xdd8] sm:$0xff]
      %v1213 = vld [vmem:[#allocation8 + $0xde0] sm:$0xff]
      %v1214 = vld [vmem:[#allocation8 + $0xde8] sm:$0xff]
      %v1215 = vld [vmem:[#allocation8 + $0xdf0] sm:$0xff]
      %v1216 = vld [vmem:[#allocation8 + $0xdf8] sm:$0xff]
      %v1217 = vld [vmem:[#allocation8 + $0xe00] sm:$0xff]
      %v1218 = vld [vmem:[#allocation8 + $0xe08] sm:$0xff]
      %v1219 = vld [vmem:[#allocation8 + $0xe10] sm:$0xff]
      %v1220 = vld [vmem:[#allocation8 + $0xe18] sm:$0xff]
      %v1221 = vld [vmem:[#allocation8 + $0xe20] sm:$0xff]
      %v1222 = vld [vmem:[#allocation8 + $0xe28] sm:$0xff]
      %v1223 = vld [vmem:[#allocation8 + $0xe30] sm:$0xff]
      %v1224 = vld [vmem:[#allocation8 + $0xe38] sm:$0xff]
      %v1225 = vld [vmem:[#allocation8 + $0xe40] sm:$0xff]
      %v1226 = vld [vmem:[#allocation8 + $0xe48] sm:$0xff]
      %v1227 = vld [vmem:[#allocation8 + $0xe50] sm:$0xff]
      %v1228 = vld [vmem:[#allocation8 + $0xe58] sm:$0xff]
      %v1229 = vld [vmem:[#allocation8 + $0xe60] sm:$0xff]
      %v1230 = vld [vmem:[#allocation8 + $0xe68] sm:$0xff]
      %v1231 = vld [vmem:[#allocation8 + $0xe70] sm:$0xff]
      %v1232 = vld [vmem:[#allocation8 + $0xe78] sm:$0xff]
      %v1233 = vld [vmem:[#allocation8 + $0xe80] sm:$0xff]
      %v1234 = vld [vmem:[#allocation8 + $0xe88] sm:$0xff]
      %v1235 = vld [vmem:[#allocation8 + $0xe90] sm:$0xff]
      %v1236 = vld [vmem:[#allocation8 + $0xe98] sm:$0xff]
      %v1237 = vld [vmem:[#allocation8 + $0xea0] sm:$0xff]
      %v1238 = vld [vmem:[#allocation8 + $0xea8] sm:$0xff]
      %v1239 = vld [vmem:[#allocation8 + $0xeb0] sm:$0xff]
      %v1240 = vld [vmem:[#allocation8 + $0xeb8] sm:$0xff]
      %v1241 = vld [vmem:[#allocation8 + $0xec0] sm:$0xff]
      %v1242 = vld [vmem:[#allocation8 + $0xec8] sm:$0xff]
      %v1243 = vld [vmem:[#allocation8 + $0xed0] sm:$0xff]
      %v1244 = vld [vmem:[#allocation8 + $0xed8] sm:$0xff]
      %v1245 = vld [vmem:[#allocation8 + $0xee0] sm:$0xff]
      %v1246 = vld [vmem:[#allocation8 + $0xee8] sm:$0xff]
      %v1247 = vld [vmem:[#allocation8 + $0xef0] sm:$0xff]
      %v1248 = vld [vmem:[#allocation8 + $0xef8] sm:$0xff]
      %v1249 = vld [vmem:[#allocation8 + $0xf00] sm:$0xff]
      %v1250 = vld [vmem:[#allocation8 + $0xf08] sm:$0xff]
      %v1251 = vld [vmem:[#allocation8 + $0xf10] sm:$0xff]
      %v1252 = vld [vmem:[#allocation8 + $0xf18] sm:$0xff]
      %v1253 = vld [vmem:[#allocation8 + $0xf20] sm:$0xff]
      %v1254 = vld [vmem:[#allocation8 + $0xf28] sm:$0xff]
      %v1255 = vld [vmem:[#allocation8 + $0xf30] sm:$0xff]
      %v1256 = vld [vmem:[#allocation8 + $0xf38] sm:$0xff]
      %v1257 = vld [vmem:[#allocation8 + $0xf40] sm:$0xff]
      %v1258 = vld [vmem:[#allocation8 + $0xf48] sm:$0xff]
      %v1259 = vld [vmem:[#allocation8 + $0xf50] sm:$0xff]
      %v1260 = vld [vmem:[#allocation8 + $0xf58] sm:$0xff]
      %v1261 = vld [vmem:[#allocation8 + $0xf60] sm:$0xff]
      %v1262 = vld [vmem:[#allocation8 + $0xf68] sm:$0xff]
      %v1263 = vld [vmem:[#allocation8 + $0xf70] sm:$0xff]
      %v1264 = vld [vmem:[#allocation8 + $0xf78] sm:$0xff]
      %v1265 = vld [vmem:[#allocation8 + $0xf80] sm:$0xff]
      %v1266 = vld [vmem:[#allocation8 + $0xf88] sm:$0xff]
      %v1267 = vld [vmem:[#allocation8 + $0xf90] sm:$0xff]
      %v1268 = vld [vmem:[#allocation8 + $0xf98] sm:$0xff]
      %v1269 = vld [vmem:[#allocation8 + $0xfa0] sm:$0xff]
      %v1270 = vld [vmem:[#allocation8 + $0xfa8] sm:$0xff]
      %v1271 = vld [vmem:[#allocation8 + $0xfb0] sm:$0xff]
      %v1272 = vld [vmem:[#allocation8 + $0xfb8] sm:$0xff]
      %v1273 = vld [vmem:[#allocation8 + $0xfc0] sm:$0xff]
      %v1274 = vld [vmem:[#allocation8 + $0xfc8] sm:$0xff]
      %v1275 = vld [vmem:[#allocation8 + $0xfd0] sm:$0xff]
      %v1276 = vld [vmem:[#allocation8 + $0xfd8] sm:$0xff]
      %v1277 = vld [vmem:[#allocation8 + $0xfe0] sm:$0xff]
      %v1278 = vld [vmem:[#allocation8 + $0xfe8] sm:$0xff]
      %v1279 = vld [vmem:[#allocation8 + $0xff0] sm:$0xff]
      %v1280 = vld [vmem:[#allocation8 + $0xff8] sm:$0xff]
      %v1281 = vld [vmem:[#allocation8 + $0x1000] sm:$0xff]
      %v1282 = vld [vmem:[#allocation8 + $0x1008] sm:$0xff]
      %v1283 = vld [vmem:[#allocation8 + $0x1010] sm:$0xff]
      %v1284 = vld [vmem:[#allocation8 + $0x1018] sm:$0xff]
      %v1285 = vld [vmem:[#allocation8 + $0x1020] sm:$0xff]
      %v1286 = vld [vmem:[#allocation8 + $0x1028] sm:$0xff]
      %v1287 = vld [vmem:[#allocation8 + $0x1030] sm:$0xff]
      %v1288 = vld [vmem:[#allocation8 + $0x1038] sm:$0xff]
      %v1289 = vld [vmem:[#allocation8 + $0x1040] sm:$0xff]
      %v1290 = vld [vmem:[#allocation8 + $0x1048] sm:$0xff]
      %v1291 = vld [vmem:[#allocation8 + $0x1050] sm:$0xff]
      %v1292 = vld [vmem:[#allocation8 + $0x1058] sm:$0xff]
      %v1293 = vld [vmem:[#allocation8 + $0x1060] sm:$0xff]
      %v1294 = vld [vmem:[#allocation8 + $0x1068] sm:$0xff]
      %v1295 = vld [vmem:[#allocation8 + $0x1070] sm:$0xff]
      %v1296 = vld [vmem:[#allocation8 + $0x1078] sm:$0xff]
      %v1297 = vld [vmem:[#allocation8 + $0x1080] sm:$0xff]
      %v1298 = vld [vmem:[#allocation8 + $0x1088] sm:$0xff]
      %v1299 = vld [vmem:[#allocation8 + $0x1090] sm:$0xff]
      %v1300 = vld [vmem:[#allocation8 + $0x1098] sm:$0xff]
      %v1301 = vld [vmem:[#allocation8 + $0x10a0] sm:$0xff]
      %v1302 = vld [vmem:[#allocation8 + $0x10a8] sm:$0xff]
      %v1303 = vld [vmem:[#allocation8 + $0x10b0] sm:$0xff]
      %v1304 = vld [vmem:[#allocation8 + $0x10b8] sm:$0xff]
      %v1305 = vld [vmem:[#allocation8 + $0x10c0] sm:$0xff]
      %v1306 = vld [vmem:[#allocation8 + $0x10c8] sm:$0xff]
      %v1307 = vld [vmem:[#allocation8 + $0x10d0] sm:$0xff]
      %v1308 = vld [vmem:[#allocation8 + $0x10d8] sm:$0xff]
      %v1309 = vld [vmem:[#allocation8 + $0x10e0] sm:$0xff]
      %v1310 = vld [vmem:[#allocation8 + $0x10e8] sm:$0xff]
      %v1311 = vld [vmem:[#allocation8 + $0x10f0] sm:$0xff]
      %v1312 = vld [vmem:[#allocation8 + $0x10f8] sm:$0xff]
      %v1313 = vld [vmem:[#allocation8 + $0x1100] sm:$0xff]
      %v1314 = vld [vmem:[#allocation8 + $0x1108] sm:$0xff]
      %v1315 = vld [vmem:[#allocation8 + $0x1110] sm:$0xff]
      %v1316 = vld [vmem:[#allocation8 + $0x1118] sm:$0xff]
      %v1317 = vld [vmem:[#allocation8 + $0x1120] sm:$0xff]
      %v1318 = vld [vmem:[#allocation8 + $0x1128] sm:$0xff]
      %v1319 = vld [vmem:[#allocation8 + $0x1130] sm:$0xff]
      %v1320 = vld [vmem:[#allocation8 + $0x1138] sm:$0xff]
      %v1321 = vld [vmem:[#allocation8 + $0x1140] sm:$0xff]
      %v1322 = vld [vmem:[#allocation8 + $0x1148] sm:$0xff]
      %v1323 = vld [vmem:[#allocation8 + $0x1150] sm:$0xff]
      %v1324 = vld [vmem:[#allocation8 + $0x1158] sm:$0xff]
      %v1325 = vld [vmem:[#allocation8 + $0x1160] sm:$0xff]
      %v1326 = vld [vmem:[#allocation8 + $0x1168] sm:$0xff]
      %v1327 = vld [vmem:[#allocation8 + $0x1170] sm:$0xff]
      %v1328 = vld [vmem:[#allocation8 + $0x1178] sm:$0xff]
      %v1329 = vld [vmem:[#allocation8 + $0x1180] sm:$0xff]
      %v1330 = vld [vmem:[#allocation8 + $0x1188] sm:$0xff]
      %v1331 = vld [vmem:[#allocation8 + $0x1190] sm:$0xff]
      %v1332 = vld [vmem:[#allocation8 + $0x1198] sm:$0xff]
      %v1333 = vld [vmem:[#allocation8 + $0x11a0] sm:$0xff]
      %v1334 = vld [vmem:[#allocation8 + $0x11a8] sm:$0xff]
      %v1335 = vld [vmem:[#allocation8 + $0x11b0] sm:$0xff]
      %v1336 = vld [vmem:[#allocation8 + $0x11b8] sm:$0xff]
      %v1337 = vld [vmem:[#allocation8 + $0x11c0] sm:$0xff]
      %v1338 = vld [vmem:[#allocation8 + $0x11c8] sm:$0xff]
      %v1339 = vld [vmem:[#allocation8 + $0x11d0] sm:$0xff]
      %v1340 = vld [vmem:[#allocation8 + $0x11d8] sm:$0xff]
      %v1341 = vld [vmem:[#allocation8 + $0x11e0] sm:$0xff]
      %v1342 = vld [vmem:[#allocation8 + $0x11e8] sm:$0xff]
      %v1343 = vld [vmem:[#allocation8 + $0x11f0] sm:$0xff]
      %v1344 = vld [vmem:[#allocation8 + $0x11f8] sm:$0xff]
      %v1345 = vld [vmem:[#allocation9] sm:$0x3f]
      %v1347 = vperm.slane %v1345, 0
      %v1348 = vperm.slane %v1345, 1
      %v1349 = vperm.slane %v1345, 2
      %v1350 = vperm.slane %v1345, 3
      %v1351 = vperm.slane %v1345, 4
      %v1352 = vperm.slane %v1345, 5
      %1362 = vst [vmem:[#allocation1] ss:$2 sm:$0xff] %v766
      %s1363 = scalar_lea.vmem [#allocation1], 16
      %1364 = vst [vmem:[%s1363] ss:$2 sm:$0xff] %v767
      %s1365 = scalar_lea.vmem [#allocation1], 32
      %1366 = vst [vmem:[%s1365] ss:$2 sm:$0xff] %v768
      %v1367 = vld.sshfl [vmem:[#allocation1] sm:$0xff pattern:$0x75316420]
      %v1368 = vld.sshfl [vmem:[#allocation1 + $0x8] sm:$0xff pattern:$0x75316420]
      %v1369 = vld.sshfl [vmem:[#allocation1 + $0x10] sm:$0xff pattern:$0x75316420]
      %v1370 = vld.sshfl [vmem:[#allocation1 + $0x18] sm:$0xff pattern:$0x75316420]
      %v1371 = vld.sshfl [vmem:[#allocation1 + $0x20] sm:$0xff pattern:$0x75316420]
      %v1372 = vld.sshfl [vmem:[#allocation1 + $0x28] sm:$0xff pattern:$0x75316420]
      %1379 = vmatpush.msra.mxu0 %v859
      %1380 = vmatpush.msra.mxu0 %v853
      %1381 = vmatpush.msra.mxu0 %v847
      %1382 = vmatpush.msra.mxu0 %v841
      %1383 = vmatpush.msra.mxu0 %v835
      %1384 = vmatpush.msra.mxu0 %v829
      %1385 = vmatpush.msra.mxu0 %v823
      %1386 = vmatpush.msra.mxu0 %v817
      %1387 = vmatpush.msra.mxu0 %v811
      %1388 = vmatpush.msra.mxu0 %v805
      %1389 = vmatpush.msra.mxu0 %v799
      %1390 = vmatpush.msra.mxu0 %v793
      %1391 = vmatpush.msra.mxu0 %v787
      %1392 = vmatpush.msra.mxu0 %v781
      %1393 = vmatpush.msra.mxu0 %v775
      %1394 = vmatpush.msra.mxu0 %v769
      %1395 = vmatmul.f32.gmra.mxu0 %v1367
      %v1396 = vpop.f32.mrf.mxu0
      %v1397 = vadd.f32 %v1347, %v1396
      %1398 = vdwg.mxu0
      %1399 = vmatpush.msra.mxu0 %v955
      %1400 = vmatpush.msra.mxu0 %v949
      %1401 = vmatpush.msra.mxu0 %v943
      %1402 = vmatpush.msra.mxu0 %v937
      %1403 = vmatpush.msra.mxu0 %v931
      %1404 = vmatpush.msra.mxu0 %v925
      %1405 = vmatpush.msra.mxu0 %v919
      %1406 = vmatpush.msra.mxu0 %v913
      %1407 = vmatpush.msra.mxu0 %v907
      %1408 = vmatpush.msra.mxu0 %v901
      %1409 = vmatpush.msra.mxu0 %v895
      %1410 = vmatpush.msra.mxu0 %v889
      %1411 = vmatpush.msra.mxu0 %v883
      %1412 = vmatpush.msra.mxu0 %v877
      %1413 = vmatpush.msra.mxu0 %v871
      %1414 = vmatpush.msra.mxu0 %v865
      %1415 = vmatmul.f32.gmra.mxu0 %v1368
      %v1416 = vpop.f32.mrf.mxu0
      %v1417 = vadd.f32 %v1397, %v1416
      %1418 = vdwg.mxu0
      %1419 = vmatpush.msra.mxu0 %v1051
      %1420 = vmatpush.msra.mxu0 %v1045
      %1421 = vmatpush.msra.mxu0 %v1039
      %1422 = vmatpush.msra.mxu0 %v1033
      %1423 = vmatpush.msra.mxu0 %v1027
      %1424 = vmatpush.msra.mxu0 %v1021
      %1425 = vmatpush.msra.mxu0 %v1015
      %1426 = vmatpush.msra.mxu0 %v1009
      %1427 = vmatpush.msra.mxu0 %v1003
      %1428 = vmatpush.msra.mxu0 %v997
      %1429 = vmatpush.msra.mxu0 %v991
      %1430 = vmatpush.msra.mxu0 %v985
      %1431 = vmatpush.msra.mxu0 %v979
      %1432 = vmatpush.msra.mxu0 %v973
      %1433 = vmatpush.msra.mxu0 %v967
      %1434 = vmatpush.msra.mxu0 %v961
      %1435 = vmatmul.f32.gmra.mxu0 %v1369
      %v1436 = vpop.f32.mrf.mxu0
      %v1437 = vadd.f32 %v1417, %v1436
      %1438 = vdwg.mxu0
      %1439 = vmatpush.msra.mxu0 %v1147
      %1440 = vmatpush.msra.mxu0 %v1141
      %1441 = vmatpush.msra.mxu0 %v1135
      %1442 = vmatpush.msra.mxu0 %v1129
      %1443 = vmatpush.msra.mxu0 %v1123
      %1444 = vmatpush.msra.mxu0 %v1117
      %1445 = vmatpush.msra.mxu0 %v1111
      %1446 = vmatpush.msra.mxu0 %v1105
      %1447 = vmatpush.msra.mxu0 %v1099
      %1448 = vmatpush.msra.mxu0 %v1093
      %1449 = vmatpush.msra.mxu0 %v1087
      %1450 = vmatpush.msra.mxu0 %v1081
      %1451 = vmatpush.msra.mxu0 %v1075
      %1452 = vmatpush.msra.mxu0 %v1069
      %1453 = vmatpush.msra.mxu0 %v1063
      %1454 = vmatpush.msra.mxu0 %v1057
      %1455 = vmatmul.f32.gmra.mxu0 %v1370
      %v1456 = vpop.f32.mrf.mxu0
      %v1457 = vadd.f32 %v1437, %v1456
      %1458 = vdwg.mxu0
      %1459 = vmatpush.msra.mxu0 %v1243
      %1460 = vmatpush.msra.mxu0 %v1237
      %1461 = vmatpush.msra.mxu0 %v1231
      %1462 = vmatpush.msra.mxu0 %v1225
      %1463 = vmatpush.msra.mxu0 %v1219
      %1464 = vmatpush.msra.mxu0 %v1213
      %1465 = vmatpush.msra.mxu0 %v1207
      %1466 = vmatpush.msra.mxu0 %v1201
      %1467 = vmatpush.msra.mxu0 %v1195
      %1468 = vmatpush.msra.mxu0 %v1189
      %1469 = vmatpush.msra.mxu0 %v1183
      %1470 = vmatpush.msra.mxu0 %v1177
      %1471 = vmatpush.msra.mxu0 %v1171
      %1472 = vmatpush.msra.mxu0 %v1165
      %1473 = vmatpush.msra.mxu0 %v1159
      %1474 = vmatpush.msra.mxu0 %v1153
      %1475 = vmatmul.f32.gmra.mxu0 %v1371
      %v1476 = vpop.f32.mrf.mxu0
      %v1477 = vadd.f32 %v1457, %v1476
      %1478 = vdwg.mxu0
      %1479 = vmatpush.msra.mxu0 %v1339
      %1480 = vmatpush.msra.mxu0 %v1333
      %1481 = vmatpush.msra.mxu0 %v1327
      %1482 = vmatpush.msra.mxu0 %v1321
      %1483 = vmatpush.msra.mxu0 %v1315
      %1484 = vmatpush.msra.mxu0 %v1309
      %1485 = vmatpush.msra.mxu0 %v1303
      %1486 = vmatpush.msra.mxu0 %v1297
      %1487 = vmatpush.msra.mxu0 %v1291
      %1488 = vmatpush.msra.mxu0 %v1285
      %1489 = vmatpush.msra.mxu0 %v1279
      %1490 = vmatpush.msra.mxu0 %v1273
      %1491 = vmatpush.msra.mxu0 %v1267
      %1492 = vmatpush.msra.mxu0 %v1261
      %1493 = vmatpush.msra.mxu0 %v1255
      %1494 = vmatpush.msra.mxu0 %v1249
      %1495 = vmatmul.f32.gmra.mxu0 %v1372
      %v1496 = vpop.f32.mrf.mxu0
      %v1497 = vadd.f32 %v1477, %v1496
      %1498 = vdwg.mxu0
      %1499 = vmatpush.msra.mxu0 %v860
      %1500 = vmatpush.msra.mxu0 %v854
      %1501 = vmatpush.msra.mxu0 %v848
      %1502 = vmatpush.msra.mxu0 %v842
      %1503 = vmatpush.msra.mxu0 %v836
      %1504 = vmatpush.msra.mxu0 %v830
      %1505 = vmatpush.msra.mxu0 %v824
      %1506 = vmatpush.msra.mxu0 %v818
      %1507 = vmatpush.msra.mxu0 %v812
      %1508 = vmatpush.msra.mxu0 %v806
      %1509 = vmatpush.msra.mxu0 %v800
      %1510 = vmatpush.msra.mxu0 %v794
      %1511 = vmatpush.msra.mxu0 %v788
      %1512 = vmatpush.msra.mxu0 %v782
      %1513 = vmatpush.msra.mxu0 %v776
      %1514 = vmatpush.msra.mxu0 %v770
      %1515 = vmatmul.f32.gmra.mxu0 %v1367
      %v1516 = vpop.f32.mrf.mxu0
      %v1517 = vadd.f32 %v1348, %v1516
      %1518 = vdwg.mxu0
      %1519 = vmatpush.msra.mxu0 %v956
      %1520 = vmatpush.msra.mxu0 %v950
      %1521 = vmatpush.msra.mxu0 %v944
      %1522 = vmatpush.msra.mxu0 %v938
      %1523 = vmatpush.msra.mxu0 %v932
      %1524 = vmatpush.msra.mxu0 %v926
      %1525 = vmatpush.msra.mxu0 %v920
      %1526 = vmatpush.msra.mxu0 %v914
      %1527 = vmatpush.msra.mxu0 %v908
      %1528 = vmatpush.msra.mxu0 %v902
      %1529 = vmatpush.msra.mxu0 %v896
      %1530 = vmatpush.msra.mxu0 %v890
      %1531 = vmatpush.msra.mxu0 %v884
      %1532 = vmatpush.msra.mxu0 %v878
      %1533 = vmatpush.msra.mxu0 %v872
      %1534 = vmatpush.msra.mxu0 %v866
      %1535 = vmatmul.f32.gmra.mxu0 %v1368
      %v1536 = vpop.f32.mrf.mxu0
      %v1537 = vadd.f32 %v1517, %v1536
      %1538 = vdwg.mxu0
      %1539 = vmatpush.msra.mxu0 %v1052
      %1540 = vmatpush.msra.mxu0 %v1046
      %1541 = vmatpush.msra.mxu0 %v1040
      %1542 = vmatpush.msra.mxu0 %v1034
      %1543 = vmatpush.msra.mxu0 %v1028
      %1544 = vmatpush.msra.mxu0 %v1022
      %1545 = vmatpush.msra.mxu0 %v1016
      %1546 = vmatpush.msra.mxu0 %v1010
      %1547 = vmatpush.msra.mxu0 %v1004
      %1548 = vmatpush.msra.mxu0 %v998
      %1549 = vmatpush.msra.mxu0 %v992
      %1550 = vmatpush.msra.mxu0 %v986
      %1551 = vmatpush.msra.mxu0 %v980
      %1552 = vmatpush.msra.mxu0 %v974
      %1553 = vmatpush.msra.mxu0 %v968
      %1554 = vmatpush.msra.mxu0 %v962
      %1555 = vmatmul.f32.gmra.mxu0 %v1369
      %v1556 = vpop.f32.mrf.mxu0
      %v1557 = vadd.f32 %v1537, %v1556
      %1558 = vdwg.mxu0
      %1559 = vmatpush.msra.mxu0 %v1148
      %1560 = vmatpush.msra.mxu0 %v1142
      %1561 = vmatpush.msra.mxu0 %v1136
      %1562 = vmatpush.msra.mxu0 %v1130
      %1563 = vmatpush.msra.mxu0 %v1124
      %1564 = vmatpush.msra.mxu0 %v1118
      %1565 = vmatpush.msra.mxu0 %v1112
      %1566 = vmatpush.msra.mxu0 %v1106
      %1567 = vmatpush.msra.mxu0 %v1100
      %1568 = vmatpush.msra.mxu0 %v1094
      %1569 = vmatpush.msra.mxu0 %v1088
      %1570 = vmatpush.msra.mxu0 %v1082
      %1571 = vmatpush.msra.mxu0 %v1076
      %1572 = vmatpush.msra.mxu0 %v1070
      %1573 = vmatpush.msra.mxu0 %v1064
      %1574 = vmatpush.msra.mxu0 %v1058
      %1575 = vmatmul.f32.gmra.mxu0 %v1370
      %v1576 = vpop.f32.mrf.mxu0
      %v1577 = vadd.f32 %v1557, %v1576
      %1578 = vdwg.mxu0
      %1579 = vmatpush.msra.mxu0 %v1244
      %1580 = vmatpush.msra.mxu0 %v1238
      %1581 = vmatpush.msra.mxu0 %v1232
      %1582 = vmatpush.msra.mxu0 %v1226
      %1583 = vmatpush.msra.mxu0 %v1220
      %1584 = vmatpush.msra.mxu0 %v1214
      %1585 = vmatpush.msra.mxu0 %v1208
      %1586 = vmatpush.msra.mxu0 %v1202
      %1587 = vmatpush.msra.mxu0 %v1196
      %1588 = vmatpush.msra.mxu0 %v1190
      %1589 = vmatpush.msra.mxu0 %v1184
      %1590 = vmatpush.msra.mxu0 %v1178
      %1591 = vmatpush.msra.mxu0 %v1172
      %1592 = vmatpush.msra.mxu0 %v1166
      %1593 = vmatpush.msra.mxu0 %v1160
      %1594 = vmatpush.msra.mxu0 %v1154
      %1595 = vmatmul.f32.gmra.mxu0 %v1371
      %v1596 = vpop.f32.mrf.mxu0
      %v1597 = vadd.f32 %v1577, %v1596
      %1598 = vdwg.mxu0
      %1599 = vmatpush.msra.mxu0 %v1340
      %1600 = vmatpush.msra.mxu0 %v1334
      %1601 = vmatpush.msra.mxu0 %v1328
      %1602 = vmatpush.msra.mxu0 %v1322
      %1603 = vmatpush.msra.mxu0 %v1316
      %1604 = vmatpush.msra.mxu0 %v1310
      %1605 = vmatpush.msra.mxu0 %v1304
      %1606 = vmatpush.msra.mxu0 %v1298
      %1607 = vmatpush.msra.mxu0 %v1292
      %1608 = vmatpush.msra.mxu0 %v1286
      %1609 = vmatpush.msra.mxu0 %v1280
      %1610 = vmatpush.msra.mxu0 %v1274
      %1611 = vmatpush.msra.mxu0 %v1268
      %1612 = vmatpush.msra.mxu0 %v1262
      %1613 = vmatpush.msra.mxu0 %v1256
      %1614 = vmatpush.msra.mxu0 %v1250
      %1615 = vmatmul.f32.gmra.mxu0 %v1372
      %v1616 = vpop.f32.mrf.mxu0
      %v1617 = vadd.f32 %v1597, %v1616
      %1618 = vdwg.mxu0
      %1619 = vmatpush.msra.mxu0 %v861
      %1620 = vmatpush.msra.mxu0 %v855
      %1621 = vmatpush.msra.mxu0 %v849
      %1622 = vmatpush.msra.mxu0 %v843
      %1623 = vmatpush.msra.mxu0 %v837
      %1624 = vmatpush.msra.mxu0 %v831
      %1625 = vmatpush.msra.mxu0 %v825
      %1626 = vmatpush.msra.mxu0 %v819
      %1627 = vmatpush.msra.mxu0 %v813
      %1628 = vmatpush.msra.mxu0 %v807
      %1629 = vmatpush.msra.mxu0 %v801
      %1630 = vmatpush.msra.mxu0 %v795
      %1631 = vmatpush.msra.mxu0 %v789
      %1632 = vmatpush.msra.mxu0 %v783
      %1633 = vmatpush.msra.mxu0 %v777
      %1634 = vmatpush.msra.mxu0 %v771
      %1635 = vmatmul.f32.gmra.mxu0 %v1367
      %v1636 = vpop.f32.mrf.mxu0
      %v1637 = vadd.f32 %v1349, %v1636
      %1638 = vdwg.mxu0
      %1639 = vmatpush.msra.mxu0 %v957
      %1640 = vmatpush.msra.mxu0 %v951
      %1641 = vmatpush.msra.mxu0 %v945
      %1642 = vmatpush.msra.mxu0 %v939
      %1643 = vmatpush.msra.mxu0 %v933
      %1644 = vmatpush.msra.mxu0 %v927
      %1645 = vmatpush.msra.mxu0 %v921
      %1646 = vmatpush.msra.mxu0 %v915
      %1647 = vmatpush.msra.mxu0 %v909
      %1648 = vmatpush.msra.mxu0 %v903
      %1649 = vmatpush.msra.mxu0 %v897
      %1650 = vmatpush.msra.mxu0 %v891
      %1651 = vmatpush.msra.mxu0 %v885
      %1652 = vmatpush.msra.mxu0 %v879
      %1653 = vmatpush.msra.mxu0 %v873
      %1654 = vmatpush.msra.mxu0 %v867
      %1655 = vmatmul.f32.gmra.mxu0 %v1368
      %v1656 = vpop.f32.mrf.mxu0
      %v1657 = vadd.f32 %v1637, %v1656
      %1658 = vdwg.mxu0
      %1659 = vmatpush.msra.mxu0 %v1053
      %1660 = vmatpush.msra.mxu0 %v1047
      %1661 = vmatpush.msra.mxu0 %v1041
      %1662 = vmatpush.msra.mxu0 %v1035
      %1663 = vmatpush.msra.mxu0 %v1029
      %1664 = vmatpush.msra.mxu0 %v1023
      %1665 = vmatpush.msra.mxu0 %v1017
      %1666 = vmatpush.msra.mxu0 %v1011
      %1667 = vmatpush.msra.mxu0 %v1005
      %1668 = vmatpush.msra.mxu0 %v999
      %1669 = vmatpush.msra.mxu0 %v993
      %1670 = vmatpush.msra.mxu0 %v987
      %1671 = vmatpush.msra.mxu0 %v981
      %1672 = vmatpush.msra.mxu0 %v975
      %1673 = vmatpush.msra.mxu0 %v969
      %1674 = vmatpush.msra.mxu0 %v963
      %1675 = vmatmul.f32.gmra.mxu0 %v1369
      %v1676 = vpop.f32.mrf.mxu0
      %v1677 = vadd.f32 %v1657, %v1676
      %1678 = vdwg.mxu0
      %1679 = vmatpush.msra.mxu0 %v1149
      %1680 = vmatpush.msra.mxu0 %v1143
      %1681 = vmatpush.msra.mxu0 %v1137
      %1682 = vmatpush.msra.mxu0 %v1131
      %1683 = vmatpush.msra.mxu0 %v1125
      %1684 = vmatpush.msra.mxu0 %v1119
      %1685 = vmatpush.msra.mxu0 %v1113
      %1686 = vmatpush.msra.mxu0 %v1107
      %1687 = vmatpush.msra.mxu0 %v1101
      %1688 = vmatpush.msra.mxu0 %v1095
      %1689 = vmatpush.msra.mxu0 %v1089
      %1690 = vmatpush.msra.mxu0 %v1083
      %1691 = vmatpush.msra.mxu0 %v1077
      %1692 = vmatpush.msra.mxu0 %v1071
      %1693 = vmatpush.msra.mxu0 %v1065
      %1694 = vmatpush.msra.mxu0 %v1059
      %1695 = vmatmul.f32.gmra.mxu0 %v1370
      %v1696 = vpop.f32.mrf.mxu0
      %v1697 = vadd.f32 %v1677, %v1696
      %1698 = vdwg.mxu0
      %1699 = vmatpush.msra.mxu0 %v1245
      %1700 = vmatpush.msra.mxu0 %v1239
      %1701 = vmatpush.msra.mxu0 %v1233
      %1702 = vmatpush.msra.mxu0 %v1227
      %1703 = vmatpush.msra.mxu0 %v1221
      %1704 = vmatpush.msra.mxu0 %v1215
      %1705 = vmatpush.msra.mxu0 %v1209
      %1706 = vmatpush.msra.mxu0 %v1203
      %1707 = vmatpush.msra.mxu0 %v1197
      %1708 = vmatpush.msra.mxu0 %v1191
      %1709 = vmatpush.msra.mxu0 %v1185
      %1710 = vmatpush.msra.mxu0 %v1179
      %1711 = vmatpush.msra.mxu0 %v1173
      %1712 = vmatpush.msra.mxu0 %v1167
      %1713 = vmatpush.msra.mxu0 %v1161
      %1714 = vmatpush.msra.mxu0 %v1155
      %1715 = vmatmul.f32.gmra.mxu0 %v1371
      %v1716 = vpop.f32.mrf.mxu0
      %v1717 = vadd.f32 %v1697, %v1716
      %1718 = vdwg.mxu0
      %1719 = vmatpush.msra.mxu0 %v1341
      %1720 = vmatpush.msra.mxu0 %v1335
      %1721 = vmatpush.msra.mxu0 %v1329
      %1722 = vmatpush.msra.mxu0 %v1323
      %1723 = vmatpush.msra.mxu0 %v1317
      %1724 = vmatpush.msra.mxu0 %v1311
      %1725 = vmatpush.msra.mxu0 %v1305
      %1726 = vmatpush.msra.mxu0 %v1299
      %1727 = vmatpush.msra.mxu0 %v1293
      %1728 = vmatpush.msra.mxu0 %v1287
      %1729 = vmatpush.msra.mxu0 %v1281
      %1730 = vmatpush.msra.mxu0 %v1275
      %1731 = vmatpush.msra.mxu0 %v1269
      %1732 = vmatpush.msra.mxu0 %v1263
      %1733 = vmatpush.msra.mxu0 %v1257
      %1734 = vmatpush.msra.mxu0 %v1251
      %1735 = vmatmul.f32.gmra.mxu0 %v1372
      %v1736 = vpop.f32.mrf.mxu0
      %v1737 = vadd.f32 %v1717, %v1736
      %1738 = vdwg.mxu0
      %1739 = vmatpush.msra.mxu0 %v862
      %1740 = vmatpush.msra.mxu0 %v856
      %1741 = vmatpush.msra.mxu0 %v850
      %1742 = vmatpush.msra.mxu0 %v844
      %1743 = vmatpush.msra.mxu0 %v838
      %1744 = vmatpush.msra.mxu0 %v832
      %1745 = vmatpush.msra.mxu0 %v826
      %1746 = vmatpush.msra.mxu0 %v820
      %1747 = vmatpush.msra.mxu0 %v814
      %1748 = vmatpush.msra.mxu0 %v808
      %1749 = vmatpush.msra.mxu0 %v802
      %1750 = vmatpush.msra.mxu0 %v796
      %1751 = vmatpush.msra.mxu0 %v790
      %1752 = vmatpush.msra.mxu0 %v784
      %1753 = vmatpush.msra.mxu0 %v778
      %1754 = vmatpush.msra.mxu0 %v772
      %1755 = vmatmul.f32.gmra.mxu0 %v1367
      %v1756 = vpop.f32.mrf.mxu0
      %v1757 = vadd.f32 %v1350, %v1756
      %1758 = vdwg.mxu0
      %1759 = vmatpush.msra.mxu0 %v958
      %1760 = vmatpush.msra.mxu0 %v952
      %1761 = vmatpush.msra.mxu0 %v946
      %1762 = vmatpush.msra.mxu0 %v940
      %1763 = vmatpush.msra.mxu0 %v934
      %1764 = vmatpush.msra.mxu0 %v928
      %1765 = vmatpush.msra.mxu0 %v922
      %1766 = vmatpush.msra.mxu0 %v916
      %1767 = vmatpush.msra.mxu0 %v910
      %1768 = vmatpush.msra.mxu0 %v904
      %1769 = vmatpush.msra.mxu0 %v898
      %1770 = vmatpush.msra.mxu0 %v892
      %1771 = vmatpush.msra.mxu0 %v886
      %1772 = vmatpush.msra.mxu0 %v880
      %1773 = vmatpush.msra.mxu0 %v874
      %1774 = vmatpush.msra.mxu0 %v868
      %1775 = vmatmul.f32.gmra.mxu0 %v1368
      %v1776 = vpop.f32.mrf.mxu0
      %v1777 = vadd.f32 %v1757, %v1776
      %1778 = vdwg.mxu0
      %1779 = vmatpush.msra.mxu0 %v1054
      %1780 = vmatpush.msra.mxu0 %v1048
      %1781 = vmatpush.msra.mxu0 %v1042
      %1782 = vmatpush.msra.mxu0 %v1036
      %1783 = vmatpush.msra.mxu0 %v1030
      %1784 = vmatpush.msra.mxu0 %v1024
      %1785 = vmatpush.msra.mxu0 %v1018
      %1786 = vmatpush.msra.mxu0 %v1012
      %1787 = vmatpush.msra.mxu0 %v1006
      %1788 = vmatpush.msra.mxu0 %v1000
      %1789 = vmatpush.msra.mxu0 %v994
      %1790 = vmatpush.msra.mxu0 %v988
      %1791 = vmatpush.msra.mxu0 %v982
      %1792 = vmatpush.msra.mxu0 %v976
      %1793 = vmatpush.msra.mxu0 %v970
      %1794 = vmatpush.msra.mxu0 %v964
      %1795 = vmatmul.f32.gmra.mxu0 %v1369
      %v1796 = vpop.f32.mrf.mxu0
      %v1797 = vadd.f32 %v1777, %v1796
      %1798 = vdwg.mxu0
      %1799 = vmatpush.msra.mxu0 %v1150
      %1800 = vmatpush.msra.mxu0 %v1144
      %1801 = vmatpush.msra.mxu0 %v1138
      %1802 = vmatpush.msra.mxu0 %v1132
      %1803 = vmatpush.msra.mxu0 %v1126
      %1804 = vmatpush.msra.mxu0 %v1120
      %1805 = vmatpush.msra.mxu0 %v1114
      %1806 = vmatpush.msra.mxu0 %v1108
      %1807 = vmatpush.msra.mxu0 %v1102
      %1808 = vmatpush.msra.mxu0 %v1096
      %1809 = vmatpush.msra.mxu0 %v1090
      %1810 = vmatpush.msra.mxu0 %v1084
      %1811 = vmatpush.msra.mxu0 %v1078
      %1812 = vmatpush.msra.mxu0 %v1072
      %1813 = vmatpush.msra.mxu0 %v1066
      %1814 = vmatpush.msra.mxu0 %v1060
      %1815 = vmatmul.f32.gmra.mxu0 %v1370
      %v1816 = vpop.f32.mrf.mxu0
      %v1817 = vadd.f32 %v1797, %v1816
      %1818 = vdwg.mxu0
      %1819 = vmatpush.msra.mxu0 %v1246
      %1820 = vmatpush.msra.mxu0 %v1240
      %1821 = vmatpush.msra.mxu0 %v1234
      %1822 = vmatpush.msra.mxu0 %v1228
      %1823 = vmatpush.msra.mxu0 %v1222
      %1824 = vmatpush.msra.mxu0 %v1216
      %1825 = vmatpush.msra.mxu0 %v1210
      %1826 = vmatpush.msra.mxu0 %v1204
      %1827 = vmatpush.msra.mxu0 %v1198
      %1828 = vmatpush.msra.mxu0 %v1192
      %1829 = vmatpush.msra.mxu0 %v1186
      %1830 = vmatpush.msra.mxu0 %v1180
      %1831 = vmatpush.msra.mxu0 %v1174
      %1832 = vmatpush.msra.mxu0 %v1168
      %1833 = vmatpush.msra.mxu0 %v1162
      %1834 = vmatpush.msra.mxu0 %v1156
      %1835 = vmatmul.f32.gmra.mxu0 %v1371
      %v1836 = vpop.f32.mrf.mxu0
      %v1837 = vadd.f32 %v1817, %v1836
      %1838 = vdwg.mxu0
      %1839 = vmatpush.msra.mxu0 %v1342
      %1840 = vmatpush.msra.mxu0 %v1336
      %1841 = vmatpush.msra.mxu0 %v1330
      %1842 = vmatpush.msra.mxu0 %v1324
      %1843 = vmatpush.msra.mxu0 %v1318
      %1844 = vmatpush.msra.mxu0 %v1312
      %1845 = vmatpush.msra.mxu0 %v1306
      %1846 = vmatpush.msra.mxu0 %v1300
      %1847 = vmatpush.msra.mxu0 %v1294
      %1848 = vmatpush.msra.mxu0 %v1288
      %1849 = vmatpush.msra.mxu0 %v1282
      %1850 = vmatpush.msra.mxu0 %v1276
      %1851 = vmatpush.msra.mxu0 %v1270
      %1852 = vmatpush.msra.mxu0 %v1264
      %1853 = vmatpush.msra.mxu0 %v1258
      %1854 = vmatpush.msra.mxu0 %v1252
      %1855 = vmatmul.f32.gmra.mxu0 %v1372
      %v1856 = vpop.f32.mrf.mxu0
      %v1857 = vadd.f32 %v1837, %v1856
      %1858 = vdwg.mxu0
      %1859 = vmatpush.msra.mxu0 %v863
      %1860 = vmatpush.msra.mxu0 %v857
      %1861 = vmatpush.msra.mxu0 %v851
      %1862 = vmatpush.msra.mxu0 %v845
      %1863 = vmatpush.msra.mxu0 %v839
      %1864 = vmatpush.msra.mxu0 %v833
      %1865 = vmatpush.msra.mxu0 %v827
      %1866 = vmatpush.msra.mxu0 %v821
      %1867 = vmatpush.msra.mxu0 %v815
      %1868 = vmatpush.msra.mxu0 %v809
      %1869 = vmatpush.msra.mxu0 %v803
      %1870 = vmatpush.msra.mxu0 %v797
      %1871 = vmatpush.msra.mxu0 %v791
      %1872 = vmatpush.msra.mxu0 %v785
      %1873 = vmatpush.msra.mxu0 %v779
      %1874 = vmatpush.msra.mxu0 %v773
      %1875 = vmatmul.f32.gmra.mxu0 %v1367
      %v1876 = vpop.f32.mrf.mxu0
      %v1877 = vadd.f32 %v1351, %v1876
      %1878 = vdwg.mxu0
      %1879 = vmatpush.msra.mxu0 %v959
      %1880 = vmatpush.msra.mxu0 %v953
      %1881 = vmatpush.msra.mxu0 %v947
      %1882 = vmatpush.msra.mxu0 %v941
      %1883 = vmatpush.msra.mxu0 %v935
      %1884 = vmatpush.msra.mxu0 %v929
      %1885 = vmatpush.msra.mxu0 %v923
      %1886 = vmatpush.msra.mxu0 %v917
      %1887 = vmatpush.msra.mxu0 %v911
      %1888 = vmatpush.msra.mxu0 %v905
      %1889 = vmatpush.msra.mxu0 %v899
      %1890 = vmatpush.msra.mxu0 %v893
      %1891 = vmatpush.msra.mxu0 %v887
      %1892 = vmatpush.msra.mxu0 %v881
      %1893 = vmatpush.msra.mxu0 %v875
      %1894 = vmatpush.msra.mxu0 %v869
      %1895 = vmatmul.f32.gmra.mxu0 %v1368
      %v1896 = vpop.f32.mrf.mxu0
      %v1897 = vadd.f32 %v1877, %v1896
      %1898 = vdwg.mxu0
      %1899 = vmatpush.msra.mxu0 %v1055
      %1900 = vmatpush.msra.mxu0 %v1049
      %1901 = vmatpush.msra.mxu0 %v1043
      %1902 = vmatpush.msra.mxu0 %v1037
      %1903 = vmatpush.msra.mxu0 %v1031
      %1904 = vmatpush.msra.mxu0 %v1025
      %1905 = vmatpush.msra.mxu0 %v1019
      %1906 = vmatpush.msra.mxu0 %v1013
      %1907 = vmatpush.msra.mxu0 %v1007
      %1908 = vmatpush.msra.mxu0 %v1001
      %1909 = vmatpush.msra.mxu0 %v995
      %1910 = vmatpush.msra.mxu0 %v989
      %1911 = vmatpush.msra.mxu0 %v983
      %1912 = vmatpush.msra.mxu0 %v977
      %1913 = vmatpush.msra.mxu0 %v971
      %1914 = vmatpush.msra.mxu0 %v965
      %1915 = vmatmul.f32.gmra.mxu0 %v1369
      %v1916 = vpop.f32.mrf.mxu0
      %v1917 = vadd.f32 %v1897, %v1916
      %1918 = vdwg.mxu0
      %1919 = vmatpush.msra.mxu0 %v1151
      %1920 = vmatpush.msra.mxu0 %v1145
      %1921 = vmatpush.msra.mxu0 %v1139
      %1922 = vmatpush.msra.mxu0 %v1133
      %1923 = vmatpush.msra.mxu0 %v1127
      %1924 = vmatpush.msra.mxu0 %v1121
      %1925 = vmatpush.msra.mxu0 %v1115
      %1926 = vmatpush.msra.mxu0 %v1109
      %1927 = vmatpush.msra.mxu0 %v1103
      %1928 = vmatpush.msra.mxu0 %v1097
      %1929 = vmatpush.msra.mxu0 %v1091
      %1930 = vmatpush.msra.mxu0 %v1085
      %1931 = vmatpush.msra.mxu0 %v1079
      %1932 = vmatpush.msra.mxu0 %v1073
      %1933 = vmatpush.msra.mxu0 %v1067
      %1934 = vmatpush.msra.mxu0 %v1061
      %1935 = vmatmul.f32.gmra.mxu0 %v1370
      %v1936 = vpop.f32.mrf.mxu0
      %v1937 = vadd.f32 %v1917, %v1936
      %1938 = vdwg.mxu0
      %1939 = vmatpush.msra.mxu0 %v1247
      %1940 = vmatpush.msra.mxu0 %v1241
      %1941 = vmatpush.msra.mxu0 %v1235
      %1942 = vmatpush.msra.mxu0 %v1229
      %1943 = vmatpush.msra.mxu0 %v1223
      %1944 = vmatpush.msra.mxu0 %v1217
      %1945 = vmatpush.msra.mxu0 %v1211
      %1946 = vmatpush.msra.mxu0 %v1205
      %1947 = vmatpush.msra.mxu0 %v1199
      %1948 = vmatpush.msra.mxu0 %v1193
      %1949 = vmatpush.msra.mxu0 %v1187
      %1950 = vmatpush.msra.mxu0 %v1181
      %1951 = vmatpush.msra.mxu0 %v1175
      %1952 = vmatpush.msra.mxu0 %v1169
      %1953 = vmatpush.msra.mxu0 %v1163
      %1954 = vmatpush.msra.mxu0 %v1157
      %1955 = vmatmul.f32.gmra.mxu0 %v1371
      %v1956 = vpop.f32.mrf.mxu0
      %v1957 = vadd.f32 %v1937, %v1956
      %1958 = vdwg.mxu0
      %1959 = vmatpush.msra.mxu0 %v1343
      %1960 = vmatpush.msra.mxu0 %v1337
      %1961 = vmatpush.msra.mxu0 %v1331
      %1962 = vmatpush.msra.mxu0 %v1325
      %1963 = vmatpush.msra.mxu0 %v1319
      %1964 = vmatpush.msra.mxu0 %v1313
      %1965 = vmatpush.msra.mxu0 %v1307
      %1966 = vmatpush.msra.mxu0 %v1301
      %1967 = vmatpush.msra.mxu0 %v1295
      %1968 = vmatpush.msra.mxu0 %v1289
      %1969 = vmatpush.msra.mxu0 %v1283
      %1970 = vmatpush.msra.mxu0 %v1277
      %1971 = vmatpush.msra.mxu0 %v1271
      %1972 = vmatpush.msra.mxu0 %v1265
      %1973 = vmatpush.msra.mxu0 %v1259
      %1974 = vmatpush.msra.mxu0 %v1253
      %1975 = vmatmul.f32.gmra.mxu0 %v1372
      %v1976 = vpop.f32.mrf.mxu0
      %v1977 = vadd.f32 %v1957, %v1976
      %1978 = vdwg.mxu0
      %1979 = vmatpush.msra.mxu0 %v864
      %1980 = vmatpush.msra.mxu0 %v858
      %1981 = vmatpush.msra.mxu0 %v852
      %1982 = vmatpush.msra.mxu0 %v846
      %1983 = vmatpush.msra.mxu0 %v840
      %1984 = vmatpush.msra.mxu0 %v834
      %1985 = vmatpush.msra.mxu0 %v828
      %1986 = vmatpush.msra.mxu0 %v822
      %1987 = vmatpush.msra.mxu0 %v816
      %1988 = vmatpush.msra.mxu0 %v810
      %1989 = vmatpush.msra.mxu0 %v804
      %1990 = vmatpush.msra.mxu0 %v798
      %1991 = vmatpush.msra.mxu0 %v792
      %1992 = vmatpush.msra.mxu0 %v786
      %1993 = vmatpush.msra.mxu0 %v780
      %1994 = vmatpush.msra.mxu0 %v774
      %1995 = vmatmul.f32.gmra.mxu0 %v1367
      %v1996 = vpop.f32.mrf.mxu0
      %v1997 = vadd.f32 %v1352, %v1996
      %1998 = vdwg.mxu0
      %1999 = vmatpush.msra.mxu0 %v960
      %2000 = vmatpush.msra.mxu0 %v954
      %2001 = vmatpush.msra.mxu0 %v948
      %2002 = vmatpush.msra.mxu0 %v942
      %2003 = vmatpush.msra.mxu0 %v936
      %2004 = vmatpush.msra.mxu0 %v930
      %2005 = vmatpush.msra.mxu0 %v924
      %2006 = vmatpush.msra.mxu0 %v918
      %2007 = vmatpush.msra.mxu0 %v912
      %2008 = vmatpush.msra.mxu0 %v906
      %2009 = vmatpush.msra.mxu0 %v900
      %2010 = vmatpush.msra.mxu0 %v894
      %2011 = vmatpush.msra.mxu0 %v888
      %2012 = vmatpush.msra.mxu0 %v882
      %2013 = vmatpush.msra.mxu0 %v876
      %2014 = vmatpush.msra.mxu0 %v870
      %2015 = vmatmul.f32.gmra.mxu0 %v1368
      %v2016 = vpop.f32.mrf.mxu0
      %v2017 = vadd.f32 %v1997, %v2016
      %2018 = vdwg.mxu0
      %2019 = vmatpush.msra.mxu0 %v1056
      %2020 = vmatpush.msra.mxu0 %v1050
      %2021 = vmatpush.msra.mxu0 %v1044
      %2022 = vmatpush.msra.mxu0 %v1038
      %2023 = vmatpush.msra.mxu0 %v1032
      %2024 = vmatpush.msra.mxu0 %v1026
      %2025 = vmatpush.msra.mxu0 %v1020
      %2026 = vmatpush.msra.mxu0 %v1014
      %2027 = vmatpush.msra.mxu0 %v1008
      %2028 = vmatpush.msra.mxu0 %v1002
      %2029 = vmatpush.msra.mxu0 %v996
      %2030 = vmatpush.msra.mxu0 %v990
      %2031 = vmatpush.msra.mxu0 %v984
      %2032 = vmatpush.msra.mxu0 %v978
      %2033 = vmatpush.msra.mxu0 %v972
      %2034 = vmatpush.msra.mxu0 %v966
      %2035 = vmatmul.f32.gmra.mxu0 %v1369
      %v2036 = vpop.f32.mrf.mxu0
      %v2037 = vadd.f32 %v2017, %v2036
      %2038 = vdwg.mxu0
      %2039 = vmatpush.msra.mxu0 %v1152
      %2040 = vmatpush.msra.mxu0 %v1146
      %2041 = vmatpush.msra.mxu0 %v1140
      %2042 = vmatpush.msra.mxu0 %v1134
      %2043 = vmatpush.msra.mxu0 %v1128
      %2044 = vmatpush.msra.mxu0 %v1122
      %2045 = vmatpush.msra.mxu0 %v1116
      %2046 = vmatpush.msra.mxu0 %v1110
      %2047 = vmatpush.msra.mxu0 %v1104
      %2048 = vmatpush.msra.mxu0 %v1098
      %2049 = vmatpush.msra.mxu0 %v1092
      %2050 = vmatpush.msra.mxu0 %v1086
      %2051 = vmatpush.msra.mxu0 %v1080
      %2052 = vmatpush.msra.mxu0 %v1074
      %2053 = vmatpush.msra.mxu0 %v1068
      %2054 = vmatpush.msra.mxu0 %v1062
      %2055 = vmatmul.f32.gmra.mxu0 %v1370
      %v2056 = vpop.f32.mrf.mxu0
      %v2057 = vadd.f32 %v2037, %v2056
      %2058 = vdwg.mxu0
      %2059 = vmatpush.msra.mxu0 %v1248
      %2060 = vmatpush.msra.mxu0 %v1242
      %2061 = vmatpush.msra.mxu0 %v1236
      %2062 = vmatpush.msra.mxu0 %v1230
      %2063 = vmatpush.msra.mxu0 %v1224
      %2064 = vmatpush.msra.mxu0 %v1218
      %2065 = vmatpush.msra.mxu0 %v1212
      %2066 = vmatpush.msra.mxu0 %v1206
      %2067 = vmatpush.msra.mxu0 %v1200
      %2068 = vmatpush.msra.mxu0 %v1194
      %2069 = vmatpush.msra.mxu0 %v1188
      %2070 = vmatpush.msra.mxu0 %v1182
      %2071 = vmatpush.msra.mxu0 %v1176
      %2072 = vmatpush.msra.mxu0 %v1170
      %2073 = vmatpush.msra.mxu0 %v1164
      %2074 = vmatpush.msra.mxu0 %v1158
      %2075 = vmatmul.f32.gmra.mxu0 %v1371
      %v2076 = vpop.f32.mrf.mxu0
      %v2077 = vadd.f32 %v2057, %v2076
      %2078 = vdwg.mxu0
      %2079 = vmatpush.msra.mxu0 %v1344
      %2080 = vmatpush.msra.mxu0 %v1338
      %2081 = vmatpush.msra.mxu0 %v1332
      %2082 = vmatpush.msra.mxu0 %v1326
      %2083 = vmatpush.msra.mxu0 %v1320
      %2084 = vmatpush.msra.mxu0 %v1314
      %2085 = vmatpush.msra.mxu0 %v1308
      %2086 = vmatpush.msra.mxu0 %v1302
      %2087 = vmatpush.msra.mxu0 %v1296
      %2088 = vmatpush.msra.mxu0 %v1290
      %2089 = vmatpush.msra.mxu0 %v1284
      %2090 = vmatpush.msra.mxu0 %v1278
      %2091 = vmatpush.msra.mxu0 %v1272
      %2092 = vmatpush.msra.mxu0 %v1266
      %2093 = vmatpush.msra.mxu0 %v1260
      %2094 = vmatpush.msra.mxu0 %v1254
      %2095 = vmatmul.f32.gmra.mxu0 %v1372
      %v2096 = vpop.f32.mrf.mxu0
      %v2097 = vadd.f32 %v2077, %v2096
      %2098 = vdwg.mxu0
      %v2099 = vtanh.pop %v1497
      %v2100 = vtanh.pop %v1617
      %v2101 = vtanh.pop %v1737
      %v2102 = vtanh.pop %v1857
      %v2103 = vtanh.pop %v1977
      %v2104 = vtanh.pop %v2097
      %v2105 = vld [vmem:[#allocation11] sm:$0xff]
      %v2106 = vld [vmem:[#allocation11 + $0x8] sm:$0xff]
      %v2107 = vld [vmem:[#allocation11 + $0x10] sm:$0xff]
      %v2108 = vld [vmem:[#allocation11 + $0x18] sm:$0xff]
      %v2109 = vld [vmem:[#allocation11 + $0x20] sm:$0xff]
      %v2110 = vld [vmem:[#allocation11 + $0x28] sm:$0xff]
      %v2111 = vld [vmem:[#allocation11 + $0x30] sm:$0xff]
      %v2112 = vld [vmem:[#allocation11 + $0x38] sm:$0xff]
      %v2113 = vld [vmem:[#allocation11 + $0x40] sm:$0xff]
      %v2114 = vld [vmem:[#allocation11 + $0x48] sm:$0xff]
      %v2115 = vld [vmem:[#allocation11 + $0x50] sm:$0xff]
      %v2116 = vld [vmem:[#allocation11 + $0x58] sm:$0xff]
      %v2117 = vld [vmem:[#allocation11 + $0x60] sm:$0xff]
      %v2118 = vld [vmem:[#allocation11 + $0x68] sm:$0xff]
      %v2119 = vld [vmem:[#allocation11 + $0x70] sm:$0xff]
      %v2120 = vld [vmem:[#allocation11 + $0x78] sm:$0xff]
      %v2121 = vld [vmem:[#allocation11 + $0x80] sm:$0xff]
      %v2122 = vld [vmem:[#allocation11 + $0x88] sm:$0xff]
      %v2123 = vld [vmem:[#allocation11 + $0x90] sm:$0xff]
      %v2124 = vld [vmem:[#allocation11 + $0x98] sm:$0xff]
      %v2125 = vld [vmem:[#allocation11 + $0xa0] sm:$0xff]
      %v2126 = vld [vmem:[#allocation11 + $0xa8] sm:$0xff]
      %v2127 = vld [vmem:[#allocation11 + $0xb0] sm:$0xff]
      %v2128 = vld [vmem:[#allocation11 + $0xb8] sm:$0xff]
      %v2129 = vld [vmem:[#allocation11 + $0xc0] sm:$0xff]
      %v2130 = vld [vmem:[#allocation11 + $0xc8] sm:$0xff]
      %v2131 = vld [vmem:[#allocation11 + $0xd0] sm:$0xff]
      %v2132 = vld [vmem:[#allocation11 + $0xd8] sm:$0xff]
      %v2133 = vld [vmem:[#allocation11 + $0xe0] sm:$0xff]
      %v2134 = vld [vmem:[#allocation11 + $0xe8] sm:$0xff]
      %v2135 = vld [vmem:[#allocation11 + $0xf0] sm:$0xff]
      %v2136 = vld [vmem:[#allocation11 + $0xf8] sm:$0xff]
      %v2137 = vld [vmem:[#allocation11 + $0x100] sm:$0xff]
      %v2138 = vld [vmem:[#allocation11 + $0x108] sm:$0xff]
      %v2139 = vld [vmem:[#allocation11 + $0x110] sm:$0xff]
      %v2140 = vld [vmem:[#allocation11 + $0x118] sm:$0xff]
      %v2141 = vld [vmem:[#allocation11 + $0x120] sm:$0xff]
      %v2142 = vld [vmem:[#allocation11 + $0x128] sm:$0xff]
      %v2143 = vld [vmem:[#allocation11 + $0x130] sm:$0xff]
      %v2144 = vld [vmem:[#allocation11 + $0x138] sm:$0xff]
      %v2145 = vld [vmem:[#allocation11 + $0x140] sm:$0xff]
      %v2146 = vld [vmem:[#allocation11 + $0x148] sm:$0xff]
      %v2147 = vld [vmem:[#allocation11 + $0x150] sm:$0xff]
      %v2148 = vld [vmem:[#allocation11 + $0x158] sm:$0xff]
      %v2149 = vld [vmem:[#allocation11 + $0x160] sm:$0xff]
      %v2150 = vld [vmem:[#allocation11 + $0x168] sm:$0xff]
      %v2151 = vld [vmem:[#allocation11 + $0x170] sm:$0xff]
      %v2152 = vld [vmem:[#allocation11 + $0x178] sm:$0xff]
      %v2153 = vld [vmem:[#allocation11 + $0x180] sm:$0xff]
      %v2154 = vld [vmem:[#allocation11 + $0x188] sm:$0xff]
      %v2155 = vld [vmem:[#allocation11 + $0x190] sm:$0xff]
      %v2156 = vld [vmem:[#allocation11 + $0x198] sm:$0xff]
      %v2157 = vld [vmem:[#allocation11 + $0x1a0] sm:$0xff]
      %v2158 = vld [vmem:[#allocation11 + $0x1a8] sm:$0xff]
      %v2159 = vld [vmem:[#allocation11 + $0x1b0] sm:$0xff]
      %v2160 = vld [vmem:[#allocation11 + $0x1b8] sm:$0xff]
      %v2161 = vld [vmem:[#allocation11 + $0x1c0] sm:$0xff]
      %v2162 = vld [vmem:[#allocation11 + $0x1c8] sm:$0xff]
      %v2163 = vld [vmem:[#allocation11 + $0x1d0] sm:$0xff]
      %v2164 = vld [vmem:[#allocation11 + $0x1d8] sm:$0xff]
      %v2165 = vld [vmem:[#allocation11 + $0x1e0] sm:$0xff]
      %v2166 = vld [vmem:[#allocation11 + $0x1e8] sm:$0xff]
      %v2167 = vld [vmem:[#allocation11 + $0x1f0] sm:$0xff]
      %v2168 = vld [vmem:[#allocation11 + $0x1f8] sm:$0xff]
      %v2169 = vld [vmem:[#allocation11 + $0x200] sm:$0xff]
      %v2170 = vld [vmem:[#allocation11 + $0x208] sm:$0xff]
      %v2171 = vld [vmem:[#allocation11 + $0x210] sm:$0xff]
      %v2172 = vld [vmem:[#allocation11 + $0x218] sm:$0xff]
      %v2173 = vld [vmem:[#allocation11 + $0x220] sm:$0xff]
      %v2174 = vld [vmem:[#allocation11 + $0x228] sm:$0xff]
      %v2175 = vld [vmem:[#allocation11 + $0x230] sm:$0xff]
      %v2176 = vld [vmem:[#allocation11 + $0x238] sm:$0xff]
      %v2177 = vld [vmem:[#allocation11 + $0x240] sm:$0xff]
      %v2178 = vld [vmem:[#allocation11 + $0x248] sm:$0xff]
      %v2179 = vld [vmem:[#allocation11 + $0x250] sm:$0xff]
      %v2180 = vld [vmem:[#allocation11 + $0x258] sm:$0xff]
      %v2181 = vld [vmem:[#allocation11 + $0x260] sm:$0xff]
      %v2182 = vld [vmem:[#allocation11 + $0x268] sm:$0xff]
      %v2183 = vld [vmem:[#allocation11 + $0x270] sm:$0xff]
      %v2184 = vld [vmem:[#allocation11 + $0x278] sm:$0xff]
      %v2185 = vld [vmem:[#allocation11 + $0x280] sm:$0xff]
      %v2186 = vld [vmem:[#allocation11 + $0x288] sm:$0xff]
      %v2187 = vld [vmem:[#allocation11 + $0x290] sm:$0xff]
      %v2188 = vld [vmem:[#allocation11 + $0x298] sm:$0xff]
      %v2189 = vld [vmem:[#allocation11 + $0x2a0] sm:$0xff]
      %v2190 = vld [vmem:[#allocation11 + $0x2a8] sm:$0xff]
      %v2191 = vld [vmem:[#allocation11 + $0x2b0] sm:$0xff]
      %v2192 = vld [vmem:[#allocation11 + $0x2b8] sm:$0xff]
      %v2193 = vld [vmem:[#allocation11 + $0x2c0] sm:$0xff]
      %v2194 = vld [vmem:[#allocation11 + $0x2c8] sm:$0xff]
      %v2195 = vld [vmem:[#allocation11 + $0x2d0] sm:$0xff]
      %v2196 = vld [vmem:[#allocation11 + $0x2d8] sm:$0xff]
      %v2197 = vld [vmem:[#allocation11 + $0x2e0] sm:$0xff]
      %v2198 = vld [vmem:[#allocation11 + $0x2e8] sm:$0xff]
      %v2199 = vld [vmem:[#allocation11 + $0x2f0] sm:$0xff]
      %v2200 = vld [vmem:[#allocation11 + $0x2f8] sm:$0xff]
      %v2201 = vld [vmem:[#allocation11 + $0x300] sm:$0xff]
      %v2202 = vld [vmem:[#allocation11 + $0x308] sm:$0xff]
      %v2203 = vld [vmem:[#allocation11 + $0x310] sm:$0xff]
      %v2204 = vld [vmem:[#allocation11 + $0x318] sm:$0xff]
      %v2205 = vld [vmem:[#allocation11 + $0x320] sm:$0xff]
      %v2206 = vld [vmem:[#allocation11 + $0x328] sm:$0xff]
      %v2207 = vld [vmem:[#allocation11 + $0x330] sm:$0xff]
      %v2208 = vld [vmem:[#allocation11 + $0x338] sm:$0xff]
      %v2209 = vld [vmem:[#allocation11 + $0x340] sm:$0xff]
      %v2210 = vld [vmem:[#allocation11 + $0x348] sm:$0xff]
      %v2211 = vld [vmem:[#allocation11 + $0x350] sm:$0xff]
      %v2212 = vld [vmem:[#allocation11 + $0x358] sm:$0xff]
      %v2213 = vld [vmem:[#allocation11 + $0x360] sm:$0xff]
      %v2214 = vld [vmem:[#allocation11 + $0x368] sm:$0xff]
      %v2215 = vld [vmem:[#allocation11 + $0x370] sm:$0xff]
      %v2216 = vld [vmem:[#allocation11 + $0x378] sm:$0xff]
      %v2217 = vld [vmem:[#allocation11 + $0x380] sm:$0xff]
      %v2218 = vld [vmem:[#allocation11 + $0x388] sm:$0xff]
      %v2219 = vld [vmem:[#allocation11 + $0x390] sm:$0xff]
      %v2220 = vld [vmem:[#allocation11 + $0x398] sm:$0xff]
      %v2221 = vld [vmem:[#allocation11 + $0x3a0] sm:$0xff]
      %v2222 = vld [vmem:[#allocation11 + $0x3a8] sm:$0xff]
      %v2223 = vld [vmem:[#allocation11 + $0x3b0] sm:$0xff]
      %v2224 = vld [vmem:[#allocation11 + $0x3b8] sm:$0xff]
      %v2225 = vld [vmem:[#allocation11 + $0x3c0] sm:$0xff]
      %v2226 = vld [vmem:[#allocation11 + $0x3c8] sm:$0xff]
      %v2227 = vld [vmem:[#allocation11 + $0x3d0] sm:$0xff]
      %v2228 = vld [vmem:[#allocation11 + $0x3d8] sm:$0xff]
      %v2229 = vld [vmem:[#allocation11 + $0x3e0] sm:$0xff]
      %v2230 = vld [vmem:[#allocation11 + $0x3e8] sm:$0xff]
      %v2231 = vld [vmem:[#allocation11 + $0x3f0] sm:$0xff]
      %v2232 = vld [vmem:[#allocation11 + $0x3f8] sm:$0xff]
      %v2233 = vld [vmem:[#allocation11 + $0x400] sm:$0xff]
      %v2234 = vld [vmem:[#allocation11 + $0x408] sm:$0xff]
      %v2235 = vld [vmem:[#allocation11 + $0x410] sm:$0xff]
      %v2236 = vld [vmem:[#allocation11 + $0x418] sm:$0xff]
      %v2237 = vld [vmem:[#allocation11 + $0x420] sm:$0xff]
      %v2238 = vld [vmem:[#allocation11 + $0x428] sm:$0xff]
      %v2239 = vld [vmem:[#allocation11 + $0x430] sm:$0xff]
      %v2240 = vld [vmem:[#allocation11 + $0x438] sm:$0xff]
      %v2241 = vld [vmem:[#allocation11 + $0x440] sm:$0xff]
      %v2242 = vld [vmem:[#allocation11 + $0x448] sm:$0xff]
      %v2243 = vld [vmem:[#allocation11 + $0x450] sm:$0xff]
      %v2244 = vld [vmem:[#allocation11 + $0x458] sm:$0xff]
      %v2245 = vld [vmem:[#allocation11 + $0x460] sm:$0xff]
      %v2246 = vld [vmem:[#allocation11 + $0x468] sm:$0xff]
      %v2247 = vld [vmem:[#allocation11 + $0x470] sm:$0xff]
      %v2248 = vld [vmem:[#allocation11 + $0x478] sm:$0xff]
      %v2249 = vld [vmem:[#allocation11 + $0x480] sm:$0xff]
      %v2250 = vld [vmem:[#allocation11 + $0x488] sm:$0xff]
      %v2251 = vld [vmem:[#allocation11 + $0x490] sm:$0xff]
      %v2252 = vld [vmem:[#allocation11 + $0x498] sm:$0xff]
      %v2253 = vld [vmem:[#allocation11 + $0x4a0] sm:$0xff]
      %v2254 = vld [vmem:[#allocation11 + $0x4a8] sm:$0xff]
      %v2255 = vld [vmem:[#allocation11 + $0x4b0] sm:$0xff]
      %v2256 = vld [vmem:[#allocation11 + $0x4b8] sm:$0xff]
      %v2257 = vld [vmem:[#allocation11 + $0x4c0] sm:$0xff]
      %v2258 = vld [vmem:[#allocation11 + $0x4c8] sm:$0xff]
      %v2259 = vld [vmem:[#allocation11 + $0x4d0] sm:$0xff]
      %v2260 = vld [vmem:[#allocation11 + $0x4d8] sm:$0xff]
      %v2261 = vld [vmem:[#allocation11 + $0x4e0] sm:$0xff]
      %v2262 = vld [vmem:[#allocation11 + $0x4e8] sm:$0xff]
      %v2263 = vld [vmem:[#allocation11 + $0x4f0] sm:$0xff]
      %v2264 = vld [vmem:[#allocation11 + $0x4f8] sm:$0xff]
      %v2265 = vld [vmem:[#allocation11 + $0x500] sm:$0xff]
      %v2266 = vld [vmem:[#allocation11 + $0x508] sm:$0xff]
      %v2267 = vld [vmem:[#allocation11 + $0x510] sm:$0xff]
      %v2268 = vld [vmem:[#allocation11 + $0x518] sm:$0xff]
      %v2269 = vld [vmem:[#allocation11 + $0x520] sm:$0xff]
      %v2270 = vld [vmem:[#allocation11 + $0x528] sm:$0xff]
      %v2271 = vld [vmem:[#allocation11 + $0x530] sm:$0xff]
      %v2272 = vld [vmem:[#allocation11 + $0x538] sm:$0xff]
      %v2273 = vld [vmem:[#allocation11 + $0x540] sm:$0xff]
      %v2274 = vld [vmem:[#allocation11 + $0x548] sm:$0xff]
      %v2275 = vld [vmem:[#allocation11 + $0x550] sm:$0xff]
      %v2276 = vld [vmem:[#allocation11 + $0x558] sm:$0xff]
      %v2277 = vld [vmem:[#allocation11 + $0x560] sm:$0xff]
      %v2278 = vld [vmem:[#allocation11 + $0x568] sm:$0xff]
      %v2279 = vld [vmem:[#allocation11 + $0x570] sm:$0xff]
      %v2280 = vld [vmem:[#allocation11 + $0x578] sm:$0xff]
      %v2281 = vld [vmem:[#allocation11 + $0x580] sm:$0xff]
      %v2282 = vld [vmem:[#allocation11 + $0x588] sm:$0xff]
      %v2283 = vld [vmem:[#allocation11 + $0x590] sm:$0xff]
      %v2284 = vld [vmem:[#allocation11 + $0x598] sm:$0xff]
      %v2285 = vld [vmem:[#allocation11 + $0x5a0] sm:$0xff]
      %v2286 = vld [vmem:[#allocation11 + $0x5a8] sm:$0xff]
      %v2287 = vld [vmem:[#allocation11 + $0x5b0] sm:$0xff]
      %v2288 = vld [vmem:[#allocation11 + $0x5b8] sm:$0xff]
      %v2289 = vld [vmem:[#allocation11 + $0x5c0] sm:$0xff]
      %v2290 = vld [vmem:[#allocation11 + $0x5c8] sm:$0xff]
      %v2291 = vld [vmem:[#allocation11 + $0x5d0] sm:$0xff]
      %v2292 = vld [vmem:[#allocation11 + $0x5d8] sm:$0xff]
      %v2293 = vld [vmem:[#allocation11 + $0x5e0] sm:$0xff]
      %v2294 = vld [vmem:[#allocation11 + $0x5e8] sm:$0xff]
      %v2295 = vld [vmem:[#allocation11 + $0x5f0] sm:$0xff]
      %v2296 = vld [vmem:[#allocation11 + $0x5f8] sm:$0xff]
      %v2297 = vld [vmem:[#allocation12] sm:$0xff]
      %v2298 = vld [vmem:[#allocation12 + $0x8] sm:$0xff]
      %v2299 = vld [vmem:[#allocation12 + $0x10] sm:$0xff]
      %v2300 = vld [vmem:[#allocation12 + $0x18] sm:$0xff]
      %v2301 = vld [vmem:[#allocation12 + $0x20] sm:$0xff]
      %v2302 = vld [vmem:[#allocation12 + $0x28] sm:$0xff]
      %v2303 = vld [vmem:[#allocation12 + $0x30] sm:$0xff]
      %v2304 = vld [vmem:[#allocation12 + $0x38] sm:$0xff]
      %v2305 = vld [vmem:[#allocation12 + $0x40] sm:$0xff]
      %v2306 = vld [vmem:[#allocation12 + $0x48] sm:$0xff]
      %v2307 = vld [vmem:[#allocation12 + $0x50] sm:$0xff]
      %v2308 = vld [vmem:[#allocation12 + $0x58] sm:$0xff]
      %v2309 = vld [vmem:[#allocation12 + $0x60] sm:$0xff]
      %v2310 = vld [vmem:[#allocation12 + $0x68] sm:$0xff]
      %v2311 = vld [vmem:[#allocation12 + $0x70] sm:$0xff]
      %v2312 = vld [vmem:[#allocation12 + $0x78] sm:$0xff]
      %v2313 = vld [vmem:[#allocation12 + $0x80] sm:$0xff]
      %v2314 = vld [vmem:[#allocation12 + $0x88] sm:$0xff]
      %v2315 = vld [vmem:[#allocation12 + $0x90] sm:$0xff]
      %v2316 = vld [vmem:[#allocation12 + $0x98] sm:$0xff]
      %v2317 = vld [vmem:[#allocation12 + $0xa0] sm:$0xff]
      %v2318 = vld [vmem:[#allocation12 + $0xa8] sm:$0xff]
      %v2319 = vld [vmem:[#allocation12 + $0xb0] sm:$0xff]
      %v2320 = vld [vmem:[#allocation12 + $0xb8] sm:$0xff]
      %v2321 = vld [vmem:[#allocation12 + $0xc0] sm:$0xff]
      %v2322 = vld [vmem:[#allocation12 + $0xc8] sm:$0xff]
      %v2323 = vld [vmem:[#allocation12 + $0xd0] sm:$0xff]
      %v2324 = vld [vmem:[#allocation12 + $0xd8] sm:$0xff]
      %v2325 = vld [vmem:[#allocation12 + $0xe0] sm:$0xff]
      %v2326 = vld [vmem:[#allocation12 + $0xe8] sm:$0xff]
      %v2327 = vld [vmem:[#allocation12 + $0xf0] sm:$0xff]
      %v2328 = vld [vmem:[#allocation12 + $0xf8] sm:$0xff]
      %v2329 = vld [vmem:[#allocation12 + $0x100] sm:$0xff]
      %v2330 = vld [vmem:[#allocation12 + $0x108] sm:$0xff]
      %v2331 = vld [vmem:[#allocation12 + $0x110] sm:$0xff]
      %v2332 = vld [vmem:[#allocation12 + $0x118] sm:$0xff]
      %v2333 = vld [vmem:[#allocation12 + $0x120] sm:$0xff]
      %v2334 = vld [vmem:[#allocation12 + $0x128] sm:$0xff]
      %v2335 = vld [vmem:[#allocation12 + $0x130] sm:$0xff]
      %v2336 = vld [vmem:[#allocation12 + $0x138] sm:$0xff]
      %v2337 = vld [vmem:[#allocation12 + $0x140] sm:$0xff]
      %v2338 = vld [vmem:[#allocation12 + $0x148] sm:$0xff]
      %v2339 = vld [vmem:[#allocation12 + $0x150] sm:$0xff]
      %v2340 = vld [vmem:[#allocation12 + $0x158] sm:$0xff]
      %v2341 = vld [vmem:[#allocation12 + $0x160] sm:$0xff]
      %v2342 = vld [vmem:[#allocation12 + $0x168] sm:$0xff]
      %v2343 = vld [vmem:[#allocation12 + $0x170] sm:$0xff]
      %v2344 = vld [vmem:[#allocation12 + $0x178] sm:$0xff]
      %v2345 = vld [vmem:[#allocation12 + $0x180] sm:$0xff]
      %v2346 = vld [vmem:[#allocation12 + $0x188] sm:$0xff]
      %v2347 = vld [vmem:[#allocation12 + $0x190] sm:$0xff]
      %v2348 = vld [vmem:[#allocation12 + $0x198] sm:$0xff]
      %v2349 = vld [vmem:[#allocation12 + $0x1a0] sm:$0xff]
      %v2350 = vld [vmem:[#allocation12 + $0x1a8] sm:$0xff]
      %v2351 = vld [vmem:[#allocation12 + $0x1b0] sm:$0xff]
      %v2352 = vld [vmem:[#allocation12 + $0x1b8] sm:$0xff]
      %v2353 = vld [vmem:[#allocation12 + $0x1c0] sm:$0xff]
      %v2354 = vld [vmem:[#allocation12 + $0x1c8] sm:$0xff]
      %v2355 = vld [vmem:[#allocation12 + $0x1d0] sm:$0xff]
      %v2356 = vld [vmem:[#allocation12 + $0x1d8] sm:$0xff]
      %v2357 = vld [vmem:[#allocation12 + $0x1e0] sm:$0xff]
      %v2358 = vld [vmem:[#allocation12 + $0x1e8] sm:$0xff]
      %v2359 = vld [vmem:[#allocation12 + $0x1f0] sm:$0xff]
      %v2360 = vld [vmem:[#allocation12 + $0x1f8] sm:$0xff]
      %v2361 = vld [vmem:[#allocation12 + $0x200] sm:$0xff]
      %v2362 = vld [vmem:[#allocation12 + $0x208] sm:$0xff]
      %v2363 = vld [vmem:[#allocation12 + $0x210] sm:$0xff]
      %v2364 = vld [vmem:[#allocation12 + $0x218] sm:$0xff]
      %v2365 = vld [vmem:[#allocation12 + $0x220] sm:$0xff]
      %v2366 = vld [vmem:[#allocation12 + $0x228] sm:$0xff]
      %v2367 = vld [vmem:[#allocation12 + $0x230] sm:$0xff]
      %v2368 = vld [vmem:[#allocation12 + $0x238] sm:$0xff]
      %v2369 = vld [vmem:[#allocation12 + $0x240] sm:$0xff]
      %v2370 = vld [vmem:[#allocation12 + $0x248] sm:$0xff]
      %v2371 = vld [vmem:[#allocation12 + $0x250] sm:$0xff]
      %v2372 = vld [vmem:[#allocation12 + $0x258] sm:$0xff]
      %v2373 = vld [vmem:[#allocation12 + $0x260] sm:$0xff]
      %v2374 = vld [vmem:[#allocation12 + $0x268] sm:$0xff]
      %v2375 = vld [vmem:[#allocation12 + $0x270] sm:$0xff]
      %v2376 = vld [vmem:[#allocation12 + $0x278] sm:$0xff]
      %v2377 = vld [vmem:[#allocation12 + $0x280] sm:$0xff]
      %v2378 = vld [vmem:[#allocation12 + $0x288] sm:$0xff]
      %v2379 = vld [vmem:[#allocation12 + $0x290] sm:$0xff]
      %v2380 = vld [vmem:[#allocation12 + $0x298] sm:$0xff]
      %v2381 = vld [vmem:[#allocation12 + $0x2a0] sm:$0xff]
      %v2382 = vld [vmem:[#allocation12 + $0x2a8] sm:$0xff]
      %v2383 = vld [vmem:[#allocation12 + $0x2b0] sm:$0xff]
      %v2384 = vld [vmem:[#allocation12 + $0x2b8] sm:$0xff]
      %v2385 = vld [vmem:[#allocation12 + $0x2c0] sm:$0xff]
      %v2386 = vld [vmem:[#allocation12 + $0x2c8] sm:$0xff]
      %v2387 = vld [vmem:[#allocation12 + $0x2d0] sm:$0xff]
      %v2388 = vld [vmem:[#allocation12 + $0x2d8] sm:$0xff]
      %v2389 = vld [vmem:[#allocation12 + $0x2e0] sm:$0xff]
      %v2390 = vld [vmem:[#allocation12 + $0x2e8] sm:$0xff]
      %v2391 = vld [vmem:[#allocation12 + $0x2f0] sm:$0xff]
      %v2392 = vld [vmem:[#allocation12 + $0x2f8] sm:$0xff]
      %v2393 = vld [vmem:[#allocation12 + $0x300] sm:$0xff]
      %v2394 = vld [vmem:[#allocation12 + $0x308] sm:$0xff]
      %v2395 = vld [vmem:[#allocation12 + $0x310] sm:$0xff]
      %v2396 = vld [vmem:[#allocation12 + $0x318] sm:$0xff]
      %v2397 = vld [vmem:[#allocation12 + $0x320] sm:$0xff]
      %v2398 = vld [vmem:[#allocation12 + $0x328] sm:$0xff]
      %v2399 = vld [vmem:[#allocation12 + $0x330] sm:$0xff]
      %v2400 = vld [vmem:[#allocation12 + $0x338] sm:$0xff]
      %v2401 = vld [vmem:[#allocation12 + $0x340] sm:$0xff]
      %v2402 = vld [vmem:[#allocation12 + $0x348] sm:$0xff]
      %v2403 = vld [vmem:[#allocation12 + $0x350] sm:$0xff]
      %v2404 = vld [vmem:[#allocation12 + $0x358] sm:$0xff]
      %v2405 = vld [vmem:[#allocation12 + $0x360] sm:$0xff]
      %v2406 = vld [vmem:[#allocation12 + $0x368] sm:$0xff]
      %v2407 = vld [vmem:[#allocation12 + $0x370] sm:$0xff]
      %v2408 = vld [vmem:[#allocation12 + $0x378] sm:$0xff]
      %v2409 = vld [vmem:[#allocation12 + $0x380] sm:$0xff]
      %v2410 = vld [vmem:[#allocation12 + $0x388] sm:$0xff]
      %v2411 = vld [vmem:[#allocation12 + $0x390] sm:$0xff]
      %v2412 = vld [vmem:[#allocation12 + $0x398] sm:$0xff]
      %v2413 = vld [vmem:[#allocation12 + $0x3a0] sm:$0xff]
      %v2414 = vld [vmem:[#allocation12 + $0x3a8] sm:$0xff]
      %v2415 = vld [vmem:[#allocation12 + $0x3b0] sm:$0xff]
      %v2416 = vld [vmem:[#allocation12 + $0x3b8] sm:$0xff]
      %v2417 = vld [vmem:[#allocation12 + $0x3c0] sm:$0xff]
      %v2418 = vld [vmem:[#allocation12 + $0x3c8] sm:$0xff]
      %v2419 = vld [vmem:[#allocation12 + $0x3d0] sm:$0xff]
      %v2420 = vld [vmem:[#allocation12 + $0x3d8] sm:$0xff]
      %v2421 = vld [vmem:[#allocation12 + $0x3e0] sm:$0xff]
      %v2422 = vld [vmem:[#allocation12 + $0x3e8] sm:$0xff]
      %v2423 = vld [vmem:[#allocation12 + $0x3f0] sm:$0xff]
      %v2424 = vld [vmem:[#allocation12 + $0x3f8] sm:$0xff]
      %v2425 = vld [vmem:[#allocation12 + $0x400] sm:$0xff]
      %v2426 = vld [vmem:[#allocation12 + $0x408] sm:$0xff]
      %v2427 = vld [vmem:[#allocation12 + $0x410] sm:$0xff]
      %v2428 = vld [vmem:[#allocation12 + $0x418] sm:$0xff]
      %v2429 = vld [vmem:[#allocation12 + $0x420] sm:$0xff]
      %v2430 = vld [vmem:[#allocation12 + $0x428] sm:$0xff]
      %v2431 = vld [vmem:[#allocation12 + $0x430] sm:$0xff]
      %v2432 = vld [vmem:[#allocation12 + $0x438] sm:$0xff]
      %v2433 = vld [vmem:[#allocation12 + $0x440] sm:$0xff]
      %v2434 = vld [vmem:[#allocation12 + $0x448] sm:$0xff]
      %v2435 = vld [vmem:[#allocation12 + $0x450] sm:$0xff]
      %v2436 = vld [vmem:[#allocation12 + $0x458] sm:$0xff]
      %v2437 = vld [vmem:[#allocation12 + $0x460] sm:$0xff]
      %v2438 = vld [vmem:[#allocation12 + $0x468] sm:$0xff]
      %v2439 = vld [vmem:[#allocation12 + $0x470] sm:$0xff]
      %v2440 = vld [vmem:[#allocation12 + $0x478] sm:$0xff]
      %v2441 = vld [vmem:[#allocation12 + $0x480] sm:$0xff]
      %v2442 = vld [vmem:[#allocation12 + $0x488] sm:$0xff]
      %v2443 = vld [vmem:[#allocation12 + $0x490] sm:$0xff]
      %v2444 = vld [vmem:[#allocation12 + $0x498] sm:$0xff]
      %v2445 = vld [vmem:[#allocation12 + $0x4a0] sm:$0xff]
      %v2446 = vld [vmem:[#allocation12 + $0x4a8] sm:$0xff]
      %v2447 = vld [vmem:[#allocation12 + $0x4b0] sm:$0xff]
      %v2448 = vld [vmem:[#allocation12 + $0x4b8] sm:$0xff]
      %v2449 = vld [vmem:[#allocation12 + $0x4c0] sm:$0xff]
      %v2450 = vld [vmem:[#allocation12 + $0x4c8] sm:$0xff]
      %v2451 = vld [vmem:[#allocation12 + $0x4d0] sm:$0xff]
      %v2452 = vld [vmem:[#allocation12 + $0x4d8] sm:$0xff]
      %v2453 = vld [vmem:[#allocation12 + $0x4e0] sm:$0xff]
      %v2454 = vld [vmem:[#allocation12 + $0x4e8] sm:$0xff]
      %v2455 = vld [vmem:[#allocation12 + $0x4f0] sm:$0xff]
      %v2456 = vld [vmem:[#allocation12 + $0x4f8] sm:$0xff]
      %v2457 = vld [vmem:[#allocation12 + $0x500] sm:$0xff]
      %v2458 = vld [vmem:[#allocation12 + $0x508] sm:$0xff]
      %v2459 = vld [vmem:[#allocation12 + $0x510] sm:$0xff]
      %v2460 = vld [vmem:[#allocation12 + $0x518] sm:$0xff]
      %v2461 = vld [vmem:[#allocation12 + $0x520] sm:$0xff]
      %v2462 = vld [vmem:[#allocation12 + $0x528] sm:$0xff]
      %v2463 = vld [vmem:[#allocation12 + $0x530] sm:$0xff]
      %v2464 = vld [vmem:[#allocation12 + $0x538] sm:$0xff]
      %v2465 = vld [vmem:[#allocation12 + $0x540] sm:$0xff]
      %v2466 = vld [vmem:[#allocation12 + $0x548] sm:$0xff]
      %v2467 = vld [vmem:[#allocation12 + $0x550] sm:$0xff]
      %v2468 = vld [vmem:[#allocation12 + $0x558] sm:$0xff]
      %v2469 = vld [vmem:[#allocation12 + $0x560] sm:$0xff]
      %v2470 = vld [vmem:[#allocation12 + $0x568] sm:$0xff]
      %v2471 = vld [vmem:[#allocation12 + $0x570] sm:$0xff]
      %v2472 = vld [vmem:[#allocation12 + $0x578] sm:$0xff]
      %v2473 = vld [vmem:[#allocation12 + $0x580] sm:$0xff]
      %v2474 = vld [vmem:[#allocation12 + $0x588] sm:$0xff]
      %v2475 = vld [vmem:[#allocation12 + $0x590] sm:$0xff]
      %v2476 = vld [vmem:[#allocation12 + $0x598] sm:$0xff]
      %v2477 = vld [vmem:[#allocation12 + $0x5a0] sm:$0xff]
      %v2478 = vld [vmem:[#allocation12 + $0x5a8] sm:$0xff]
      %v2479 = vld [vmem:[#allocation12 + $0x5b0] sm:$0xff]
      %v2480 = vld [vmem:[#allocation12 + $0x5b8] sm:$0xff]
      %v2481 = vld [vmem:[#allocation12 + $0x5c0] sm:$0xff]
      %v2482 = vld [vmem:[#allocation12 + $0x5c8] sm:$0xff]
      %v2483 = vld [vmem:[#allocation12 + $0x5d0] sm:$0xff]
      %v2484 = vld [vmem:[#allocation12 + $0x5d8] sm:$0xff]
      %v2485 = vld [vmem:[#allocation12 + $0x5e0] sm:$0xff]
      %v2486 = vld [vmem:[#allocation12 + $0x5e8] sm:$0xff]
      %v2487 = vld [vmem:[#allocation12 + $0x5f0] sm:$0xff]
      %v2488 = vld [vmem:[#allocation12 + $0x5f8] sm:$0xff]
      %v2495 = vrot.slane %v2099, 2
      %v2496 = vrot.slane %v2100, 2
      %v2497 = vrot.slane %v2101, 2
      %v2498 = vrot.slane %v2102, 2
      %v2499 = vrot.slane %v2103, 2
      %v2500 = vrot.slane %v2104, 2
      %2507 = vmatpush.msra.mxu0 %v2327
      %2508 = vmatpush.msra.mxu0 %v2325
      %2509 = vmatpush.msra.mxu0 %v2323
      %2510 = vmatpush.msra.mxu0 %v2321
      %2511 = vmatpush.msra.mxu0 %v2319
      %2512 = vmatpush.msra.mxu0 %v2317
      %2513 = vmatpush.msra.mxu0 %v2315
      %2514 = vmatpush.msra.mxu0 %v2313
      %2515 = vmatpush.msra.mxu0 %v2311
      %2516 = vmatpush.msra.mxu0 %v2309
      %2517 = vmatpush.msra.mxu0 %v2307
      %2518 = vmatpush.msra.mxu0 %v2305
      %2519 = vmatpush.msra.mxu0 %v2303
      %2520 = vmatpush.msra.mxu0 %v2301
      %2521 = vmatpush.msra.mxu0 %v2299
      %2522 = vmatpush.msra.mxu0 %v2297
      %2523 = vmatmul.f32.gmra.mxu0 %v2495
      %v2524 = vpop.f32.mrf.mxu0
      %v2525 = vadd.f32 0.0, %v2524
      %2526 = vdwg.mxu0
      %2527 = vmatpush.msra.mxu0 %v2359
      %2528 = vmatpush.msra.mxu0 %v2357
      %2529 = vmatpush.msra.mxu0 %v2355
      %2530 = vmatpush.msra.mxu0 %v2353
      %2531 = vmatpush.msra.mxu0 %v2351
      %2532 = vmatpush.msra.mxu0 %v2349
      %2533 = vmatpush.msra.mxu0 %v2347
      %2534 = vmatpush.msra.mxu0 %v2345
      %2535 = vmatpush.msra.mxu0 %v2343
      %2536 = vmatpush.msra.mxu0 %v2341
      %2537 = vmatpush.msra.mxu0 %v2339
      %2538 = vmatpush.msra.mxu0 %v2337
      %2539 = vmatpush.msra.mxu0 %v2335
      %2540 = vmatpush.msra.mxu0 %v2333
      %2541 = vmatpush.msra.mxu0 %v2331
      %2542 = vmatpush.msra.mxu0 %v2329
      %2543 = vmatmul.f32.gmra.mxu0 %v2496
      %v2544 = vpop.f32.mrf.mxu0
      %v2545 = vadd.f32 %v2525, %v2544
      %2546 = vdwg.mxu0
      %2547 = vmatpush.msra.mxu0 %v2391
      %2548 = vmatpush.msra.mxu0 %v2389
      %2549 = vmatpush.msra.mxu0 %v2387
      %2550 = vmatpush.msra.mxu0 %v2385
      %2551 = vmatpush.msra.mxu0 %v2383
      %2552 = vmatpush.msra.mxu0 %v2381
      %2553 = vmatpush.msra.mxu0 %v2379
      %2554 = vmatpush.msra.mxu0 %v2377
      %2555 = vmatpush.msra.mxu0 %v2375
      %2556 = vmatpush.msra.mxu0 %v2373
      %2557 = vmatpush.msra.mxu0 %v2371
      %2558 = vmatpush.msra.mxu0 %v2369
      %2559 = vmatpush.msra.mxu0 %v2367
      %2560 = vmatpush.msra.mxu0 %v2365
      %2561 = vmatpush.msra.mxu0 %v2363
      %2562 = vmatpush.msra.mxu0 %v2361
      %2563 = vmatmul.f32.gmra.mxu0 %v2497
      %v2564 = vpop.f32.mrf.mxu0
      %v2565 = vadd.f32 %v2545, %v2564
      %2566 = vdwg.mxu0
      %2567 = vmatpush.msra.mxu0 %v2423
      %2568 = vmatpush.msra.mxu0 %v2421
      %2569 = vmatpush.msra.mxu0 %v2419
      %2570 = vmatpush.msra.mxu0 %v2417
      %2571 = vmatpush.msra.mxu0 %v2415
      %2572 = vmatpush.msra.mxu0 %v2413
      %2573 = vmatpush.msra.mxu0 %v2411
      %2574 = vmatpush.msra.mxu0 %v2409
      %2575 = vmatpush.msra.mxu0 %v2407
      %2576 = vmatpush.msra.mxu0 %v2405
      %2577 = vmatpush.msra.mxu0 %v2403
      %2578 = vmatpush.msra.mxu0 %v2401
      %2579 = vmatpush.msra.mxu0 %v2399
      %2580 = vmatpush.msra.mxu0 %v2397
      %2581 = vmatpush.msra.mxu0 %v2395
      %2582 = vmatpush.msra.mxu0 %v2393
      %2583 = vmatmul.f32.gmra.mxu0 %v2498
      %v2584 = vpop.f32.mrf.mxu0
      %v2585 = vadd.f32 %v2565, %v2584
      %2586 = vdwg.mxu0
      %2587 = vmatpush.msra.mxu0 %v2455
      %2588 = vmatpush.msra.mxu0 %v2453
      %2589 = vmatpush.msra.mxu0 %v2451
      %2590 = vmatpush.msra.mxu0 %v2449
      %2591 = vmatpush.msra.mxu0 %v2447
      %2592 = vmatpush.msra.mxu0 %v2445
      %2593 = vmatpush.msra.mxu0 %v2443
      %2594 = vmatpush.msra.mxu0 %v2441
      %2595 = vmatpush.msra.mxu0 %v2439
      %2596 = vmatpush.msra.mxu0 %v2437
      %2597 = vmatpush.msra.mxu0 %v2435
      %2598 = vmatpush.msra.mxu0 %v2433
      %2599 = vmatpush.msra.mxu0 %v2431
      %2600 = vmatpush.msra.mxu0 %v2429
      %2601 = vmatpush.msra.mxu0 %v2427
      %2602 = vmatpush.msra.mxu0 %v2425
      %2603 = vmatmul.f32.gmra.mxu0 %v2499
      %v2604 = vpop.f32.mrf.mxu0
      %v2605 = vadd.f32 %v2585, %v2604
      %2606 = vdwg.mxu0
      %2607 = vmatpush.msra.mxu0 %v2487
      %2608 = vmatpush.msra.mxu0 %v2485
      %2609 = vmatpush.msra.mxu0 %v2483
      %2610 = vmatpush.msra.mxu0 %v2481
      %2611 = vmatpush.msra.mxu0 %v2479
      %2612 = vmatpush.msra.mxu0 %v2477
      %2613 = vmatpush.msra.mxu0 %v2475
      %2614 = vmatpush.msra.mxu0 %v2473
      %2615 = vmatpush.msra.mxu0 %v2471
      %2616 = vmatpush.msra.mxu0 %v2469
      %2617 = vmatpush.msra.mxu0 %v2467
      %2618 = vmatpush.msra.mxu0 %v2465
      %2619 = vmatpush.msra.mxu0 %v2463
      %2620 = vmatpush.msra.mxu0 %v2461
      %2621 = vmatpush.msra.mxu0 %v2459
      %2622 = vmatpush.msra.mxu0 %v2457
      %2623 = vmatmul.f32.gmra.mxu0 %v2500
      %v2624 = vpop.f32.mrf.mxu0
      %v2625 = vadd.f32 %v2605, %v2624
      %2626 = vdwg.mxu0
      %2627 = vmatpush.msra.mxu0 %v2328
      %2628 = vmatpush.msra.mxu0 %v2326
      %2629 = vmatpush.msra.mxu0 %v2324
      %2630 = vmatpush.msra.mxu0 %v2322
      %2631 = vmatpush.msra.mxu0 %v2320
      %2632 = vmatpush.msra.mxu0 %v2318
      %2633 = vmatpush.msra.mxu0 %v2316
      %2634 = vmatpush.msra.mxu0 %v2314
      %2635 = vmatpush.msra.mxu0 %v2312
      %2636 = vmatpush.msra.mxu0 %v2310
      %2637 = vmatpush.msra.mxu0 %v2308
      %2638 = vmatpush.msra.mxu0 %v2306
      %2639 = vmatpush.msra.mxu0 %v2304
      %2640 = vmatpush.msra.mxu0 %v2302
      %2641 = vmatpush.msra.mxu0 %v2300
      %2642 = vmatpush.msra.mxu0 %v2298
      %2643 = vmatmul.f32.gmra.mxu0 %v2495
      %v2644 = vpop.f32.mrf.mxu0
      %v2645 = vadd.f32 0.0, %v2644
      %2646 = vdwg.mxu0
      %2647 = vmatpush.msra.mxu0 %v2360
      %2648 = vmatpush.msra.mxu0 %v2358
      %2649 = vmatpush.msra.mxu0 %v2356
      %2650 = vmatpush.msra.mxu0 %v2354
      %2651 = vmatpush.msra.mxu0 %v2352
      %2652 = vmatpush.msra.mxu0 %v2350
      %2653 = vmatpush.msra.mxu0 %v2348
      %2654 = vmatpush.msra.mxu0 %v2346
      %2655 = vmatpush.msra.mxu0 %v2344
      %2656 = vmatpush.msra.mxu0 %v2342
      %2657 = vmatpush.msra.mxu0 %v2340
      %2658 = vmatpush.msra.mxu0 %v2338
      %2659 = vmatpush.msra.mxu0 %v2336
      %2660 = vmatpush.msra.mxu0 %v2334
      %2661 = vmatpush.msra.mxu0 %v2332
      %2662 = vmatpush.msra.mxu0 %v2330
      %2663 = vmatmul.f32.gmra.mxu0 %v2496
      %v2664 = vpop.f32.mrf.mxu0
      %v2665 = vadd.f32 %v2645, %v2664
      %2666 = vdwg.mxu0
      %2667 = vmatpush.msra.mxu0 %v2392
      %2668 = vmatpush.msra.mxu0 %v2390
      %2669 = vmatpush.msra.mxu0 %v2388
      %2670 = vmatpush.msra.mxu0 %v2386
      %2671 = vmatpush.msra.mxu0 %v2384
      %2672 = vmatpush.msra.mxu0 %v2382
      %2673 = vmatpush.msra.mxu0 %v2380
      %2674 = vmatpush.msra.mxu0 %v2378
      %2675 = vmatpush.msra.mxu0 %v2376
      %2676 = vmatpush.msra.mxu0 %v2374
      %2677 = vmatpush.msra.mxu0 %v2372
      %2678 = vmatpush.msra.mxu0 %v2370
      %2679 = vmatpush.msra.mxu0 %v2368
      %2680 = vmatpush.msra.mxu0 %v2366
      %2681 = vmatpush.msra.mxu0 %v2364
      %2682 = vmatpush.msra.mxu0 %v2362
      %2683 = vmatmul.f32.gmra.mxu0 %v2497
      %v2684 = vpop.f32.mrf.mxu0
      %v2685 = vadd.f32 %v2665, %v2684
      %2686 = vdwg.mxu0
      %2687 = vmatpush.msra.mxu0 %v2424
      %2688 = vmatpush.msra.mxu0 %v2422
      %2689 = vmatpush.msra.mxu0 %v2420
      %2690 = vmatpush.msra.mxu0 %v2418
      %2691 = vmatpush.msra.mxu0 %v2416
      %2692 = vmatpush.msra.mxu0 %v2414
      %2693 = vmatpush.msra.mxu0 %v2412
      %2694 = vmatpush.msra.mxu0 %v2410
      %2695 = vmatpush.msra.mxu0 %v2408
      %2696 = vmatpush.msra.mxu0 %v2406
      %2697 = vmatpush.msra.mxu0 %v2404
      %2698 = vmatpush.msra.mxu0 %v2402
      %2699 = vmatpush.msra.mxu0 %v2400
      %2700 = vmatpush.msra.mxu0 %v2398
      %2701 = vmatpush.msra.mxu0 %v2396
      %2702 = vmatpush.msra.mxu0 %v2394
      %2703 = vmatmul.f32.gmra.mxu0 %v2498
      %v2704 = vpop.f32.mrf.mxu0
      %v2705 = vadd.f32 %v2685, %v2704
      %2706 = vdwg.mxu0
      %2707 = vmatpush.msra.mxu0 %v2456
      %2708 = vmatpush.msra.mxu0 %v2454
      %2709 = vmatpush.msra.mxu0 %v2452
      %2710 = vmatpush.msra.mxu0 %v2450
      %2711 = vmatpush.msra.mxu0 %v2448
      %2712 = vmatpush.msra.mxu0 %v2446
      %2713 = vmatpush.msra.mxu0 %v2444
      %2714 = vmatpush.msra.mxu0 %v2442
      %2715 = vmatpush.msra.mxu0 %v2440
      %2716 = vmatpush.msra.mxu0 %v2438
      %2717 = vmatpush.msra.mxu0 %v2436
      %2718 = vmatpush.msra.mxu0 %v2434
      %2719 = vmatpush.msra.mxu0 %v2432
      %2720 = vmatpush.msra.mxu0 %v2430
      %2721 = vmatpush.msra.mxu0 %v2428
      %2722 = vmatpush.msra.mxu0 %v2426
      %2723 = vmatmul.f32.gmra.mxu0 %v2499
      %v2724 = vpop.f32.mrf.mxu0
      %v2725 = vadd.f32 %v2705, %v2724
      %2726 = vdwg.mxu0
      %2727 = vmatpush.msra.mxu0 %v2488
      %2728 = vmatpush.msra.mxu0 %v2486
      %2729 = vmatpush.msra.mxu0 %v2484
      %2730 = vmatpush.msra.mxu0 %v2482
      %2731 = vmatpush.msra.mxu0 %v2480
      %2732 = vmatpush.msra.mxu0 %v2478
      %2733 = vmatpush.msra.mxu0 %v2476
      %2734 = vmatpush.msra.mxu0 %v2474
      %2735 = vmatpush.msra.mxu0 %v2472
      %2736 = vmatpush.msra.mxu0 %v2470
      %2737 = vmatpush.msra.mxu0 %v2468
      %2738 = vmatpush.msra.mxu0 %v2466
      %2739 = vmatpush.msra.mxu0 %v2464
      %2740 = vmatpush.msra.mxu0 %v2462
      %2741 = vmatpush.msra.mxu0 %v2460
      %2742 = vmatpush.msra.mxu0 %v2458
      %2743 = vmatmul.f32.gmra.mxu0 %v2500
      %v2744 = vpop.f32.mrf.mxu0
      %v2745 = vadd.f32 %v2725, %v2744
      %2746 = vdwg.mxu0
      %2747 = vmatpush.msra.mxu0 %v2135
      %2748 = vmatpush.msra.mxu0 %v2133
      %2749 = vmatpush.msra.mxu0 %v2131
      %2750 = vmatpush.msra.mxu0 %v2129
      %2751 = vmatpush.msra.mxu0 %v2127
      %2752 = vmatpush.msra.mxu0 %v2125
      %2753 = vmatpush.msra.mxu0 %v2123
      %2754 = vmatpush.msra.mxu0 %v2121
      %2755 = vmatpush.msra.mxu0 %v2119
      %2756 = vmatpush.msra.mxu0 %v2117
      %2757 = vmatpush.msra.mxu0 %v2115
      %2758 = vmatpush.msra.mxu0 %v2113
      %2759 = vmatpush.msra.mxu0 %v2111
      %2760 = vmatpush.msra.mxu0 %v2109
      %2761 = vmatpush.msra.mxu0 %v2107
      %2762 = vmatpush.msra.mxu0 %v2105
      %2763 = vmatmul.f32.gmra.mxu0 %v2099
      %v2764 = vpop.f32.mrf.mxu0
      %v2765 = vadd.f32 %v2625, %v2764
      %2766 = vdwg.mxu0
      %2767 = vmatpush.msra.mxu0 %v2167
      %2768 = vmatpush.msra.mxu0 %v2165
      %2769 = vmatpush.msra.mxu0 %v2163
      %2770 = vmatpush.msra.mxu0 %v2161
      %2771 = vmatpush.msra.mxu0 %v2159
      %2772 = vmatpush.msra.mxu0 %v2157
      %2773 = vmatpush.msra.mxu0 %v2155
      %2774 = vmatpush.msra.mxu0 %v2153
      %2775 = vmatpush.msra.mxu0 %v2151
      %2776 = vmatpush.msra.mxu0 %v2149
      %2777 = vmatpush.msra.mxu0 %v2147
      %2778 = vmatpush.msra.mxu0 %v2145
      %2779 = vmatpush.msra.mxu0 %v2143
      %2780 = vmatpush.msra.mxu0 %v2141
      %2781 = vmatpush.msra.mxu0 %v2139
      %2782 = vmatpush.msra.mxu0 %v2137
      %2783 = vmatmul.f32.gmra.mxu0 %v2100
      %v2784 = vpop.f32.mrf.mxu0
      %v2785 = vadd.f32 %v2765, %v2784
      %2786 = vdwg.mxu0
      %2787 = vmatpush.msra.mxu0 %v2199
      %2788 = vmatpush.msra.mxu0 %v2197
      %2789 = vmatpush.msra.mxu0 %v2195
      %2790 = vmatpush.msra.mxu0 %v2193
      %2791 = vmatpush.msra.mxu0 %v2191
      %2792 = vmatpush.msra.mxu0 %v2189
      %2793 = vmatpush.msra.mxu0 %v2187
      %2794 = vmatpush.msra.mxu0 %v2185
      %2795 = vmatpush.msra.mxu0 %v2183
      %2796 = vmatpush.msra.mxu0 %v2181
      %2797 = vmatpush.msra.mxu0 %v2179
      %2798 = vmatpush.msra.mxu0 %v2177
      %2799 = vmatpush.msra.mxu0 %v2175
      %2800 = vmatpush.msra.mxu0 %v2173
      %2801 = vmatpush.msra.mxu0 %v2171
      %2802 = vmatpush.msra.mxu0 %v2169
      %2803 = vmatmul.f32.gmra.mxu0 %v2101
      %v2804 = vpop.f32.mrf.mxu0
      %v2805 = vadd.f32 %v2785, %v2804
      %2806 = vdwg.mxu0
      %2807 = vmatpush.msra.mxu0 %v2231
      %2808 = vmatpush.msra.mxu0 %v2229
      %2809 = vmatpush.msra.mxu0 %v2227
      %2810 = vmatpush.msra.mxu0 %v2225
      %2811 = vmatpush.msra.mxu0 %v2223
      %2812 = vmatpush.msra.mxu0 %v2221
      %2813 = vmatpush.msra.mxu0 %v2219
      %2814 = vmatpush.msra.mxu0 %v2217
      %2815 = vmatpush.msra.mxu0 %v2215
      %2816 = vmatpush.msra.mxu0 %v2213
      %2817 = vmatpush.msra.mxu0 %v2211
      %2818 = vmatpush.msra.mxu0 %v2209
      %2819 = vmatpush.msra.mxu0 %v2207
      %2820 = vmatpush.msra.mxu0 %v2205
      %2821 = vmatpush.msra.mxu0 %v2203
      %2822 = vmatpush.msra.mxu0 %v2201
      %2823 = vmatmul.f32.gmra.mxu0 %v2102
      %v2824 = vpop.f32.mrf.mxu0
      %v2825 = vadd.f32 %v2805, %v2824
      %2826 = vdwg.mxu0
      %2827 = vmatpush.msra.mxu0 %v2263
      %2828 = vmatpush.msra.mxu0 %v2261
      %2829 = vmatpush.msra.mxu0 %v2259
      %2830 = vmatpush.msra.mxu0 %v2257
      %2831 = vmatpush.msra.mxu0 %v2255
      %2832 = vmatpush.msra.mxu0 %v2253
      %2833 = vmatpush.msra.mxu0 %v2251
      %2834 = vmatpush.msra.mxu0 %v2249
      %2835 = vmatpush.msra.mxu0 %v2247
      %2836 = vmatpush.msra.mxu0 %v2245
      %2837 = vmatpush.msra.mxu0 %v2243
      %2838 = vmatpush.msra.mxu0 %v2241
      %2839 = vmatpush.msra.mxu0 %v2239
      %2840 = vmatpush.msra.mxu0 %v2237
      %2841 = vmatpush.msra.mxu0 %v2235
      %2842 = vmatpush.msra.mxu0 %v2233
      %2843 = vmatmul.f32.gmra.mxu0 %v2103
      %v2844 = vpop.f32.mrf.mxu0
      %v2845 = vadd.f32 %v2825, %v2844
      %2846 = vdwg.mxu0
      %2847 = vmatpush.msra.mxu0 %v2295
      %2848 = vmatpush.msra.mxu0 %v2293
      %2849 = vmatpush.msra.mxu0 %v2291
      %2850 = vmatpush.msra.mxu0 %v2289
      %2851 = vmatpush.msra.mxu0 %v2287
      %2852 = vmatpush.msra.mxu0 %v2285
      %2853 = vmatpush.msra.mxu0 %v2283
      %2854 = vmatpush.msra.mxu0 %v2281
      %2855 = vmatpush.msra.mxu0 %v2279
      %2856 = vmatpush.msra.mxu0 %v2277
      %2857 = vmatpush.msra.mxu0 %v2275
      %2858 = vmatpush.msra.mxu0 %v2273
      %2859 = vmatpush.msra.mxu0 %v2271
      %2860 = vmatpush.msra.mxu0 %v2269
      %2861 = vmatpush.msra.mxu0 %v2267
      %2862 = vmatpush.msra.mxu0 %v2265
      %2863 = vmatmul.f32.gmra.mxu0 %v2104
      %v2864 = vpop.f32.mrf.mxu0
      %v2865 = vadd.f32 %v2845, %v2864
      %2866 = vdwg.mxu0
      %2867 = vmatpush.msra.mxu0 %v2136
      %2868 = vmatpush.msra.mxu0 %v2134
      %2869 = vmatpush.msra.mxu0 %v2132
      %2870 = vmatpush.msra.mxu0 %v2130
      %2871 = vmatpush.msra.mxu0 %v2128
      %2872 = vmatpush.msra.mxu0 %v2126
      %2873 = vmatpush.msra.mxu0 %v2124
      %2874 = vmatpush.msra.mxu0 %v2122
      %2875 = vmatpush.msra.mxu0 %v2120
      %2876 = vmatpush.msra.mxu0 %v2118
      %2877 = vmatpush.msra.mxu0 %v2116
      %2878 = vmatpush.msra.mxu0 %v2114
      %2879 = vmatpush.msra.mxu0 %v2112
      %2880 = vmatpush.msra.mxu0 %v2110
      %2881 = vmatpush.msra.mxu0 %v2108
      %2882 = vmatpush.msra.mxu0 %v2106
      %2883 = vmatmul.f32.gmra.mxu0 %v2099
      %v2884 = vpop.f32.mrf.mxu0
      %v2885 = vadd.f32 %v2745, %v2884
      %2886 = vdwg.mxu0
      %2887 = vmatpush.msra.mxu0 %v2168
      %2888 = vmatpush.msra.mxu0 %v2166
      %2889 = vmatpush.msra.mxu0 %v2164
      %2890 = vmatpush.msra.mxu0 %v2162
      %2891 = vmatpush.msra.mxu0 %v2160
      %2892 = vmatpush.msra.mxu0 %v2158
      %2893 = vmatpush.msra.mxu0 %v2156
      %2894 = vmatpush.msra.mxu0 %v2154
      %2895 = vmatpush.msra.mxu0 %v2152
      %2896 = vmatpush.msra.mxu0 %v2150
      %2897 = vmatpush.msra.mxu0 %v2148
      %2898 = vmatpush.msra.mxu0 %v2146
      %2899 = vmatpush.msra.mxu0 %v2144
      %2900 = vmatpush.msra.mxu0 %v2142
      %2901 = vmatpush.msra.mxu0 %v2140
      %2902 = vmatpush.msra.mxu0 %v2138
      %2903 = vmatmul.f32.gmra.mxu0 %v2100
      %v2904 = vpop.f32.mrf.mxu0
      %v2905 = vadd.f32 %v2885, %v2904
      %2906 = vdwg.mxu0
      %2907 = vmatpush.msra.mxu0 %v2200
      %2908 = vmatpush.msra.mxu0 %v2198
      %2909 = vmatpush.msra.mxu0 %v2196
      %2910 = vmatpush.msra.mxu0 %v2194
      %2911 = vmatpush.msra.mxu0 %v2192
      %2912 = vmatpush.msra.mxu0 %v2190
      %2913 = vmatpush.msra.mxu0 %v2188
      %2914 = vmatpush.msra.mxu0 %v2186
      %2915 = vmatpush.msra.mxu0 %v2184
      %2916 = vmatpush.msra.mxu0 %v2182
      %2917 = vmatpush.msra.mxu0 %v2180
      %2918 = vmatpush.msra.mxu0 %v2178
      %2919 = vmatpush.msra.mxu0 %v2176
      %2920 = vmatpush.msra.mxu0 %v2174
      %2921 = vmatpush.msra.mxu0 %v2172
      %2922 = vmatpush.msra.mxu0 %v2170
      %2923 = vmatmul.f32.gmra.mxu0 %v2101
      %v2924 = vpop.f32.mrf.mxu0
      %v2925 = vadd.f32 %v2905, %v2924
      %2926 = vdwg.mxu0
      %2927 = vmatpush.msra.mxu0 %v2232
      %2928 = vmatpush.msra.mxu0 %v2230
      %2929 = vmatpush.msra.mxu0 %v2228
      %2930 = vmatpush.msra.mxu0 %v2226
      %2931 = vmatpush.msra.mxu0 %v2224
      %2932 = vmatpush.msra.mxu0 %v2222
      %2933 = vmatpush.msra.mxu0 %v2220
      %2934 = vmatpush.msra.mxu0 %v2218
      %2935 = vmatpush.msra.mxu0 %v2216
      %2936 = vmatpush.msra.mxu0 %v2214
      %2937 = vmatpush.msra.mxu0 %v2212
      %2938 = vmatpush.msra.mxu0 %v2210
      %2939 = vmatpush.msra.mxu0 %v2208
      %2940 = vmatpush.msra.mxu0 %v2206
      %2941 = vmatpush.msra.mxu0 %v2204
      %2942 = vmatpush.msra.mxu0 %v2202
      %2943 = vmatmul.f32.gmra.mxu0 %v2102
      %v2944 = vpop.f32.mrf.mxu0
      %v2945 = vadd.f32 %v2925, %v2944
      %2946 = vdwg.mxu0
      %2947 = vmatpush.msra.mxu0 %v2264
      %2948 = vmatpush.msra.mxu0 %v2262
      %2949 = vmatpush.msra.mxu0 %v2260
      %2950 = vmatpush.msra.mxu0 %v2258
      %2951 = vmatpush.msra.mxu0 %v2256
      %2952 = vmatpush.msra.mxu0 %v2254
      %2953 = vmatpush.msra.mxu0 %v2252
      %2954 = vmatpush.msra.mxu0 %v2250
      %2955 = vmatpush.msra.mxu0 %v2248
      %2956 = vmatpush.msra.mxu0 %v2246
      %2957 = vmatpush.msra.mxu0 %v2244
      %2958 = vmatpush.msra.mxu0 %v2242
      %2959 = vmatpush.msra.mxu0 %v2240
      %2960 = vmatpush.msra.mxu0 %v2238
      %2961 = vmatpush.msra.mxu0 %v2236
      %2962 = vmatpush.msra.mxu0 %v2234
      %2963 = vmatmul.f32.gmra.mxu0 %v2103
      %v2964 = vpop.f32.mrf.mxu0
      %v2965 = vadd.f32 %v2945, %v2964
      %2966 = vdwg.mxu0
      %2967 = vmatpush.msra.mxu0 %v2296
      %2968 = vmatpush.msra.mxu0 %v2294
      %2969 = vmatpush.msra.mxu0 %v2292
      %2970 = vmatpush.msra.mxu0 %v2290
      %2971 = vmatpush.msra.mxu0 %v2288
      %2972 = vmatpush.msra.mxu0 %v2286
      %2973 = vmatpush.msra.mxu0 %v2284
      %2974 = vmatpush.msra.mxu0 %v2282
      %2975 = vmatpush.msra.mxu0 %v2280
      %2976 = vmatpush.msra.mxu0 %v2278
      %2977 = vmatpush.msra.mxu0 %v2276
      %2978 = vmatpush.msra.mxu0 %v2274
      %2979 = vmatpush.msra.mxu0 %v2272
      %2980 = vmatpush.msra.mxu0 %v2270
      %2981 = vmatpush.msra.mxu0 %v2268
      %2982 = vmatpush.msra.mxu0 %v2266
      %2983 = vmatmul.f32.gmra.mxu0 %v2104
      %v2984 = vpop.f32.mrf.mxu0
      %v2985 = vadd.f32 %v2965, %v2984
      %2986 = vdwg.mxu0
      %v2987 = vld [vmem:[#allocation14] sm:$0x3]
      %v2989 = vperm.slane %v2987, 0
      %v2990 = vperm.slane %v2987, 1
      %v2993 = vadd.f32 %v2865, %v2989
      %v2994 = vadd.f32 %v2985, %v2990
      %v2995 = vmax.f32 %v2993, 0.0
      %v2996 = vmax.f32 %v2994, 0.0
      %v2997 = vld [vmem:[#allocation15] sm:$0xff]
      %v2998 = vld [vmem:[#allocation15 + $0x8] sm:$0xff]
      %v2999 = vld [vmem:[#allocation15 + $0x10] sm:$0xff]
      %v3000 = vld [vmem:[#allocation15 + $0x18] sm:$0xff]
      %v3001 = vld [vmem:[#allocation15 + $0x20] sm:$0xff]
      %v3002 = vld [vmem:[#allocation15 + $0x28] sm:$0xff]
      %v3003 = vld [vmem:[#allocation15 + $0x30] sm:$0xff]
      %v3004 = vld [vmem:[#allocation15 + $0x38] sm:$0xff]
      %v3005 = vld [vmem:[#allocation15 + $0x40] sm:$0xff]
      %v3006 = vld [vmem:[#allocation15 + $0x48] sm:$0xff]
      %v3007 = vld [vmem:[#allocation15 + $0x50] sm:$0xff]
      %v3008 = vld [vmem:[#allocation15 + $0x58] sm:$0xff]
      %v3009 = vld [vmem:[#allocation15 + $0x60] sm:$0xff]
      %v3010 = vld [vmem:[#allocation15 + $0x68] sm:$0xff]
      %v3011 = vld [vmem:[#allocation15 + $0x70] sm:$0xff]
      %v3012 = vld [vmem:[#allocation15 + $0x78] sm:$0xff]
      %v3013 = vld [vmem:[#allocation15 + $0x80] sm:$0xff]
      %v3014 = vld [vmem:[#allocation15 + $0x88] sm:$0xff]
      %v3015 = vld [vmem:[#allocation15 + $0x90] sm:$0xff]
      %v3016 = vld [vmem:[#allocation15 + $0x98] sm:$0xff]
      %v3017 = vld [vmem:[#allocation15 + $0xa0] sm:$0xff]
      %v3018 = vld [vmem:[#allocation15 + $0xa8] sm:$0xff]
      %v3019 = vld [vmem:[#allocation15 + $0xb0] sm:$0xff]
      %v3020 = vld [vmem:[#allocation15 + $0xb8] sm:$0xff]
      %v3021 = vld [vmem:[#allocation15 + $0xc0] sm:$0xff]
      %v3022 = vld [vmem:[#allocation15 + $0xc8] sm:$0xff]
      %v3023 = vld [vmem:[#allocation15 + $0xd0] sm:$0xff]
      %v3024 = vld [vmem:[#allocation15 + $0xd8] sm:$0xff]
      %v3025 = vld [vmem:[#allocation15 + $0xe0] sm:$0xff]
      %v3026 = vld [vmem:[#allocation15 + $0xe8] sm:$0xff]
      %v3027 = vld [vmem:[#allocation15 + $0xf0] sm:$0xff]
      %v3028 = vld [vmem:[#allocation15 + $0xf8] sm:$0xff]
      %3029 = vmatpush.msra.mxu0 %v3012
      %3030 = vmatpush.msra.mxu0 %v3011
      %3031 = vmatpush.msra.mxu0 %v3010
      %3032 = vmatpush.msra.mxu0 %v3009
      %3033 = vmatpush.msra.mxu0 %v3008
      %3034 = vmatpush.msra.mxu0 %v3007
      %3035 = vmatpush.msra.mxu0 %v3006
      %3036 = vmatpush.msra.mxu0 %v3005
      %3037 = vmatpush.msra.mxu0 %v3004
      %3038 = vmatpush.msra.mxu0 %v3003
      %3039 = vmatpush.msra.mxu0 %v3002
      %3040 = vmatpush.msra.mxu0 %v3001
      %3041 = vmatpush.msra.mxu0 %v3000
      %3042 = vmatpush.msra.mxu0 %v2999
      %3043 = vmatpush.msra.mxu0 %v2998
      %3044 = vmatpush.msra.mxu0 %v2997
      %3045 = vmatmul.f32.gmra.mxu0 %v2995
      %v3046 = vpop.f32.mrf.mxu0
      %v3047 = vadd.f32 0.0, %v3046
      %3048 = vdwg.mxu0
      %3049 = vmatpush.msra.mxu0 %v3028
      %3050 = vmatpush.msra.mxu0 %v3027
      %3051 = vmatpush.msra.mxu0 %v3026
      %3052 = vmatpush.msra.mxu0 %v3025
      %3053 = vmatpush.msra.mxu0 %v3024
      %3054 = vmatpush.msra.mxu0 %v3023
      %3055 = vmatpush.msra.mxu0 %v3022
      %3056 = vmatpush.msra.mxu0 %v3021
      %3057 = vmatpush.msra.mxu0 %v3020
      %3058 = vmatpush.msra.mxu0 %v3019
      %3059 = vmatpush.msra.mxu0 %v3018
      %3060 = vmatpush.msra.mxu0 %v3017
      %3061 = vmatpush.msra.mxu0 %v3016
      %3062 = vmatpush.msra.mxu0 %v3015
      %3063 = vmatpush.msra.mxu0 %v3014
      %3064 = vmatpush.msra.mxu0 %v3013
      %3065 = vmatmul.f32.gmra.mxu0 %v2996
      %v3066 = vpop.f32.mrf.mxu0
      %v3067 = vadd.f32 %v3047, %v3066
      %3068 = vdwg.mxu0
      %3069 = vst [vmem:[#allocation17] sm:$0x3] %v3067
    $region77: #{tpu_custom_call.1} parent=1 // pred_fallthru
      _
    // Predicated region
    $region78: #{tpu_custom_call.1} parent=1 // pred_check
      _
    $region79: #{tpu_custom_call.1} parent=1 // pred_check_branch
      %3071 = sbr.rel (0) target = $region81
    $region80: #{tpu_custom_call.1} parent=1 // pred_region
      %3073 = vsyncadd [#allocation5], 0
      %s3075 = sshll.u32 [#allocation17], 4
      %s3076 = int_to_ptr.vmem [resolvable:$true] %s3075
      %s3077 = sshll.u32 %s9, 4
      %s3078 = int_to_ptr.hbm [resolvable:$true] %s3077
      %3080 = dma.vmem_to_hbm [thread:$0]  %s3076, 32, %s3078, [#allocation5]
    $region81: #{tpu_custom_call.1} parent=1 // pred_fallthru
      _
    // Predicated region
    $region82: #{tpu_custom_call.1} parent=1 // pred_check
      _
    $region83: #{tpu_custom_call.1} parent=1 // pred_check_branch
      %3082 = sbr.rel (0) target = $region85
    $region84: #{tpu_custom_call.1} parent=1 // pred_region
      %3084 = dma.done [#allocation5], 32
    $region85: #{tpu_custom_call.1} parent=1 // pred_fallthru
      _
    %3085 = vsyncpa [#allocation4], 1
    %3086 = vsyncpa [#allocation7], 1
    %3087 = vsyncpa [#allocation10], 1
    %3088 = vsyncpa [#allocation13], 1
    %3089 = vsyncpa [#allocation16], 1
    %3090 = vsyncpa [#allocation5], 1

</llo_original>
